<compile_context>
chip_gen: v7x
topology: tpu7x:2x2x1
jax: 0.10.0
libtpu: 0.0.40
codegen_flags: <defaults>
</compile_context>

<pallas_src>
import functools

import jax
import jax.numpy as jnp
from jax.experimental import pallas as pl
from jax.experimental.pallas import tpu as pltpu


# ------------------------------ fused kernel --------------------------------

def _vit_kernel(patches_ref, biaspos_ref, projw_ref, fold_ref, unfold_ref,
                wq_ref, wk_ref, wv_ref, bq_ref, bk_ref, bv_ref,
                wo_ref, bo_ref, ln1w_ref, ln1b_ref,
                w1_ref, b1_ref, w2_ref, b2_ref, ln2w_ref, ln2b_ref,
                ct1w_ref, ct1b_ref, ct2w_ref, ct2b_ref,
                o_ref, tok_ref, *, seq, heads, eps):
    """One grid step == one encoder layer; tokens resident in tok_ref (VMEM scratch)."""
    layer = pl.program_id(0)
    n_layers = pl.num_programs(0)

    def mm(a, b):
        return jnp.dot(a, b, preferred_element_type=jnp.float32)

    # ---- layer 0: PatchEmbedding (Linear + bias + position embeddings) ----
    @pl.when(layer == 0)
    def _():
        tok_ref[...] = mm(patches_ref[...], projw_ref[...]) + biaspos_ref[...]

    src = tok_ref[...]                         # (seq*nb, dim), rows ordered (b, n)
    m_rows, dim = src.shape
    nb = m_rows // seq
    hd = dim // heads
    scale = float(hd) ** -0.5

    # ---- multi-head self-attention (batch_first=False: attends across image batch) --
    q = (mm(src, wq_ref[...]) + bq_ref[...]) * scale
    k = mm(src, wk_ref[...]) + bk_ref[...]
    v = mm(src, wv_ref[...]) + bv_ref[...]

    fold = fold_ref[...]                       # (dim, heads)  indicator: sum dims->head
    unfold = unfold_ref[...]                   # (heads, dim)  indicator: head->dims

    q_rows = [q[s * nb:(s + 1) * nb, :] for s in range(seq)]
    k_rows = [k[s * nb:(s + 1) * nb, :] for s in range(seq)]
    v_rows = [v[s * nb:(s + 1) * nb, :] for s in range(seq)]

    out_rows = []
    for i in range(seq):
        # per-head scores of query position i against every key position j: (nb, heads)
        scores = [mm(q_rows[i] * k_rows[j], fold) for j in range(seq)]
        m = scores[0]
        for s in scores[1:]:
            m = jnp.maximum(m, s)
        probs = [jnp.exp(s - m) for s in scores]
        denom = probs[0]
        for p_ in probs[1:]:
            denom = denom + p_
        inv = pl.reciprocal(denom, approx=True)            # EUP, frees VALU slots
        o_i = mm(probs[0] * inv, unfold) * v_rows[0]
        for j in range(1, seq):
            o_i = o_i + mm(probs[j] * inv, unfold) * v_rows[j]
        out_rows.append(o_i)
    attn = out_rows[0] if seq == 1 else jnp.concatenate(out_rows, axis=0)

    attn = mm(attn, wo_ref[...]) + bo_ref[...]

    def add_ln(xv, res, w, b):
        h = xv + res
        mu = jnp.mean(h, axis=-1, keepdims=True)
        var = jnp.mean((h - mu) ** 2, axis=-1, keepdims=True)
        return (h - mu) * jax.lax.rsqrt(var + eps) * w + b

    # TODO(synk): dropout (p=0.1) omitted — eval-mode semantics (identity).
    y = add_ln(attn, src, ln1w_ref[...], ln1b_ref[...])
    ff = jnp.maximum(mm(y, w1_ref[...]) + b1_ref[...], 0.0)
    ff = mm(ff, w2_ref[...]) + b2_ref[...]
    new_tok = add_ln(ff, y, ln2w_ref[...], ln2b_ref[...])
    tok_ref[...] = new_tok

    # ---- last layer: fused Upsampler (ConvT(p,p) + ReLU + 1x1 ConvT) ----
    @pl.when(layer == n_layers - 1)
    def _():
        up = jnp.maximum(mm(new_tok, ct1w_ref[...]) + ct1b_ref[...], 0.0)
        o_ref[...] = mm(up, ct2w_ref[...]) + ct2b_ref[...]


def vit_fused(patches, biaspos, pk, *, seq, heads):
    m_rows, patch_dim = patches.shape
    dim = pk["proj_w"].shape[1]
    depth = pk["wq"].shape[0]
    mlp_dim = pk["w1"].shape[2]
    k1 = pk["ct1_w"].shape[1]
    pp = pk["ct2_w"].shape[1]

    def fixed(shape):
        return pl.BlockSpec(shape, lambda l: (0,) * len(shape))

    def per_layer(r, c):
        # Per-layer weight slab, selected by the depth grid index.
        return pl.BlockSpec((None, r, c), lambda l: (l, 0, 0))

    return pl.pallas_call(
        functools.partial(_vit_kernel, seq=seq, heads=heads, eps=1e-5),
        out_shape=jax.ShapeDtypeStruct((m_rows, pp), jnp.float32),
        grid=(depth,),
        in_specs=[
            fixed((m_rows, patch_dim)),           # patches
            fixed((m_rows, dim)),                 # bias + pos-emb (pre-tiled per row)
            fixed((patch_dim, dim)),              # projection weight
            fixed((dim, heads)),                  # fold indicator
            fixed((heads, dim)),                  # unfold indicator
            per_layer(dim, dim), per_layer(dim, dim), per_layer(dim, dim),   # wq wk wv
            per_layer(1, dim), per_layer(1, dim), per_layer(1, dim),         # bq bk bv
            per_layer(dim, dim), per_layer(1, dim),                          # wo bo
            per_layer(1, dim), per_layer(1, dim),                            # ln1 w,b
            per_layer(dim, mlp_dim), per_layer(1, mlp_dim),                  # ff1 w,b
            per_layer(mlp_dim, dim), per_layer(1, dim),                      # ff2 w,b
            per_layer(1, dim), per_layer(1, dim),                            # ln2 w,b
            fixed((dim, k1)), fixed((1, k1)),                                # ConvT1
            fixed((k1, pp)), fixed((1, pp)),                                 # ConvT2
        ],
        out_specs=pl.BlockSpec((m_rows, pp), lambda l: (0, 0)),
        scratch_shapes=[pltpu.VMEM((m_rows, dim), jnp.float32)],
        compiler_params=pltpu.CompilerParams(
            dimension_semantics=("arbitrary",)),
    )(patches, biaspos, pk["proj_w"], pk["fold"], pk["unfold"],
      pk["wq"], pk["wk"], pk["wv"], pk["bq"], pk["bk"], pk["bv"],
      pk["wo"], pk["bo"], pk["ln1_w"], pk["ln1_b"],
      pk["w1"], pk["b1"], pk["w2"], pk["b2"], pk["ln2_w"], pk["ln2_b"],
      pk["ct1_w"], pk["ct1_b"], pk["ct2_w"], pk["ct2_b"])


# ----------------------------- Model (forward) ------------------------------

def vision_transformer_forward(x, packed, *, patch_size, dim, heads):
    B, C, H, W = x.shape
    p = patch_size
    nH, nW = H // p, W // p
    N = nH * nW
    patch_dim = C * p * p

    # PatchEmbedding patch extraction == torch x.unfold(2,p,p).unfold(3,p,p).view(B,-1,pd)
    patches = x.reshape(B, C, nH, p, nW, p).transpose(0, 1, 2, 4, 3, 5)
    patches = patches.reshape(B * N, patch_dim)              # row-major == torch .view

    # projection bias + position embedding, tiled over the image batch (rows (b, n)).
    biaspos = jnp.tile(packed["biaspos"], (B, 1))             # (B*N, dim)

    out_flat = vit_fused(patches, biaspos, packed, seq=B, heads=heads)   # (B*N, p*p)

    # out_flat[b*N + i*nW + j, ki*p + kj] -> image (B, 1, i*p+ki, j*p+kj)
    gs = nH
    out = out_flat.reshape(B, gs, gs, p, p).transpose(0, 1, 3, 2, 4)
    return out.reshape(B, 1, gs * p, gs * p)


# ----------------------------- Parameters -----------------------------------

def init_params(key, *, img_size, patch_size, dim, depth, heads, mlp_dim, channels):
    """Parameters in the original torch layouts (Linear: (out,in), ConvT: (in,out,kh,kw))."""
    p = patch_size
    N = (img_size // p) ** 2
    patch_dim = channels * p * p

    def nrm(k, shape, scale=0.02):
        return scale * jax.random.normal(k, shape, dtype=jnp.float32)

    keys = jax.random.split(key, 6 + depth)
    params = {
        "proj_w": nrm(keys[0], (dim, patch_dim)),
        "proj_b": nrm(keys[1], (dim,)),
        "pos_emb": nrm(keys[2], (1, N, dim)),
        "ct1_w": nrm(keys[3], (dim, dim, p, p)),
        "ct1_b": nrm(keys[4], (dim,)),
        "ct2_w": nrm(keys[5], (dim, 1, 1, 1)),
        "ct2_b": jnp.zeros((1,), jnp.float32),
        "layers": [],
    }
    for d in range(depth):
        lk = jax.random.split(keys[6 + d], 8)
        params["layers"].append({
            "in_proj_w": nrm(lk[0], (3 * dim, dim)),
            "in_proj_b": nrm(lk[1], (3 * dim,)),
            "out_proj_w": nrm(lk[2], (dim, dim)),
            "out_proj_b": nrm(lk[3], (dim,)),
            "ln1_w": jnp.ones((dim,), jnp.float32),
            "ln1_b": jnp.zeros((dim,), jnp.float32),
            "ff1_w": nrm(lk[4], (mlp_dim, dim)),
            "ff1_b": nrm(lk[5], (mlp_dim,)),
            "ff2_w": nrm(lk[6], (dim, mlp_dim)),
            "ff2_b": nrm(lk[7], (dim,)),
            "ln2_w": jnp.ones((dim,), jnp.float32),
            "ln2_b": jnp.zeros((dim,), jnp.float32),
        })
    return params


def pack_params(params, *, patch_size, dim, heads):
    """One-time repack: (K,N) matmul layout, QKV split, layers stacked, convs flattened."""
    p = patch_size
    pp = p * p
    hd = dim // heads
    layers = params["layers"]

    head_of_col = jnp.arange(dim, dtype=jnp.int32) // hd
    fold = (head_of_col[:, None] == jnp.arange(heads, dtype=jnp.int32)[None, :])
    fold = fold.astype(jnp.float32)                            # (dim, heads)

    packed = {
        "proj_w": params["proj_w"].T,                          # (patch_dim, dim)
        "biaspos": params["proj_b"][None, :] + params["pos_emb"][0],   # (N, dim)
        "fold": fold,
        "unfold": fold.T,                                      # (heads, dim)
        "wq": jnp.stack([lp["in_proj_w"][:dim].T for lp in layers]),
        "wk": jnp.stack([lp["in_proj_w"][dim:2 * dim].T for lp in layers]),
        "wv": jnp.stack([lp["in_proj_w"][2 * dim:].T for lp in layers]),
        "bq": jnp.stack([lp["in_proj_b"][None, :dim] for lp in layers]),
        "bk": jnp.stack([lp["in_proj_b"][None, dim:2 * dim] for lp in layers]),
        "bv": jnp.stack([lp["in_proj_b"][None, 2 * dim:] for lp in layers]),
        "wo": jnp.stack([lp["out_proj_w"].T for lp in layers]),
        "bo": jnp.stack([lp["out_proj_b"][None, :] for lp in layers]),
        "ln1_w": jnp.stack([lp["ln1_w"][None, :] for lp in layers]),
        "ln1_b": jnp.stack([lp["ln1_b"][None, :] for lp in layers]),
        "w1": jnp.stack([lp["ff1_w"].T for lp in layers]),
        "b1": jnp.stack([lp["ff1_b"][None, :] for lp in layers]),
        "w2": jnp.stack([lp["ff2_w"].T for lp in layers]),
        "b2": jnp.stack([lp["ff2_b"][None, :] for lp in layers]),
        "ln2_w": jnp.stack([lp["ln2_w"][None, :] for lp in layers]),
        "ln2_b": jnp.stack([lp["ln2_b"][None, :] for lp in layers]),
        # ConvTranspose2d(dim, dim, p, p), stride=p (non-overlapping) -> per-pixel matmul.
        "ct1_w": params["ct1_w"].reshape(dim, dim * pp),       # [ic, oc*pp + ki*p + kj]
        "ct1_b": jnp.repeat(params["ct1_b"], pp)[None, :],     # (1, dim*pp)
        # ConvTranspose2d(dim, 1, 1): W2f[oc*pp + pix', pix] = w2[oc] * (pix' == pix)
        "ct2_w": (params["ct2_w"].reshape(dim)[:, None, None]
                  * jnp.eye(pp, dtype=jnp.float32)[None]).reshape(dim * pp, pp),
        "ct2_b": jnp.full((1, pp), params["ct2_b"][0], jnp.float32),
    }
    return packed


# ---------------------------------- Main -------------------------------------

if __name__ == "__main__":
    img_size, patch_size, dim, depth, heads, mlp_dim, channels = 16, 4, 32, 2, 4, 64, 2

    key = jax.random.PRNGKey(0)
    k_x, k_p = jax.random.split(key)
    x = jax.random.normal(k_x, (2, channels, img_size, img_size), dtype=jnp.float32)
    params = init_params(k_p, img_size=img_size, patch_size=patch_size, dim=dim,
                         depth=depth, heads=heads, mlp_dim=mlp_dim, channels=channels)
    packed = pack_params(params, patch_size=patch_size, dim=dim, heads=heads)

    fwd = jax.jit(functools.partial(vision_transformer_forward,
                                    patch_size=patch_size, dim=dim, heads=heads))
    out = fwd(x, packed)
    out = jax.block_until_ready(out)
    assert out.shape == (2, 1, img_size, img_size), out.shape
    assert bool(jnp.all(jnp.isfinite(out)))
    print("KERNEL_OK")
</pallas_src>

<mosaic_0001>
module attributes {stable_mosaic.version = 11 : i64} {
  func.func @_vit_kernel(%arg0: i32, %arg1: memref<32x32xf32, #tpu.memory_space<vmem>>, %arg2: memref<32x32xf32, #tpu.memory_space<vmem>>, %arg3: memref<32x32xf32, #tpu.memory_space<vmem>>, %arg4: memref<32x4xf32, #tpu.memory_space<vmem>>, %arg5: memref<4x32xf32, #tpu.memory_space<vmem>>, %arg6: memref<1x32x32xf32, #tpu.memory_space<vmem>>, %arg7: memref<1x32x32xf32, #tpu.memory_space<vmem>>, %arg8: memref<1x32x32xf32, #tpu.memory_space<vmem>>, %arg9: memref<1x1x32xf32, #tpu.memory_space<vmem>>, %arg10: memref<1x1x32xf32, #tpu.memory_space<vmem>>, %arg11: memref<1x1x32xf32, #tpu.memory_space<vmem>>, %arg12: memref<1x32x32xf32, #tpu.memory_space<vmem>>, %arg13: memref<1x1x32xf32, #tpu.memory_space<vmem>>, %arg14: memref<1x1x32xf32, #tpu.memory_space<vmem>>, %arg15: memref<1x1x32xf32, #tpu.memory_space<vmem>>, %arg16: memref<1x32x64xf32, #tpu.memory_space<vmem>>, %arg17: memref<1x1x64xf32, #tpu.memory_space<vmem>>, %arg18: memref<1x64x32xf32, #tpu.memory_space<vmem>>, %arg19: memref<1x1x32xf32, #tpu.memory_space<vmem>>, %arg20: memref<1x1x32xf32, #tpu.memory_space<vmem>>, %arg21: memref<1x1x32xf32, #tpu.memory_space<vmem>>, %arg22: memref<32x512xf32, #tpu.memory_space<vmem>>, %arg23: memref<1x512xf32, #tpu.memory_space<vmem>>, %arg24: memref<512x16xf32, #tpu.memory_space<vmem>>, %arg25: memref<1x16xf32, #tpu.memory_space<vmem>>, %arg26: memref<32x16xf32, #tpu.memory_space<vmem>>, %arg27: memref<32x32xf32, #tpu.memory_space<vmem>>) attributes {dimension_semantics = [#tpu.dimension_semantics<arbitrary>], iteration_bounds = array<i64: 2>, scalar_prefetch = 0 : i64, scratch_operands = 1 : i64, tpu.core_type = #tpu.core_type<tc>, window_params = [{pipeline_mode = #tpu.pipeline_mode<synchronous>, transform_indices = @transform_0, window_bounds = array<i64: 32, 32>}, {pipeline_mode = #tpu.pipeline_mode<synchronous>, transform_indices = @transform_1, window_bounds = array<i64: 32, 32>}, {pipeline_mode = #tpu.pipeline_mode<synchronous>, transform_indices = @transform_2, window_bounds = array<i64: 32, 32>}, {pipeline_mode = #tpu.pipeline_mode<synchronous>, transform_indices = @transform_3, window_bounds = array<i64: 32, 4>}, {pipeline_mode = #tpu.pipeline_mode<synchronous>, transform_indices = @transform_4, window_bounds = array<i64: 4, 32>}, {transform_indices = @transform_5, window_bounds = array<i64: 1, 32, 32>}, {transform_indices = @transform_6, window_bounds = array<i64: 1, 32, 32>}, {transform_indices = @transform_7, window_bounds = array<i64: 1, 32, 32>}, {transform_indices = @transform_8, window_bounds = array<i64: 1, 1, 32>}, {transform_indices = @transform_9, window_bounds = array<i64: 1, 1, 32>}, {transform_indices = @transform_10, window_bounds = array<i64: 1, 1, 32>}, {transform_indices = @transform_11, window_bounds = array<i64: 1, 32, 32>}, {transform_indices = @transform_12, window_bounds = array<i64: 1, 1, 32>}, {transform_indices = @transform_13, window_bounds = array<i64: 1, 1, 32>}, {transform_indices = @transform_14, window_bounds = array<i64: 1, 1, 32>}, {transform_indices = @transform_15, window_bounds = array<i64: 1, 32, 64>}, {transform_indices = @transform_16, window_bounds = array<i64: 1, 1, 64>}, {transform_indices = @transform_17, window_bounds = array<i64: 1, 64, 32>}, {transform_indices = @transform_18, window_bounds = array<i64: 1, 1, 32>}, {transform_indices = @transform_19, window_bounds = array<i64: 1, 1, 32>}, {transform_indices = @transform_20, window_bounds = array<i64: 1, 1, 32>}, {pipeline_mode = #tpu.pipeline_mode<synchronous>, transform_indices = @transform_21, window_bounds = array<i64: 32, 512>}, {pipeline_mode = #tpu.pipeline_mode<synchronous>, transform_indices = @transform_22, window_bounds = array<i64: 1, 512>}, {pipeline_mode = #tpu.pipeline_mode<synchronous>, transform_indices = @transform_23, window_bounds = array<i64: 512, 16>}, {pipeline_mode = #tpu.pipeline_mode<synchronous>, transform_indices = @transform_24, window_bounds = array<i64: 1, 16>}, {pipeline_mode = #tpu.pipeline_mode<synchronous>, transform_indices = @transform_25, window_bounds = array<i64: 32, 16>}]} {
    %c0_i32 = arith.constant 0 : i32
    %0 = arith.cmpi eq, %arg0, %c0_i32 : i32
    %1 = arith.extui %0 : i1 to i32
    %c0_i32_0 = arith.constant 0 : i32
    %2 = arith.cmpi ne, %1, %c0_i32_0 : i32
    scf.if %2 {
      %c0_82 = arith.constant 0 : index
      %c0_83 = arith.constant 0 : index
      %153 = vector.load %arg1[%c0_82, %c0_83] : memref<32x32xf32, #tpu.memory_space<vmem>>, vector<32x32xf32>
      %c0_84 = arith.constant 0 : index
      %c0_85 = arith.constant 0 : index
      %154 = vector.load %arg3[%c0_84, %c0_85] : memref<32x32xf32, #tpu.memory_space<vmem>>, vector<32x32xf32>
      %cst_86 = arith.constant dense<0.000000e+00> : vector<32x32xf32>
      %155 = tpu.matmul %153, %154, %cst_86 {dimension_numbers = #tpu.dot_dimension_numbers<[1], [0], [0], [1], [0, 0, 1, 1], [], []>} : vector<32x32xf32>, vector<32x32xf32>, vector<32x32xf32> -> vector<32x32xf32>
      %c0_87 = arith.constant 0 : index
      %c0_88 = arith.constant 0 : index
      %156 = vector.load %arg2[%c0_87, %c0_88] : memref<32x32xf32, #tpu.memory_space<vmem>>, vector<32x32xf32>
      %157 = arith.addf %155, %156 : vector<32x32xf32>
      %c0_89 = arith.constant 0 : index
      %c0_90 = arith.constant 0 : index
      %158 = vector.load %arg27[%c0_89, %c0_90] : memref<32x32xf32, #tpu.memory_space<vmem>>, vector<32x32xf32>
      tpu.vector_store %arg27[%c0_89, %c0_90], %157 {strides = array<i32>} : memref<32x32xf32, #tpu.memory_space<vmem>>, vector<32x32xf32>,
    } else {
    }
    %c0 = arith.constant 0 : index
    %c0_1 = arith.constant 0 : index
    %3 = vector.load %arg27[%c0, %c0_1] : memref<32x32xf32, #tpu.memory_space<vmem>>, vector<32x32xf32>
    %c0_2 = arith.constant 0 : index
    %c0_3 = arith.constant 0 : index
    %c0_4 = arith.constant 0 : index
    %4 = vector.load %arg6[%c0_2, %c0_3, %c0_4] : memref<1x32x32xf32, #tpu.memory_space<vmem>>, vector<1x32x32xf32>
    %5 = vector.shape_cast %4 : vector<1x32x32xf32> to vector<32x32xf32>
    %cst = arith.constant dense<0.000000e+00> : vector<32x32xf32>
    %6 = tpu.matmul %3, %5, %cst {dimension_numbers = #tpu.dot_dimension_numbers<[1], [0], [0], [1], [0, 0, 1, 1], [], []>} : vector<32x32xf32>, vector<32x32xf32>, vector<32x32xf32> -> vector<32x32xf32>
    %c0_5 = arith.constant 0 : index
    %c0_6 = arith.constant 0 : index
    %c0_7 = arith.constant 0 : index
    %7 = vector.load %arg9[%c0_5, %c0_6, %c0_7] : memref<1x1x32xf32, #tpu.memory_space<vmem>>, vector<1x1x32xf32>
    %8 = vector.shape_cast %7 : vector<1x1x32xf32> to vector<1x32xf32>
    %9 = vector.broadcast %8 : vector<1x32xf32> to vector<32x32xf32>
    %10 = arith.addf %6, %9 : vector<32x32xf32>
    %cst_8 = arith.constant 0.353553385 : f32
    %11 = vector.broadcast %cst_8 : f32 to vector<32x32xf32>
    %12 = arith.mulf %10, %11 : vector<32x32xf32>
    %c0_9 = arith.constant 0 : index
    %c0_10 = arith.constant 0 : index
    %c0_11 = arith.constant 0 : index
    %13 = vector.load %arg7[%c0_9, %c0_10, %c0_11] : memref<1x32x32xf32, #tpu.memory_space<vmem>>, vector<1x32x32xf32>
    %14 = vector.shape_cast %13 : vector<1x32x32xf32> to vector<32x32xf32>
    %cst_12 = arith.constant dense<0.000000e+00> : vector<32x32xf32>
    %15 = tpu.matmul %3, %14, %cst_12 {dimension_numbers = #tpu.dot_dimension_numbers<[1], [0], [0], [1], [0, 0, 1, 1], [], []>} : vector<32x32xf32>, vector<32x32xf32>, vector<32x32xf32> -> vector<32x32xf32>
    %c0_13 = arith.constant 0 : index
    %c0_14 = arith.constant 0 : index
    %c0_15 = arith.constant 0 : index
    %16 = vector.load %arg10[%c0_13, %c0_14, %c0_15] : memref<1x1x32xf32, #tpu.memory_space<vmem>>, vector<1x1x32xf32>
    %17 = vector.shape_cast %16 : vector<1x1x32xf32> to vector<1x32xf32>
    %18 = vector.broadcast %17 : vector<1x32xf32> to vector<32x32xf32>
    %19 = arith.addf %15, %18 : vector<32x32xf32>
    %c0_16 = arith.constant 0 : index
    %c0_17 = arith.constant 0 : index
    %c0_18 = arith.constant 0 : index
    %20 = vector.load %arg8[%c0_16, %c0_17, %c0_18] : memref<1x32x32xf32, #tpu.memory_space<vmem>>, vector<1x32x32xf32>
    %21 = vector.shape_cast %20 : vector<1x32x32xf32> to vector<32x32xf32>
    %cst_19 = arith.constant dense<0.000000e+00> : vector<32x32xf32>
    %22 = tpu.matmul %3, %21, %cst_19 {dimension_numbers = #tpu.dot_dimension_numbers<[1], [0], [0], [1], [0, 0, 1, 1], [], []>} : vector<32x32xf32>, vector<32x32xf32>, vector<32x32xf32> -> vector<32x32xf32>
    %c0_20 = arith.constant 0 : index
    %c0_21 = arith.constant 0 : index
    %c0_22 = arith.constant 0 : index
    %23 = vector.load %arg11[%c0_20, %c0_21, %c0_22] : memref<1x1x32xf32, #tpu.memory_space<vmem>>, vector<1x1x32xf32>
    %24 = vector.shape_cast %23 : vector<1x1x32xf32> to vector<1x32xf32>
    %25 = vector.broadcast %24 : vector<1x32xf32> to vector<32x32xf32>
    %26 = arith.addf %22, %25 : vector<32x32xf32>
    %c0_23 = arith.constant 0 : index
    %c0_24 = arith.constant 0 : index
    %27 = vector.load %arg4[%c0_23, %c0_24] : memref<32x4xf32, #tpu.memory_space<vmem>>, vector<32x4xf32>
    %c0_25 = arith.constant 0 : index
    %c0_26 = arith.constant 0 : index
    %28 = vector.load %arg5[%c0_25, %c0_26] : memref<4x32xf32, #tpu.memory_space<vmem>>, vector<4x32xf32>
    %29 = vector.extract_strided_slice %12 {offsets = [0, 0], sizes = [16, 32], strides = [1, 1]} : vector<32x32xf32> to vector<16x32xf32>
    %30 = vector.extract_strided_slice %12 {offsets = [16, 0], sizes = [16, 32], strides = [1, 1]} : vector<32x32xf32> to vector<16x32xf32>
    %31 = vector.extract_strided_slice %19 {offsets = [0, 0], sizes = [16, 32], strides = [1, 1]} : vector<32x32xf32> to vector<16x32xf32>
    %32 = vector.extract_strided_slice %19 {offsets = [16, 0], sizes = [16, 32], strides = [1, 1]} : vector<32x32xf32> to vector<16x32xf32>
    %33 = vector.extract_strided_slice %26 {offsets = [0, 0], sizes = [16, 32], strides = [1, 1]} : vector<32x32xf32> to vector<16x32xf32>
    %34 = vector.extract_strided_slice %26 {offsets = [16, 0], sizes = [16, 32], strides = [1, 1]} : vector<32x32xf32> to vector<16x32xf32>
    %35 = arith.mulf %29, %31 : vector<16x32xf32>
    %cst_27 = arith.constant dense<0.000000e+00> : vector<16x4xf32>
    %36 = tpu.matmul %35, %27, %cst_27 {dimension_numbers = #tpu.dot_dimension_numbers<[1], [0], [0], [1], [0, 0, 1, 1], [], []>} : vector<16x32xf32>, vector<32x4xf32>, vector<16x4xf32> -> vector<16x4xf32>
    %37 = arith.mulf %29, %32 : vector<16x32xf32>
    %cst_28 = arith.constant dense<0.000000e+00> : vector<16x4xf32>
    %38 = tpu.matmul %37, %27, %cst_28 {dimension_numbers = #tpu.dot_dimension_numbers<[1], [0], [0], [1], [0, 0, 1, 1], [], []>} : vector<16x32xf32>, vector<32x4xf32>, vector<16x4xf32> -> vector<16x4xf32>
    %39 = arith.maximumf %36, %38 : vector<16x4xf32>
    %40 = arith.subf %36, %39 : vector<16x4xf32>
    %41 = math.exp %40 : vector<16x4xf32>
    %42 = arith.subf %38, %39 : vector<16x4xf32>
    %43 = math.exp %42 : vector<16x4xf32>
    %44 = arith.addf %41, %43 : vector<16x4xf32>
    %45 = tpu.reciprocal %44 {approx = true} : vector<16x4xf32> -> vector<16x4xf32>
    %46 = arith.mulf %41, %45 : vector<16x4xf32>
    %cst_29 = arith.constant dense<0.000000e+00> : vector<16x32xf32>
    %47 = tpu.matmul %46, %28, %cst_29 {dimension_numbers = #tpu.dot_dimension_numbers<[1], [0], [0], [1], [0, 0, 1, 1], [], []>} : vector<16x4xf32>, vector<4x32xf32>, vector<16x32xf32> -> vector<16x32xf32>
    %48 = arith.mulf %47, %33 : vector<16x32xf32>
    %49 = arith.mulf %43, %45 : vector<16x4xf32>
    %cst_30 = arith.constant dense<0.000000e+00> : vector<16x32xf32>
    %50 = tpu.matmul %49, %28, %cst_30 {dimension_numbers = #tpu.dot_dimension_numbers<[1], [0], [0], [1], [0, 0, 1, 1], [], []>} : vector<16x4xf32>, vector<4x32xf32>, vector<16x32xf32> -> vector<16x32xf32>
    %51 = arith.mulf %50, %34 : vector<16x32xf32>
    %52 = arith.addf %48, %51 : vector<16x32xf32>
    %53 = arith.mulf %30, %31 : vector<16x32xf32>
    %cst_31 = arith.constant dense<0.000000e+00> : vector<16x4xf32>
    %54 = tpu.matmul %53, %27, %cst_31 {dimension_numbers = #tpu.dot_dimension_numbers<[1], [0], [0], [1], [0, 0, 1, 1], [], []>} : vector<16x32xf32>, vector<32x4xf32>, vector<16x4xf32> -> vector<16x4xf32>
    %55 = arith.mulf %30, %32 : vector<16x32xf32>
    %cst_32 = arith.constant dense<0.000000e+00> : vector<16x4xf32>
    %56 = tpu.matmul %55, %27, %cst_32 {dimension_numbers = #tpu.dot_dimension_numbers<[1], [0], [0], [1], [0, 0, 1, 1], [], []>} : vector<16x32xf32>, vector<32x4xf32>, vector<16x4xf32> -> vector<16x4xf32>
    %57 = arith.maximumf %54, %56 : vector<16x4xf32>
    %58 = arith.subf %54, %57 : vector<16x4xf32>
    %59 = math.exp %58 : vector<16x4xf32>
    %60 = arith.subf %56, %57 : vector<16x4xf32>
    %61 = math.exp %60 : vector<16x4xf32>
    %62 = arith.addf %59, %61 : vector<16x4xf32>
    %63 = tpu.reciprocal %62 {approx = true} : vector<16x4xf32> -> vector<16x4xf32>
    %64 = arith.mulf %59, %63 : vector<16x4xf32>
    %cst_33 = arith.constant dense<0.000000e+00> : vector<16x32xf32>
    %65 = tpu.matmul %64, %28, %cst_33 {dimension_numbers = #tpu.dot_dimension_numbers<[1], [0], [0], [1], [0, 0, 1, 1], [], []>} : vector<16x4xf32>, vector<4x32xf32>, vector<16x32xf32> -> vector<16x32xf32>
    %66 = arith.mulf %65, %33 : vector<16x32xf32>
    %67 = arith.mulf %61, %63 : vector<16x4xf32>
    %cst_34 = arith.constant dense<0.000000e+00> : vector<16x32xf32>
    %68 = tpu.matmul %67, %28, %cst_34 {dimension_numbers = #tpu.dot_dimension_numbers<[1], [0], [0], [1], [0, 0, 1, 1], [], []>} : vector<16x4xf32>, vector<4x32xf32>, vector<16x32xf32> -> vector<16x32xf32>
    %69 = arith.mulf %68, %34 : vector<16x32xf32>
    %70 = arith.addf %66, %69 : vector<16x32xf32>
    %71 = tpu.concatenate %52, %70 in 0 : vector<16x32xf32>, vector<16x32xf32> -> vector<32x32xf32>
    %c0_35 = arith.constant 0 : index
    %c0_36 = arith.constant 0 : index
    %c0_37 = arith.constant 0 : index
    %72 = vector.load %arg12[%c0_35, %c0_36, %c0_37] : memref<1x32x32xf32, #tpu.memory_space<vmem>>, vector<1x32x32xf32>
    %73 = vector.shape_cast %72 : vector<1x32x32xf32> to vector<32x32xf32>
    %cst_38 = arith.constant dense<0.000000e+00> : vector<32x32xf32>
    %74 = tpu.matmul %71, %73, %cst_38 {dimension_numbers = #tpu.dot_dimension_numbers<[1], [0], [0], [1], [0, 0, 1, 1], [], []>} : vector<32x32xf32>, vector<32x32xf32>, vector<32x32xf32> -> vector<32x32xf32>
    %c0_39 = arith.constant 0 : index
    %c0_40 = arith.constant 0 : index
    %c0_41 = arith.constant 0 : index
    %75 = vector.load %arg13[%c0_39, %c0_40, %c0_41] : memref<1x1x32xf32, #tpu.memory_space<vmem>>, vector<1x1x32xf32>
    %76 = vector.shape_cast %75 : vector<1x1x32xf32> to vector<1x32xf32>
    %77 = vector.broadcast %76 : vector<1x32xf32> to vector<32x32xf32>
    %78 = arith.addf %74, %77 : vector<32x32xf32>
    %c0_42 = arith.constant 0 : index
    %c0_43 = arith.constant 0 : index
    %c0_44 = arith.constant 0 : index
    %79 = vector.load %arg14[%c0_42, %c0_43, %c0_44] : memref<1x1x32xf32, #tpu.memory_space<vmem>>, vector<1x1x32xf32>
    %80 = vector.shape_cast %79 : vector<1x1x32xf32> to vector<1x32xf32>
    %c0_45 = arith.constant 0 : index
    %c0_46 = arith.constant 0 : index
    %c0_47 = arith.constant 0 : index
    %81 = vector.load %arg15[%c0_45, %c0_46, %c0_47] : memref<1x1x32xf32, #tpu.memory_space<vmem>>, vector<1x1x32xf32>
    %82 = vector.shape_cast %81 : vector<1x1x32xf32> to vector<1x32xf32>
    %83 = arith.addf %78, %3 : vector<32x32xf32>
    %cst_48 = arith.constant dense<0.000000e+00> : vector<32xf32>
    %84 = vector.multi_reduction <add>, %83, %cst_48 [1] : vector<32x32xf32> to vector<32xf32>
    %85 = vector.shape_cast %84 : vector<32xf32> to vector<32x1xf32>
    %cst_49 = arith.constant 3.200000e+01 : f32
    %86 = vector.broadcast %cst_49 : f32 to vector<32x1xf32>
    %87 = arith.divf %85, %86 : vector<32x1xf32>
    %88 = vector.broadcast %87 : vector<32x1xf32> to vector<32x32xf32>
    %89 = arith.subf %83, %88 : vector<32x32xf32>
    %90 = arith.mulf %89, %89 : vector<32x32xf32>
    %cst_50 = arith.constant dense<0.000000e+00> : vector<32xf32>
    %91 = vector.multi_reduction <add>, %90, %cst_50 [1] : vector<32x32xf32> to vector<32xf32>
    %92 = vector.shape_cast %91 : vector<32xf32> to vector<32x1xf32>
    %cst_51 = arith.constant 3.200000e+01 : f32
    %93 = vector.broadcast %cst_51 : f32 to vector<32x1xf32>
    %94 = arith.divf %92, %93 : vector<32x1xf32>
    %95 = vector.broadcast %87 : vector<32x1xf32> to vector<32x32xf32>
    %96 = arith.subf %83, %95 : vector<32x32xf32>
    %cst_52 = arith.constant 9.99999974E-6 : f32
    %97 = vector.broadcast %cst_52 : f32 to vector<32x1xf32>
    %98 = arith.addf %94, %97 : vector<32x1xf32>
    %99 = math.rsqrt %98 : vector<32x1xf32>
    %100 = vector.broadcast %99 : vector<32x1xf32> to vector<32x32xf32>
    %101 = arith.mulf %96, %100 : vector<32x32xf32>
    %102 = vector.broadcast %80 : vector<1x32xf32> to vector<32x32xf32>
    %103 = arith.mulf %101, %102 : vector<32x32xf32>
    %104 = vector.broadcast %82 : vector<1x32xf32> to vector<32x32xf32>
    %105 = arith.addf %103, %104 : vector<32x32xf32>
    %c0_53 = arith.constant 0 : index
    %c0_54 = arith.constant 0 : index
    %c0_55 = arith.constant 0 : index
    %106 = vector.load %arg16[%c0_53, %c0_54, %c0_55] : memref<1x32x64xf32, #tpu.memory_space<vmem>>, vector<1x32x64xf32>
    %107 = vector.shape_cast %106 : vector<1x32x64xf32> to vector<32x64xf32>
    %cst_56 = arith.constant dense<0.000000e+00> : vector<32x64xf32>
    %108 = tpu.matmul %105, %107, %cst_56 {dimension_numbers = #tpu.dot_dimension_numbers<[1], [0], [0], [1], [0, 0, 1, 1], [], []>} : vector<32x32xf32>, vector<32x64xf32>, vector<32x64xf32> -> vector<32x64xf32>
    %c0_57 = arith.constant 0 : index
    %c0_58 = arith.constant 0 : index
    %c0_59 = arith.constant 0 : index
    %109 = vector.load %arg17[%c0_57, %c0_58, %c0_59] : memref<1x1x64xf32, #tpu.memory_space<vmem>>, vector<1x1x64xf32>
    %110 = vector.shape_cast %109 : vector<1x1x64xf32> to vector<1x64xf32>
    %111 = vector.broadcast %110 : vector<1x64xf32> to vector<32x64xf32>
    %112 = arith.addf %108, %111 : vector<32x64xf32>
    %cst_60 = arith.constant 0.000000e+00 : f32
    %113 = vector.broadcast %cst_60 : f32 to vector<32x64xf32>
    %114 = arith.maximumf %112, %113 : vector<32x64xf32>
    %c0_61 = arith.constant 0 : index
    %c0_62 = arith.constant 0 : index
    %c0_63 = arith.constant 0 : index
    %115 = vector.load %arg18[%c0_61, %c0_62, %c0_63] : memref<1x64x32xf32, #tpu.memory_space<vmem>>, vector<1x64x32xf32>
    %116 = vector.shape_cast %115 : vector<1x64x32xf32> to vector<64x32xf32>
    %cst_64 = arith.constant dense<0.000000e+00> : vector<32x32xf32>
    %117 = tpu.matmul %114, %116, %cst_64 {dimension_numbers = #tpu.dot_dimension_numbers<[1], [0], [0], [1], [0, 0, 1, 1], [], []>} : vector<32x64xf32>, vector<64x32xf32>, vector<32x32xf32> -> vector<32x32xf32>
    %c0_65 = arith.constant 0 : index
    %c0_66 = arith.constant 0 : index
    %c0_67 = arith.constant 0 : index
    %118 = vector.load %arg19[%c0_65, %c0_66, %c0_67] : memref<1x1x32xf32, #tpu.memory_space<vmem>>, vector<1x1x32xf32>
    %119 = vector.shape_cast %118 : vector<1x1x32xf32> to vector<1x32xf32>
    %120 = vector.broadcast %119 : vector<1x32xf32> to vector<32x32xf32>
    %121 = arith.addf %117, %120 : vector<32x32xf32>
    %c0_68 = arith.constant 0 : index
    %c0_69 = arith.constant 0 : index
    %c0_70 = arith.constant 0 : index
    %122 = vector.load %arg20[%c0_68, %c0_69, %c0_70] : memref<1x1x32xf32, #tpu.memory_space<vmem>>, vector<1x1x32xf32>
    %123 = vector.shape_cast %122 : vector<1x1x32xf32> to vector<1x32xf32>
    %c0_71 = arith.constant 0 : index
    %c0_72 = arith.constant 0 : index
    %c0_73 = arith.constant 0 : index
    %124 = vector.load %arg21[%c0_71, %c0_72, %c0_73] : memref<1x1x32xf32, #tpu.memory_space<vmem>>, vector<1x1x32xf32>
    %125 = vector.shape_cast %124 : vector<1x1x32xf32> to vector<1x32xf32>
    %126 = arith.addf %121, %105 : vector<32x32xf32>
    %cst_74 = arith.constant dense<0.000000e+00> : vector<32xf32>
    %127 = vector.multi_reduction <add>, %126, %cst_74 [1] : vector<32x32xf32> to vector<32xf32>
    %128 = vector.shape_cast %127 : vector<32xf32> to vector<32x1xf32>
    %cst_75 = arith.constant 3.200000e+01 : f32
    %129 = vector.broadcast %cst_75 : f32 to vector<32x1xf32>
    %130 = arith.divf %128, %129 : vector<32x1xf32>
    %131 = vector.broadcast %130 : vector<32x1xf32> to vector<32x32xf32>
    %132 = arith.subf %126, %131 : vector<32x32xf32>
    %133 = arith.mulf %132, %132 : vector<32x32xf32>
    %cst_76 = arith.constant dense<0.000000e+00> : vector<32xf32>
    %134 = vector.multi_reduction <add>, %133, %cst_76 [1] : vector<32x32xf32> to vector<32xf32>
    %135 = vector.shape_cast %134 : vector<32xf32> to vector<32x1xf32>
    %cst_77 = arith.constant 3.200000e+01 : f32
    %136 = vector.broadcast %cst_77 : f32 to vector<32x1xf32>
    %137 = arith.divf %135, %136 : vector<32x1xf32>
    %138 = vector.broadcast %130 : vector<32x1xf32> to vector<32x32xf32>
    %139 = arith.subf %126, %138 : vector<32x32xf32>
    %cst_78 = arith.constant 9.99999974E-6 : f32
    %140 = vector.broadcast %cst_78 : f32 to vector<32x1xf32>
    %141 = arith.addf %137, %140 : vector<32x1xf32>
    %142 = math.rsqrt %141 : vector<32x1xf32>
    %143 = vector.broadcast %142 : vector<32x1xf32> to vector<32x32xf32>
    %144 = arith.mulf %139, %143 : vector<32x32xf32>
    %145 = vector.broadcast %123 : vector<1x32xf32> to vector<32x32xf32>
    %146 = arith.mulf %144, %145 : vector<32x32xf32>
    %147 = vector.broadcast %125 : vector<1x32xf32> to vector<32x32xf32>
    %148 = arith.addf %146, %147 : vector<32x32xf32>
    %c0_79 = arith.constant 0 : index
    %c0_80 = arith.constant 0 : index
    %149 = vector.load %arg27[%c0_79, %c0_80] : memref<32x32xf32, #tpu.memory_space<vmem>>, vector<32x32xf32>
    tpu.vector_store %arg27[%c0_79, %c0_80], %148 {strides = array<i32>} : memref<32x32xf32, #tpu.memory_space<vmem>>, vector<32x32xf32>,
    %c1_i32 = arith.constant 1 : i32
    %150 = arith.cmpi eq, %arg0, %c1_i32 : i32
    %151 = arith.extui %150 : i1 to i32
    %c0_i32_81 = arith.constant 0 : i32
    %152 = arith.cmpi ne, %151, %c0_i32_81 : i32
    scf.if %152 {
      %c0_82 = arith.constant 0 : index
      %c0_83 = arith.constant 0 : index
      %153 = vector.load %arg22[%c0_82, %c0_83] : memref<32x512xf32, #tpu.memory_space<vmem>>, vector<32x512xf32>
      %cst_84 = arith.constant dense<0.000000e+00> : vector<32x512xf32>
      %154 = tpu.matmul %148, %153, %cst_84 {dimension_numbers = #tpu.dot_dimension_numbers<[1], [0], [0], [1], [0, 0, 1, 1], [], []>} : vector<32x32xf32>, vector<32x512xf32>, vector<32x512xf32> -> vector<32x512xf32>
      %c0_85 = arith.constant 0 : index
      %c0_86 = arith.constant 0 : index
      %155 = vector.load %arg23[%c0_85, %c0_86] : memref<1x512xf32, #tpu.memory_space<vmem>>, vector<1x512xf32>
      %156 = vector.broadcast %155 : vector<1x512xf32> to vector<32x512xf32>
      %157 = arith.addf %154, %156 : vector<32x512xf32>
      %cst_87 = arith.constant 0.000000e+00 : f32
      %158 = vector.broadcast %cst_87 : f32 to vector<32x512xf32>
      %159 = arith.maximumf %157, %158 : vector<32x512xf32>
      %c0_88 = arith.constant 0 : index
      %c0_89 = arith.constant 0 : index
      %160 = vector.load %arg24[%c0_88, %c0_89] : memref<512x16xf32, #tpu.memory_space<vmem>>, vector<512x16xf32>
      %cst_90 = arith.constant dense<0.000000e+00> : vector<32x16xf32>
      %161 = tpu.matmul %159, %160, %cst_90 {dimension_numbers = #tpu.dot_dimension_numbers<[1], [0], [0], [1], [0, 0, 1, 1], [], []>} : vector<32x512xf32>, vector<512x16xf32>, vector<32x16xf32> -> vector<32x16xf32>
      %c0_91 = arith.constant 0 : index
      %c0_92 = arith.constant 0 : index
      %162 = vector.load %arg25[%c0_91, %c0_92] : memref<1x16xf32, #tpu.memory_space<vmem>>, vector<1x16xf32>
      %163 = vector.broadcast %162 : vector<1x16xf32> to vector<32x16xf32>
      %164 = arith.addf %161, %163 : vector<32x16xf32>
      %c0_93 = arith.constant 0 : index
      %c0_94 = arith.constant 0 : index
      %165 = vector.load %arg26[%c0_93, %c0_94] : memref<32x16xf32, #tpu.memory_space<vmem>>, vector<32x16xf32>
      tpu.vector_store %arg26[%c0_93, %c0_94], %164 {strides = array<i32>} : memref<32x16xf32, #tpu.memory_space<vmem>>, vector<32x16xf32>,
    } else {
    }
    return
  }
  func.func @transform_0(%arg0: i32) -> (i32, i32) {
    %c0_i32 = arith.constant 0 : i32
    %c0_i32_0 = arith.constant 0 : i32
    %c0_i32_1 = arith.constant 0 : i32
    return %c0_i32, %c0_i32_0 : i32, i32
  }
  func.func @transform_1(%arg0: i32) -> (i32, i32) {
    %c0_i32 = arith.constant 0 : i32
    %c0_i32_0 = arith.constant 0 : i32
    %c0_i32_1 = arith.constant 0 : i32
    return %c0_i32, %c0_i32_0 : i32, i32
  }
  func.func @transform_2(%arg0: i32) -> (i32, i32) {
    %c0_i32 = arith.constant 0 : i32
    %c0_i32_0 = arith.constant 0 : i32
    %c0_i32_1 = arith.constant 0 : i32
    return %c0_i32, %c0_i32_0 : i32, i32
  }
  func.func @transform_3(%arg0: i32) -> (i32, i32) {
    %c0_i32 = arith.constant 0 : i32
    %c0_i32_0 = arith.constant 0 : i32
    %c0_i32_1 = arith.constant 0 : i32
    return %c0_i32, %c0_i32_0 : i32, i32
  }
  func.func @transform_4(%arg0: i32) -> (i32, i32) {
    %c0_i32 = arith.constant 0 : i32
    %c0_i32_0 = arith.constant 0 : i32
    %c0_i32_1 = arith.constant 0 : i32
    return %c0_i32, %c0_i32_0 : i32, i32
  }
  func.func @transform_5(%arg0: i32) -> (i32, i32, i32) {
    %c0_i32 = arith.constant 0 : i32
    %c0_i32_0 = arith.constant 0 : i32
    %c0_i32_1 = arith.constant 0 : i32
    return %arg0, %c0_i32, %c0_i32_0 : i32, i32, i32
  }
  func.func @transform_6(%arg0: i32) -> (i32, i32, i32) {
    %c0_i32 = arith.constant 0 : i32
    %c0_i32_0 = arith.constant 0 : i32
    %c0_i32_1 = arith.constant 0 : i32
    return %arg0, %c0_i32, %c0_i32_0 : i32, i32, i32
  }
  func.func @transform_7(%arg0: i32) -> (i32, i32, i32) {
    %c0_i32 = arith.constant 0 : i32
    %c0_i32_0 = arith.constant 0 : i32
    %c0_i32_1 = arith.constant 0 : i32
    return %arg0, %c0_i32, %c0_i32_0 : i32, i32, i32
  }
  func.func @transform_8(%arg0: i32) -> (i32, i32, i32) {
    %c0_i32 = arith.constant 0 : i32
    %c0_i32_0 = arith.constant 0 : i32
    %c0_i32_1 = arith.constant 0 : i32
    return %arg0, %c0_i32, %c0_i32_0 : i32, i32, i32
  }
  func.func @transform_9(%arg0: i32) -> (i32, i32, i32) {
    %c0_i32 = arith.constant 0 : i32
    %c0_i32_0 = arith.constant 0 : i32
    %c0_i32_1 = arith.constant 0 : i32
    return %arg0, %c0_i32, %c0_i32_0 : i32, i32, i32
  }
  func.func @transform_10(%arg0: i32) -> (i32, i32, i32) {
    %c0_i32 = arith.constant 0 : i32
    %c0_i32_0 = arith.constant 0 : i32
    %c0_i32_1 = arith.constant 0 : i32
    return %arg0, %c0_i32, %c0_i32_0 : i32, i32, i32
  }
  func.func @transform_11(%arg0: i32) -> (i32, i32, i32) {
    %c0_i32 = arith.constant 0 : i32
    %c0_i32_0 = arith.constant 0 : i32
    %c0_i32_1 = arith.constant 0 : i32
    return %arg0, %c0_i32, %c0_i32_0 : i32, i32, i32
  }
  func.func @transform_12(%arg0: i32) -> (i32, i32, i32) {
    %c0_i32 = arith.constant 0 : i32
    %c0_i32_0 = arith.constant 0 : i32
    %c0_i32_1 = arith.constant 0 : i32
    return %arg0, %c0_i32, %c0_i32_0 : i32, i32, i32
  }
  func.func @transform_13(%arg0: i32) -> (i32, i32, i32) {
    %c0_i32 = arith.constant 0 : i32
    %c0_i32_0 = arith.constant 0 : i32
    %c0_i32_1 = arith.constant 0 : i32
    return %arg0, %c0_i32, %c0_i32_0 : i32, i32, i32
  }
  func.func @transform_14(%arg0: i32) -> (i32, i32, i32) {
    %c0_i32 = arith.constant 0 : i32
    %c0_i32_0 = arith.constant 0 : i32
    %c0_i32_1 = arith.constant 0 : i32
    return %arg0, %c0_i32, %c0_i32_0 : i32, i32, i32
  }
  func.func @transform_15(%arg0: i32) -> (i32, i32, i32) {
    %c0_i32 = arith.constant 0 : i32
    %c0_i32_0 = arith.constant 0 : i32
    %c0_i32_1 = arith.constant 0 : i32
    return %arg0, %c0_i32, %c0_i32_0 : i32, i32, i32
  }
  func.func @transform_16(%arg0: i32) -> (i32, i32, i32) {
    %c0_i32 = arith.constant 0 : i32
    %c0_i32_0 = arith.constant 0 : i32
    %c0_i32_1 = arith.constant 0 : i32
    return %arg0, %c0_i32, %c0_i32_0 : i32, i32, i32
  }
  func.func @transform_17(%arg0: i32) -> (i32, i32, i32) {
    %c0_i32 = arith.constant 0 : i32
    %c0_i32_0 = arith.constant 0 : i32
    %c0_i32_1 = arith.constant 0 : i32
    return %arg0, %c0_i32, %c0_i32_0 : i32, i32, i32
  }
  func.func @transform_18(%arg0: i32) -> (i32, i32, i32) {
    %c0_i32 = arith.constant 0 : i32
    %c0_i32_0 = arith.constant 0 : i32
    %c0_i32_1 = arith.constant 0 : i32
    return %arg0, %c0_i32, %c0_i32_0 : i32, i32, i32
  }
  func.func @transform_19(%arg0: i32) -> (i32, i32, i32) {
    %c0_i32 = arith.constant 0 : i32
    %c0_i32_0 = arith.constant 0 : i32
    %c0_i32_1 = arith.constant 0 : i32
    return %arg0, %c0_i32, %c0_i32_0 : i32, i32, i32
  }
  func.func @transform_20(%arg0: i32) -> (i32, i32, i32) {
    %c0_i32 = arith.constant 0 : i32
    %c0_i32_0 = arith.constant 0 : i32
    %c0_i32_1 = arith.constant 0 : i32
    return %arg0, %c0_i32, %c0_i32_0 : i32, i32, i32
  }
  func.func @transform_21(%arg0: i32) -> (i32, i32) {
    %c0_i32 = arith.constant 0 : i32
    %c0_i32_0 = arith.constant 0 : i32
    %c0_i32_1 = arith.constant 0 : i32
    return %c0_i32, %c0_i32_0 : i32, i32
  }
  func.func @transform_22(%arg0: i32) -> (i32, i32) {
    %c0_i32 = arith.constant 0 : i32
    %c0_i32_0 = arith.constant 0 : i32
    %c0_i32_1 = arith.constant 0 : i32
    return %c0_i32, %c0_i32_0 : i32, i32
  }
  func.func @transform_23(%arg0: i32) -> (i32, i32) {
    %c0_i32 = arith.constant 0 : i32
    %c0_i32_0 = arith.constant 0 : i32
    %c0_i32_1 = arith.constant 0 : i32
    return %c0_i32, %c0_i32_0 : i32, i32
  }
  func.func @transform_24(%arg0: i32) -> (i32, i32) {
    %c0_i32 = arith.constant 0 : i32
    %c0_i32_0 = arith.constant 0 : i32
    %c0_i32_1 = arith.constant 0 : i32
    return %c0_i32, %c0_i32_0 : i32, i32
  }
  func.func @transform_25(%arg0: i32) -> (i32, i32) {
    %c0_i32 = arith.constant 0 : i32
    %c0_i32_0 = arith.constant 0 : i32
    %c0_i32_1 = arith.constant 0 : i32
    return %c0_i32, %c0_i32_0 : i32, i32
  }
}

</mosaic_0001>

<llo_original>
// kernel: vision_transformer_forward.1
$region0: #{vision_transformer_forward.1}
  #allocation0 [shape = 'u32[]', space=smem, size = 0x4, offset = 0x4, fixed_abs, tag = 'smem constant byte address 0x4 - core index']
  #allocation1 [shape = 'u32[144,128]{1,0:T(1,128)}', space=vmem, size = 0x12000, scoped, tag = 'internal scratch']
  #allocation2 [shape = 'f32[32,32]{1,0:T(8,128)}', space=vmem, size = 0x4000, scoped, tag = 'scratch operand']
  %s0 = inlined_call_operand.vmem [shape: f32[32,32], index: 0, kind: input, shape index: {}]
  %s1 = inlined_call_operand.vmem [shape: f32[32,32], index: 1, kind: input, shape index: {}]
  %s2 = inlined_call_operand.vmem [shape: f32[32,32], index: 2, kind: input, shape index: {}]
  %s3 = inlined_call_operand.vmem [shape: f32[32,4], index: 3, kind: input, shape index: {}]
  %s4 = inlined_call_operand.vmem [shape: f32[4,32], index: 4, kind: input, shape index: {}]
  %s5 = inlined_call_operand.vmem [shape: f32[2,32,32], index: 5, kind: input, shape index: {}]
  %s6 = inlined_call_operand.vmem [shape: f32[2,32,32], index: 6, kind: input, shape index: {}]
  %s7 = inlined_call_operand.vmem [shape: f32[2,32,32], index: 7, kind: input, shape index: {}]
  %s8 = inlined_call_operand.vmem [shape: f32[2,1,32], index: 8, kind: input, shape index: {}]
  %s9 = inlined_call_operand.vmem [shape: f32[2,1,32], index: 9, kind: input, shape index: {}]
  %s10 = inlined_call_operand.vmem [shape: f32[2,1,32], index: 10, kind: input, shape index: {}]
  %s11 = inlined_call_operand.vmem [shape: f32[2,32,32], index: 11, kind: input, shape index: {}]
  %s12 = inlined_call_operand.vmem [shape: f32[2,1,32], index: 12, kind: input, shape index: {}]
  %s13 = inlined_call_operand.vmem [shape: f32[2,1,32], index: 13, kind: input, shape index: {}]
  %s14 = inlined_call_operand.vmem [shape: f32[2,1,32], index: 14, kind: input, shape index: {}]
  %s15 = inlined_call_operand.vmem [shape: f32[2,32,64], index: 15, kind: input, shape index: {}]
  %s16 = inlined_call_operand.vmem [shape: f32[2,1,64], index: 16, kind: input, shape index: {}]
  %s17 = inlined_call_operand.vmem [shape: f32[2,64,32], index: 17, kind: input, shape index: {}]
  %s18 = inlined_call_operand.vmem [shape: f32[2,1,32], index: 18, kind: input, shape index: {}]
  %s19 = inlined_call_operand.vmem [shape: f32[2,1,32], index: 19, kind: input, shape index: {}]
  %s20 = inlined_call_operand.vmem [shape: f32[2,1,32], index: 20, kind: input, shape index: {}]
  %s21 = inlined_call_operand.vmem [shape: f32[32,512], index: 21, kind: input, shape index: {}]
  %s22 = inlined_call_operand.vmem [shape: f32[1,512], index: 22, kind: input, shape index: {}]
  %s23 = inlined_call_operand.vmem [shape: f32[512,16], index: 23, kind: input, shape index: {}]
  %s24 = inlined_call_operand.vmem [shape: f32[1,16], index: 24, kind: input, shape index: {}]
  %s25 = inlined_call_operand.vmem [shape: f32[32,16], index: 25, kind: output, shape index: {}]
  %s26 = sld [smem:[#allocation0]]
  $region141: #{vision_transformer_forward.1} parent=0
    _
  %s28 = ssub.s32 1, %s26
  %s29 = scalar_select 0, %s28, %s26
  loop: start=0, step=1, limit=4
  $region2: #{vision_transformer_forward.1} parent=0 // loop_pre_header
    _
  $region3: #{vision_transformer_forward.1} parent=0 // loop_header
    %s31 = sphi 0, %s35
    %p32 = scmp.ge.s32.totalorder %s31, 4
    %s39 = sphi 0, %s39
    %s41 = sphi 0, %s39
    %s42 = sphi 0, %s41
    %s56 = sphi 0, %s42
    %s60 = sphi 0, %s60
    %s62 = sphi 0, %s60
    %s63 = sphi 0, %s62
    %s77 = sphi 0, %s63
    %s81 = sphi 0, %s81
    %s83 = sphi 0, %s81
    %s84 = sphi 0, %s83
    %s98 = sphi 0, %s84
    %s102 = sphi 0, %s102
    %s104 = sphi 0, %s102
    %s105 = sphi 0, %s104
    %s119 = sphi 0, %s105
    %s123 = sphi 0, %s123
    %s125 = sphi 0, %s123
    %s126 = sphi 0, %s125
    %s140 = sphi 0, %s126
    %s146 = sphi 0, %s148
    %s149 = sphi 0, %s146
    %s150 = sphi 0, %s149
    %s166 = sphi 0, %s150
    %s172 = sphi 0, %s174
    %s175 = sphi 0, %s172
    %s176 = sphi 0, %s175
    %s192 = sphi 0, %s176
    %s198 = sphi 0, %s200
    %s201 = sphi 0, %s198
    %s202 = sphi 0, %s201
    %s218 = sphi 0, %s202
    %s224 = sphi 0, %s226
    %s227 = sphi 0, %s224
    %s228 = sphi 0, %s227
    %s244 = sphi 0, %s228
    %s250 = sphi 0, %s252
    %s253 = sphi 0, %s250
    %s254 = sphi 0, %s253
    %s270 = sphi 0, %s254
    %s276 = sphi 0, %s278
    %s279 = sphi 0, %s276
    %s280 = sphi 0, %s279
    %s296 = sphi 0, %s280
    %s302 = sphi 0, %s304
    %s305 = sphi 0, %s302
    %s306 = sphi 0, %s305
    %s322 = sphi 0, %s306
    %s328 = sphi 0, %s330
    %s331 = sphi 0, %s328
    %s332 = sphi 0, %s331
    %s348 = sphi 0, %s332
    %s354 = sphi 0, %s356
    %s357 = sphi 0, %s354
    %s358 = sphi 0, %s357
    %s374 = sphi 0, %s358
    %s380 = sphi 0, %s382
    %s383 = sphi 0, %s380
    %s384 = sphi 0, %s383
    %s400 = sphi 0, %s384
    %s406 = sphi 0, %s408
    %s409 = sphi 0, %s406
    %s410 = sphi 0, %s409
    %s426 = sphi 0, %s410
    %s432 = sphi 0, %s434
    %s435 = sphi 0, %s432
    %s436 = sphi 0, %s435
    %s452 = sphi 0, %s436
    %s458 = sphi 0, %s460
    %s461 = sphi 0, %s458
    %s462 = sphi 0, %s461
    %s478 = sphi 0, %s462
    %s484 = sphi 0, %s486
    %s487 = sphi 0, %s484
    %s488 = sphi 0, %s487
    %s504 = sphi 0, %s488
    %s510 = sphi 0, %s512
    %s513 = sphi 0, %s510
    %s514 = sphi 0, %s513
    %s530 = sphi 0, %s514
    %s536 = sphi 0, %s538
    %s539 = sphi 0, %s536
    %s540 = sphi 0, %s539
    %s556 = sphi 0, %s540
    %s560 = sphi 0, %s560
    %s562 = sphi 0, %s560
    %s563 = sphi 0, %s562
    %s577 = sphi 0, %s563
    %s581 = sphi 0, %s581
    %s583 = sphi 0, %s581
    %s584 = sphi 0, %s583
    %s598 = sphi 0, %s584
    %s602 = sphi 0, %s602
    %s604 = sphi 0, %s602
    %s605 = sphi 0, %s604
    %s619 = sphi 0, %s605
    %s623 = sphi 0, %s623
    %s625 = sphi 0, %s623
    %s626 = sphi 0, %s625
    %s640 = sphi 0, %s626
    %s644 = sphi 0, %s644
    %s646 = sphi 0, %s644
    %s647 = sphi 0, %s646
    %s661 = sphi 0, %s647
  $region4: #{vision_transformer_forward.1} parent=0 // loop_header_branch
    %34 = sbr.rel (%p32) target = $region8
  $region5: #{vision_transformer_forward.1} parent=0 // loop_body
    %s36 = ssub.s32 %s31, 1
    %s37 = ssub.s32 %s31, 2
    %s38 = sadd.s32 %s31, 1
    %s40 = sadd.s32 %s39, 1
    %p43 = scmp.eq.s32.totalorder %s31, 1
    %p44 = scmp.ne.s32.totalorder %s39, %s41
    %p45 = scmp.eq.s32.totalorder %s31, 0
    %p46 = por %p44, %p45
    %p47 = scmp.ne.s32.totalorder %s39, %s41
    %p48 = scmp.eq.s32.totalorder %s36, 1
    %p49 = por %p47, %p48
    %p50 = scmp.ne.s32.totalorder %s41, %s42
    %p51 = scmp.eq.s32.totalorder %s36, 0
    %p52 = por %p50, %p51
    %p53 = scmp.ne.s32.totalorder %s41, %s42
    %p54 = scmp.eq.s32.totalorder %s37, 1
    %p55 = por %p53, %p54
    %p57 = scmp.ne.s32.totalorder %s42, %s56
    %p58 = scmp.eq.s32.totalorder %s37, 0
    %p59 = por %p57, %p58
    %s61 = sadd.s32 %s60, 1
    %p64 = scmp.eq.s32.totalorder %s31, 1
    %p65 = scmp.ne.s32.totalorder %s60, %s62
    %p66 = scmp.eq.s32.totalorder %s31, 0
    %p67 = por %p65, %p66
    %p68 = scmp.ne.s32.totalorder %s60, %s62
    %p69 = scmp.eq.s32.totalorder %s36, 1
    %p70 = por %p68, %p69
    %p71 = scmp.ne.s32.totalorder %s62, %s63
    %p72 = scmp.eq.s32.totalorder %s36, 0
    %p73 = por %p71, %p72
    %p74 = scmp.ne.s32.totalorder %s62, %s63
    %p75 = scmp.eq.s32.totalorder %s37, 1
    %p76 = por %p74, %p75
    %p78 = scmp.ne.s32.totalorder %s63, %s77
    %p79 = scmp.eq.s32.totalorder %s37, 0
    %p80 = por %p78, %p79
    %s82 = sadd.s32 %s81, 1
    %p85 = scmp.eq.s32.totalorder %s31, 1
    %p86 = scmp.ne.s32.totalorder %s81, %s83
    %p87 = scmp.eq.s32.totalorder %s31, 0
    %p88 = por %p86, %p87
    %p89 = scmp.ne.s32.totalorder %s81, %s83
    %p90 = scmp.eq.s32.totalorder %s36, 1
    %p91 = por %p89, %p90
    %p92 = scmp.ne.s32.totalorder %s83, %s84
    %p93 = scmp.eq.s32.totalorder %s36, 0
    %p94 = por %p92, %p93
    %p95 = scmp.ne.s32.totalorder %s83, %s84
    %p96 = scmp.eq.s32.totalorder %s37, 1
    %p97 = por %p95, %p96
    %p99 = scmp.ne.s32.totalorder %s84, %s98
    %p100 = scmp.eq.s32.totalorder %s37, 0
    %p101 = por %p99, %p100
    %s103 = sadd.s32 %s102, 1
    %p106 = scmp.eq.s32.totalorder %s31, 1
    %p107 = scmp.ne.s32.totalorder %s102, %s104
    %p108 = scmp.eq.s32.totalorder %s31, 0
    %p109 = por %p107, %p108
    %p110 = scmp.ne.s32.totalorder %s102, %s104
    %p111 = scmp.eq.s32.totalorder %s36, 1
    %p112 = por %p110, %p111
    %p113 = scmp.ne.s32.totalorder %s104, %s105
    %p114 = scmp.eq.s32.totalorder %s36, 0
    %p115 = por %p113, %p114
    %p116 = scmp.ne.s32.totalorder %s104, %s105
    %p117 = scmp.eq.s32.totalorder %s37, 1
    %p118 = por %p116, %p117
    %p120 = scmp.ne.s32.totalorder %s105, %s119
    %p121 = scmp.eq.s32.totalorder %s37, 0
    %p122 = por %p120, %p121
    %s124 = sadd.s32 %s123, 1
    %p127 = scmp.eq.s32.totalorder %s31, 1
    %p128 = scmp.ne.s32.totalorder %s123, %s125
    %p129 = scmp.eq.s32.totalorder %s31, 0
    %p130 = por %p128, %p129
    %p131 = scmp.ne.s32.totalorder %s123, %s125
    %p132 = scmp.eq.s32.totalorder %s36, 1
    %p133 = por %p131, %p132
    %p134 = scmp.ne.s32.totalorder %s125, %s126
    %p135 = scmp.eq.s32.totalorder %s36, 0
    %p136 = por %p134, %p135
    %p137 = scmp.ne.s32.totalorder %s125, %s126
    %p138 = scmp.eq.s32.totalorder %s37, 1
    %p139 = por %p137, %p138
    %p141 = scmp.ne.s32.totalorder %s126, %s140
    %p142 = scmp.eq.s32.totalorder %s37, 0
    %p143 = por %p141, %p142
    %s144 = ssub.s32 %s31, %s38
    %p145 = scmp.eq.s32.totalorder %s144, 0
    %s147 = sadd.s32 %s146, 1
    %s148 = scalar_select %p145, %s146, %s147
    %p151 = pneg %p145
    %p152 = scmp.eq.s32.totalorder %s31, 1
    %p153 = por %p151, %p152
    %p154 = scmp.ne.s32.totalorder %s146, %s149
    %p155 = scmp.eq.s32.totalorder %s31, 0
    %p156 = por %p154, %p155
    %p157 = scmp.ne.s32.totalorder %s146, %s149
    %p158 = scmp.eq.s32.totalorder %s36, 1
    %p159 = por %p157, %p158
    %p160 = scmp.ne.s32.totalorder %s149, %s150
    %p161 = scmp.eq.s32.totalorder %s36, 0
    %p162 = por %p160, %p161
    %p163 = scmp.ne.s32.totalorder %s149, %s150
    %p164 = scmp.eq.s32.totalorder %s37, 1
    %p165 = por %p163, %p164
    %p167 = scmp.ne.s32.totalorder %s150, %s166
    %p168 = scmp.eq.s32.totalorder %s37, 0
    %p169 = por %p167, %p168
    %s170 = ssub.s32 %s31, %s38
    %p171 = scmp.eq.s32.totalorder %s170, 0
    %s173 = sadd.s32 %s172, 1
    %s174 = scalar_select %p171, %s172, %s173
    %p177 = pneg %p171
    %p178 = scmp.eq.s32.totalorder %s31, 1
    %p179 = por %p177, %p178
    %p180 = scmp.ne.s32.totalorder %s172, %s175
    %p181 = scmp.eq.s32.totalorder %s31, 0
    %p182 = por %p180, %p181
    %p183 = scmp.ne.s32.totalorder %s172, %s175
    %p184 = scmp.eq.s32.totalorder %s36, 1
    %p185 = por %p183, %p184
    %p186 = scmp.ne.s32.totalorder %s175, %s176
    %p187 = scmp.eq.s32.totalorder %s36, 0
    %p188 = por %p186, %p187
    %p189 = scmp.ne.s32.totalorder %s175, %s176
    %p190 = scmp.eq.s32.totalorder %s37, 1
    %p191 = por %p189, %p190
    %p193 = scmp.ne.s32.totalorder %s176, %s192
    %p194 = scmp.eq.s32.totalorder %s37, 0
    %p195 = por %p193, %p194
    %s196 = ssub.s32 %s31, %s38
    %p197 = scmp.eq.s32.totalorder %s196, 0
    %s199 = sadd.s32 %s198, 1
    %s200 = scalar_select %p197, %s198, %s199
    %p203 = pneg %p197
    %p204 = scmp.eq.s32.totalorder %s31, 1
    %p205 = por %p203, %p204
    %p206 = scmp.ne.s32.totalorder %s198, %s201
    %p207 = scmp.eq.s32.totalorder %s31, 0
    %p208 = por %p206, %p207
    %p209 = scmp.ne.s32.totalorder %s198, %s201
    %p210 = scmp.eq.s32.totalorder %s36, 1
    %p211 = por %p209, %p210
    %p212 = scmp.ne.s32.totalorder %s201, %s202
    %p213 = scmp.eq.s32.totalorder %s36, 0
    %p214 = por %p212, %p213
    %p215 = scmp.ne.s32.totalorder %s201, %s202
    %p216 = scmp.eq.s32.totalorder %s37, 1
    %p217 = por %p215, %p216
    %p219 = scmp.ne.s32.totalorder %s202, %s218
    %p220 = scmp.eq.s32.totalorder %s37, 0
    %p221 = por %p219, %p220
    %s222 = ssub.s32 %s31, %s38
    %p223 = scmp.eq.s32.totalorder %s222, 0
    %s225 = sadd.s32 %s224, 1
    %s226 = scalar_select %p223, %s224, %s225
    %p229 = pneg %p223
    %p230 = scmp.eq.s32.totalorder %s31, 1
    %p231 = por %p229, %p230
    %p232 = scmp.ne.s32.totalorder %s224, %s227
    %p233 = scmp.eq.s32.totalorder %s31, 0
    %p234 = por %p232, %p233
    %p235 = scmp.ne.s32.totalorder %s224, %s227
    %p236 = scmp.eq.s32.totalorder %s36, 1
    %p237 = por %p235, %p236
    %p238 = scmp.ne.s32.totalorder %s227, %s228
    %p239 = scmp.eq.s32.totalorder %s36, 0
    %p240 = por %p238, %p239
    %p241 = scmp.ne.s32.totalorder %s227, %s228
    %p242 = scmp.eq.s32.totalorder %s37, 1
    %p243 = por %p241, %p242
    %p245 = scmp.ne.s32.totalorder %s228, %s244
    %p246 = scmp.eq.s32.totalorder %s37, 0
    %p247 = por %p245, %p246
    %s248 = ssub.s32 %s31, %s38
    %p249 = scmp.eq.s32.totalorder %s248, 0
    %s251 = sadd.s32 %s250, 1
    %s252 = scalar_select %p249, %s250, %s251
    %p255 = pneg %p249
    %p256 = scmp.eq.s32.totalorder %s31, 1
    %p257 = por %p255, %p256
    %p258 = scmp.ne.s32.totalorder %s250, %s253
    %p259 = scmp.eq.s32.totalorder %s31, 0
    %p260 = por %p258, %p259
    %p261 = scmp.ne.s32.totalorder %s250, %s253
    %p262 = scmp.eq.s32.totalorder %s36, 1
    %p263 = por %p261, %p262
    %p264 = scmp.ne.s32.totalorder %s253, %s254
    %p265 = scmp.eq.s32.totalorder %s36, 0
    %p266 = por %p264, %p265
    %p267 = scmp.ne.s32.totalorder %s253, %s254
    %p268 = scmp.eq.s32.totalorder %s37, 1
    %p269 = por %p267, %p268
    %p271 = scmp.ne.s32.totalorder %s254, %s270
    %p272 = scmp.eq.s32.totalorder %s37, 0
    %p273 = por %p271, %p272
    %s274 = ssub.s32 %s31, %s38
    %p275 = scmp.eq.s32.totalorder %s274, 0
    %s277 = sadd.s32 %s276, 1
    %s278 = scalar_select %p275, %s276, %s277
    %p281 = pneg %p275
    %p282 = scmp.eq.s32.totalorder %s31, 1
    %p283 = por %p281, %p282
    %p284 = scmp.ne.s32.totalorder %s276, %s279
    %p285 = scmp.eq.s32.totalorder %s31, 0
    %p286 = por %p284, %p285
    %p287 = scmp.ne.s32.totalorder %s276, %s279
    %p288 = scmp.eq.s32.totalorder %s36, 1
    %p289 = por %p287, %p288
    %p290 = scmp.ne.s32.totalorder %s279, %s280
    %p291 = scmp.eq.s32.totalorder %s36, 0
    %p292 = por %p290, %p291
    %p293 = scmp.ne.s32.totalorder %s279, %s280
    %p294 = scmp.eq.s32.totalorder %s37, 1
    %p295 = por %p293, %p294
    %p297 = scmp.ne.s32.totalorder %s280, %s296
    %p298 = scmp.eq.s32.totalorder %s37, 0
    %p299 = por %p297, %p298
    %s300 = ssub.s32 %s31, %s38
    %p301 = scmp.eq.s32.totalorder %s300, 0
    %s303 = sadd.s32 %s302, 1
    %s304 = scalar_select %p301, %s302, %s303
    %p307 = pneg %p301
    %p308 = scmp.eq.s32.totalorder %s31, 1
    %p309 = por %p307, %p308
    %p310 = scmp.ne.s32.totalorder %s302, %s305
    %p311 = scmp.eq.s32.totalorder %s31, 0
    %p312 = por %p310, %p311
    %p313 = scmp.ne.s32.totalorder %s302, %s305
    %p314 = scmp.eq.s32.totalorder %s36, 1
    %p315 = por %p313, %p314
    %p316 = scmp.ne.s32.totalorder %s305, %s306
    %p317 = scmp.eq.s32.totalorder %s36, 0
    %p318 = por %p316, %p317
    %p319 = scmp.ne.s32.totalorder %s305, %s306
    %p320 = scmp.eq.s32.totalorder %s37, 1
    %p321 = por %p319, %p320
    %p323 = scmp.ne.s32.totalorder %s306, %s322
    %p324 = scmp.eq.s32.totalorder %s37, 0
    %p325 = por %p323, %p324
    %s326 = ssub.s32 %s31, %s38
    %p327 = scmp.eq.s32.totalorder %s326, 0
    %s329 = sadd.s32 %s328, 1
    %s330 = scalar_select %p327, %s328, %s329
    %p333 = pneg %p327
    %p334 = scmp.eq.s32.totalorder %s31, 1
    %p335 = por %p333, %p334
    %p336 = scmp.ne.s32.totalorder %s328, %s331
    %p337 = scmp.eq.s32.totalorder %s31, 0
    %p338 = por %p336, %p337
    %p339 = scmp.ne.s32.totalorder %s328, %s331
    %p340 = scmp.eq.s32.totalorder %s36, 1
    %p341 = por %p339, %p340
    %p342 = scmp.ne.s32.totalorder %s331, %s332
    %p343 = scmp.eq.s32.totalorder %s36, 0
    %p344 = por %p342, %p343
    %p345 = scmp.ne.s32.totalorder %s331, %s332
    %p346 = scmp.eq.s32.totalorder %s37, 1
    %p347 = por %p345, %p346
    %p349 = scmp.ne.s32.totalorder %s332, %s348
    %p350 = scmp.eq.s32.totalorder %s37, 0
    %p351 = por %p349, %p350
    %s352 = ssub.s32 %s31, %s38
    %p353 = scmp.eq.s32.totalorder %s352, 0
    %s355 = sadd.s32 %s354, 1
    %s356 = scalar_select %p353, %s354, %s355
    %p359 = pneg %p353
    %p360 = scmp.eq.s32.totalorder %s31, 1
    %p361 = por %p359, %p360
    %p362 = scmp.ne.s32.totalorder %s354, %s357
    %p363 = scmp.eq.s32.totalorder %s31, 0
    %p364 = por %p362, %p363
    %p365 = scmp.ne.s32.totalorder %s354, %s357
    %p366 = scmp.eq.s32.totalorder %s36, 1
    %p367 = por %p365, %p366
    %p368 = scmp.ne.s32.totalorder %s357, %s358
    %p369 = scmp.eq.s32.totalorder %s36, 0
    %p370 = por %p368, %p369
    %p371 = scmp.ne.s32.totalorder %s357, %s358
    %p372 = scmp.eq.s32.totalorder %s37, 1
    %p373 = por %p371, %p372
    %p375 = scmp.ne.s32.totalorder %s358, %s374
    %p376 = scmp.eq.s32.totalorder %s37, 0
    %p377 = por %p375, %p376
    %s378 = ssub.s32 %s31, %s38
    %p379 = scmp.eq.s32.totalorder %s378, 0
    %s381 = sadd.s32 %s380, 1
    %s382 = scalar_select %p379, %s380, %s381
    %p385 = pneg %p379
    %p386 = scmp.eq.s32.totalorder %s31, 1
    %p387 = por %p385, %p386
    %p388 = scmp.ne.s32.totalorder %s380, %s383
    %p389 = scmp.eq.s32.totalorder %s31, 0
    %p390 = por %p388, %p389
    %p391 = scmp.ne.s32.totalorder %s380, %s383
    %p392 = scmp.eq.s32.totalorder %s36, 1
    %p393 = por %p391, %p392
    %p394 = scmp.ne.s32.totalorder %s383, %s384
    %p395 = scmp.eq.s32.totalorder %s36, 0
    %p396 = por %p394, %p395
    %p397 = scmp.ne.s32.totalorder %s383, %s384
    %p398 = scmp.eq.s32.totalorder %s37, 1
    %p399 = por %p397, %p398
    %p401 = scmp.ne.s32.totalorder %s384, %s400
    %p402 = scmp.eq.s32.totalorder %s37, 0
    %p403 = por %p401, %p402
    %s404 = ssub.s32 %s31, %s38
    %p405 = scmp.eq.s32.totalorder %s404, 0
    %s407 = sadd.s32 %s406, 1
    %s408 = scalar_select %p405, %s406, %s407
    %p411 = pneg %p405
    %p412 = scmp.eq.s32.totalorder %s31, 1
    %p413 = por %p411, %p412
    %p414 = scmp.ne.s32.totalorder %s406, %s409
    %p415 = scmp.eq.s32.totalorder %s31, 0
    %p416 = por %p414, %p415
    %p417 = scmp.ne.s32.totalorder %s406, %s409
    %p418 = scmp.eq.s32.totalorder %s36, 1
    %p419 = por %p417, %p418
    %p420 = scmp.ne.s32.totalorder %s409, %s410
    %p421 = scmp.eq.s32.totalorder %s36, 0
    %p422 = por %p420, %p421
    %p423 = scmp.ne.s32.totalorder %s409, %s410
    %p424 = scmp.eq.s32.totalorder %s37, 1
    %p425 = por %p423, %p424
    %p427 = scmp.ne.s32.totalorder %s410, %s426
    %p428 = scmp.eq.s32.totalorder %s37, 0
    %p429 = por %p427, %p428
    %s430 = ssub.s32 %s31, %s38
    %p431 = scmp.eq.s32.totalorder %s430, 0
    %s433 = sadd.s32 %s432, 1
    %s434 = scalar_select %p431, %s432, %s433
    %p437 = pneg %p431
    %p438 = scmp.eq.s32.totalorder %s31, 1
    %p439 = por %p437, %p438
    %p440 = scmp.ne.s32.totalorder %s432, %s435
    %p441 = scmp.eq.s32.totalorder %s31, 0
    %p442 = por %p440, %p441
    %p443 = scmp.ne.s32.totalorder %s432, %s435
    %p444 = scmp.eq.s32.totalorder %s36, 1
    %p445 = por %p443, %p444
    %p446 = scmp.ne.s32.totalorder %s435, %s436
    %p447 = scmp.eq.s32.totalorder %s36, 0
    %p448 = por %p446, %p447
    %p449 = scmp.ne.s32.totalorder %s435, %s436
    %p450 = scmp.eq.s32.totalorder %s37, 1
    %p451 = por %p449, %p450
    %p453 = scmp.ne.s32.totalorder %s436, %s452
    %p454 = scmp.eq.s32.totalorder %s37, 0
    %p455 = por %p453, %p454
    %s456 = ssub.s32 %s31, %s38
    %p457 = scmp.eq.s32.totalorder %s456, 0
    %s459 = sadd.s32 %s458, 1
    %s460 = scalar_select %p457, %s458, %s459
    %p463 = pneg %p457
    %p464 = scmp.eq.s32.totalorder %s31, 1
    %p465 = por %p463, %p464
    %p466 = scmp.ne.s32.totalorder %s458, %s461
    %p467 = scmp.eq.s32.totalorder %s31, 0
    %p468 = por %p466, %p467
    %p469 = scmp.ne.s32.totalorder %s458, %s461
    %p470 = scmp.eq.s32.totalorder %s36, 1
    %p471 = por %p469, %p470
    %p472 = scmp.ne.s32.totalorder %s461, %s462
    %p473 = scmp.eq.s32.totalorder %s36, 0
    %p474 = por %p472, %p473
    %p475 = scmp.ne.s32.totalorder %s461, %s462
    %p476 = scmp.eq.s32.totalorder %s37, 1
    %p477 = por %p475, %p476
    %p479 = scmp.ne.s32.totalorder %s462, %s478
    %p480 = scmp.eq.s32.totalorder %s37, 0
    %p481 = por %p479, %p480
    %s482 = ssub.s32 %s31, %s38
    %p483 = scmp.eq.s32.totalorder %s482, 0
    %s485 = sadd.s32 %s484, 1
    %s486 = scalar_select %p483, %s484, %s485
    %p489 = pneg %p483
    %p490 = scmp.eq.s32.totalorder %s31, 1
    %p491 = por %p489, %p490
    %p492 = scmp.ne.s32.totalorder %s484, %s487
    %p493 = scmp.eq.s32.totalorder %s31, 0
    %p494 = por %p492, %p493
    %p495 = scmp.ne.s32.totalorder %s484, %s487
    %p496 = scmp.eq.s32.totalorder %s36, 1
    %p497 = por %p495, %p496
    %p498 = scmp.ne.s32.totalorder %s487, %s488
    %p499 = scmp.eq.s32.totalorder %s36, 0
    %p500 = por %p498, %p499
    %p501 = scmp.ne.s32.totalorder %s487, %s488
    %p502 = scmp.eq.s32.totalorder %s37, 1
    %p503 = por %p501, %p502
    %p505 = scmp.ne.s32.totalorder %s488, %s504
    %p506 = scmp.eq.s32.totalorder %s37, 0
    %p507 = por %p505, %p506
    %s508 = ssub.s32 %s31, %s38
    %p509 = scmp.eq.s32.totalorder %s508, 0
    %s511 = sadd.s32 %s510, 1
    %s512 = scalar_select %p509, %s510, %s511
    %p515 = pneg %p509
    %p516 = scmp.eq.s32.totalorder %s31, 1
    %p517 = por %p515, %p516
    %p518 = scmp.ne.s32.totalorder %s510, %s513
    %p519 = scmp.eq.s32.totalorder %s31, 0
    %p520 = por %p518, %p519
    %p521 = scmp.ne.s32.totalorder %s510, %s513
    %p522 = scmp.eq.s32.totalorder %s36, 1
    %p523 = por %p521, %p522
    %p524 = scmp.ne.s32.totalorder %s513, %s514
    %p525 = scmp.eq.s32.totalorder %s36, 0
    %p526 = por %p524, %p525
    %p527 = scmp.ne.s32.totalorder %s513, %s514
    %p528 = scmp.eq.s32.totalorder %s37, 1
    %p529 = por %p527, %p528
    %p531 = scmp.ne.s32.totalorder %s514, %s530
    %p532 = scmp.eq.s32.totalorder %s37, 0
    %p533 = por %p531, %p532
    %s534 = ssub.s32 %s31, %s38
    %p535 = scmp.eq.s32.totalorder %s534, 0
    %s537 = sadd.s32 %s536, 1
    %s538 = scalar_select %p535, %s536, %s537
    %p541 = pneg %p535
    %p542 = scmp.eq.s32.totalorder %s31, 1
    %p543 = por %p541, %p542
    %p544 = scmp.ne.s32.totalorder %s536, %s539
    %p545 = scmp.eq.s32.totalorder %s31, 0
    %p546 = por %p544, %p545
    %p547 = scmp.ne.s32.totalorder %s536, %s539
    %p548 = scmp.eq.s32.totalorder %s36, 1
    %p549 = por %p547, %p548
    %p550 = scmp.ne.s32.totalorder %s539, %s540
    %p551 = scmp.eq.s32.totalorder %s36, 0
    %p552 = por %p550, %p551
    %p553 = scmp.ne.s32.totalorder %s539, %s540
    %p554 = scmp.eq.s32.totalorder %s37, 1
    %p555 = por %p553, %p554
    %p557 = scmp.ne.s32.totalorder %s540, %s556
    %p558 = scmp.eq.s32.totalorder %s37, 0
    %p559 = por %p557, %p558
    %s561 = sadd.s32 %s560, 1
    %p564 = scmp.eq.s32.totalorder %s31, 1
    %p565 = scmp.ne.s32.totalorder %s560, %s562
    %p566 = scmp.eq.s32.totalorder %s31, 0
    %p567 = por %p565, %p566
    %p568 = scmp.ne.s32.totalorder %s560, %s562
    %p569 = scmp.eq.s32.totalorder %s36, 1
    %p570 = por %p568, %p569
    %p571 = scmp.ne.s32.totalorder %s562, %s563
    %p572 = scmp.eq.s32.totalorder %s36, 0
    %p573 = por %p571, %p572
    %p574 = scmp.ne.s32.totalorder %s562, %s563
    %p575 = scmp.eq.s32.totalorder %s37, 1
    %p576 = por %p574, %p575
    %p578 = scmp.ne.s32.totalorder %s563, %s577
    %p579 = scmp.eq.s32.totalorder %s37, 0
    %p580 = por %p578, %p579
    %s582 = sadd.s32 %s581, 1
    %p585 = scmp.eq.s32.totalorder %s31, 1
    %p586 = scmp.ne.s32.totalorder %s581, %s583
    %p587 = scmp.eq.s32.totalorder %s31, 0
    %p588 = por %p586, %p587
    %p589 = scmp.ne.s32.totalorder %s581, %s583
    %p590 = scmp.eq.s32.totalorder %s36, 1
    %p591 = por %p589, %p590
    %p592 = scmp.ne.s32.totalorder %s583, %s584
    %p593 = scmp.eq.s32.totalorder %s36, 0
    %p594 = por %p592, %p593
    %p595 = scmp.ne.s32.totalorder %s583, %s584
    %p596 = scmp.eq.s32.totalorder %s37, 1
    %p597 = por %p595, %p596
    %p599 = scmp.ne.s32.totalorder %s584, %s598
    %p600 = scmp.eq.s32.totalorder %s37, 0
    %p601 = por %p599, %p600
    %s603 = sadd.s32 %s602, 1
    %p606 = scmp.eq.s32.totalorder %s31, 1
    %p607 = scmp.ne.s32.totalorder %s602, %s604
    %p608 = scmp.eq.s32.totalorder %s31, 0
    %p609 = por %p607, %p608
    %p610 = scmp.ne.s32.totalorder %s602, %s604
    %p611 = scmp.eq.s32.totalorder %s36, 1
    %p612 = por %p610, %p611
    %p613 = scmp.ne.s32.totalorder %s604, %s605
    %p614 = scmp.eq.s32.totalorder %s36, 0
    %p615 = por %p613, %p614
    %p616 = scmp.ne.s32.totalorder %s604, %s605
    %p617 = scmp.eq.s32.totalorder %s37, 1
    %p618 = por %p616, %p617
    %p620 = scmp.ne.s32.totalorder %s605, %s619
    %p621 = scmp.eq.s32.totalorder %s37, 0
    %p622 = por %p620, %p621
    %s624 = sadd.s32 %s623, 1
    %p627 = scmp.eq.s32.totalorder %s31, 1
    %p628 = scmp.ne.s32.totalorder %s623, %s625
    %p629 = scmp.eq.s32.totalorder %s31, 0
    %p630 = por %p628, %p629
    %p631 = scmp.ne.s32.totalorder %s623, %s625
    %p632 = scmp.eq.s32.totalorder %s36, 1
    %p633 = por %p631, %p632
    %p634 = scmp.ne.s32.totalorder %s625, %s626
    %p635 = scmp.eq.s32.totalorder %s36, 0
    %p636 = por %p634, %p635
    %p637 = scmp.ne.s32.totalorder %s625, %s626
    %p638 = scmp.eq.s32.totalorder %s37, 1
    %p639 = por %p637, %p638
    %p641 = scmp.ne.s32.totalorder %s626, %s640
    %p642 = scmp.eq.s32.totalorder %s37, 0
    %p643 = por %p641, %p642
    %s645 = sadd.s32 %s644, 1
    %p648 = scmp.eq.s32.totalorder %s31, 1
    %p649 = scmp.ne.s32.totalorder %s644, %s646
    %p650 = scmp.eq.s32.totalorder %s31, 0
    %p651 = por %p649, %p650
    %p652 = scmp.ne.s32.totalorder %s644, %s646
    %p653 = scmp.eq.s32.totalorder %s36, 1
    %p654 = por %p652, %p653
    %p655 = scmp.ne.s32.totalorder %s646, %s647
    %p656 = scmp.eq.s32.totalorder %s36, 0
    %p657 = por %p655, %p656
    %p658 = scmp.ne.s32.totalorder %s646, %s647
    %p659 = scmp.eq.s32.totalorder %s37, 1
    %p660 = por %p658, %p659
    %p662 = scmp.ne.s32.totalorder %s647, %s661
    %p663 = scmp.eq.s32.totalorder %s37, 0
    %p664 = por %p662, %p663
    %p665 = scmp.le.s32.totalorder 1, %s31
    %p666 = scmp.lt.s32.totalorder %s31, 3
    %p667 = pnand %p665, %p666
    %p668 = pneg %p667
    // Predicated region
    $region9: #{vision_transformer_forward.1} parent=5 // pred_check
      _
    $region10: #{vision_transformer_forward.1} parent=5 // pred_check_branch
      %670 = sbr.rel (%p667) target = $region12
    $region11: #{vision_transformer_forward.1} parent=5 // pred_region
      %s671 = ssub.s32 %s31, 1
      // Predicated region
      $region13: #{vision_transformer_forward.1} parent=11 // pred_check
        %p672 = pneg %p52
      $region14: #{vision_transformer_forward.1} parent=11 // pred_check_branch
        %674 = sbr.rel (%p672) target = $region16
      $region15: #{vision_transformer_forward.1} parent=11 // pred_region
        _
      $region16: #{vision_transformer_forward.1} parent=11 // pred_fallthru
        _
      // Predicated region
      $region17: #{vision_transformer_forward.1} parent=11 // pred_check
        %p675 = pneg %p73
      $region18: #{vision_transformer_forward.1} parent=11 // pred_check_branch
        %677 = sbr.rel (%p675) target = $region20
      $region19: #{vision_transformer_forward.1} parent=11 // pred_region
        _
      $region20: #{vision_transformer_forward.1} parent=11 // pred_fallthru
        _
      // Predicated region
      $region21: #{vision_transformer_forward.1} parent=11 // pred_check
        %p678 = pneg %p94
      $region22: #{vision_transformer_forward.1} parent=11 // pred_check_branch
        %680 = sbr.rel (%p678) target = $region24
      $region23: #{vision_transformer_forward.1} parent=11 // pred_region
        _
      $region24: #{vision_transformer_forward.1} parent=11 // pred_fallthru
        _
      // Predicated region
      $region25: #{vision_transformer_forward.1} parent=11 // pred_check
        %p681 = pneg %p115
      $region26: #{vision_transformer_forward.1} parent=11 // pred_check_branch
        %683 = sbr.rel (%p681) target = $region28
      $region27: #{vision_transformer_forward.1} parent=11 // pred_region
        _
      $region28: #{vision_transformer_forward.1} parent=11 // pred_fallthru
        _
      // Predicated region
      $region29: #{vision_transformer_forward.1} parent=11 // pred_check
        %p684 = pneg %p136
      $region30: #{vision_transformer_forward.1} parent=11 // pred_check_branch
        %686 = sbr.rel (%p684) target = $region32
      $region31: #{vision_transformer_forward.1} parent=11 // pred_region
        _
      $region32: #{vision_transformer_forward.1} parent=11 // pred_fallthru
        _
      // Predicated region
      $region33: #{vision_transformer_forward.1} parent=11 // pred_check
        %p687 = pneg %p573
      $region34: #{vision_transformer_forward.1} parent=11 // pred_check_branch
        %689 = sbr.rel (%p687) target = $region36
      $region35: #{vision_transformer_forward.1} parent=11 // pred_region
        _
      $region36: #{vision_transformer_forward.1} parent=11 // pred_fallthru
        _
      // Predicated region
      $region37: #{vision_transformer_forward.1} parent=11 // pred_check
        %p690 = pneg %p594
      $region38: #{vision_transformer_forward.1} parent=11 // pred_check_branch
        %692 = sbr.rel (%p690) target = $region40
      $region39: #{vision_transformer_forward.1} parent=11 // pred_region
        _
      $region40: #{vision_transformer_forward.1} parent=11 // pred_fallthru
        _
      // Predicated region
      $region41: #{vision_transformer_forward.1} parent=11 // pred_check
        %p693 = pneg %p615
      $region42: #{vision_transformer_forward.1} parent=11 // pred_check_branch
        %695 = sbr.rel (%p693) target = $region44
      $region43: #{vision_transformer_forward.1} parent=11 // pred_region
        _
      $region44: #{vision_transformer_forward.1} parent=11 // pred_fallthru
        _
      // Predicated region
      $region45: #{vision_transformer_forward.1} parent=11 // pred_check
        %p696 = pneg %p636
      $region46: #{vision_transformer_forward.1} parent=11 // pred_check_branch
        %698 = sbr.rel (%p696) target = $region48
      $region47: #{vision_transformer_forward.1} parent=11 // pred_region
        _
      $region48: #{vision_transformer_forward.1} parent=11 // pred_fallthru
        _
    $region12: #{vision_transformer_forward.1} parent=5 // pred_fallthru
      _
    %p699 = scmp.lt.s32.totalorder %s31, 2
    // Predicated region
    $region49: #{vision_transformer_forward.1} parent=5 // pred_check
      %p700 = pneg %p699
    $region50: #{vision_transformer_forward.1} parent=5 // pred_check_branch
      %702 = sbr.rel (%p700) target = $region52
    $region51: #{vision_transformer_forward.1} parent=5 // pred_region
      // Predicated region
      $region53: #{vision_transformer_forward.1} parent=51 // pred_check
        %p703 = pneg %p156
      $region54: #{vision_transformer_forward.1} parent=51 // pred_check_branch
        %705 = sbr.rel (%p703) target = $region56
      $region55: #{vision_transformer_forward.1} parent=51 // pred_region
        %p706 = scmp.lt.s32.totalorder %s31, 1
        %s707 = scalar_select %p706, %s31, 1
        %s708 = smul.addr %s707, 4
        %s709 = smul.addr %s708, 8
        %s710 = scalar_lea.vmem %s5, %s709
      $region56: #{vision_transformer_forward.1} parent=51 // pred_fallthru
        _
      // Predicated region
      $region57: #{vision_transformer_forward.1} parent=51 // pred_check
        %p711 = pneg %p182
      $region58: #{vision_transformer_forward.1} parent=51 // pred_check_branch
        %713 = sbr.rel (%p711) target = $region60
      $region59: #{vision_transformer_forward.1} parent=51 // pred_region
        %p714 = scmp.lt.s32.totalorder %s31, 1
        %s715 = scalar_select %p714, %s31, 1
        %s716 = smul.addr %s715, 4
        %s717 = smul.addr %s716, 8
        %s718 = scalar_lea.vmem %s6, %s717
      $region60: #{vision_transformer_forward.1} parent=51 // pred_fallthru
        _
      // Predicated region
      $region61: #{vision_transformer_forward.1} parent=51 // pred_check
        %p719 = pneg %p208
      $region62: #{vision_transformer_forward.1} parent=51 // pred_check_branch
        %721 = sbr.rel (%p719) target = $region64
      $region63: #{vision_transformer_forward.1} parent=51 // pred_region
        %p722 = scmp.lt.s32.totalorder %s31, 1
        %s723 = scalar_select %p722, %s31, 1
        %s724 = smul.addr %s723, 4
        %s725 = smul.addr %s724, 8
        %s726 = scalar_lea.vmem %s7, %s725
      $region64: #{vision_transformer_forward.1} parent=51 // pred_fallthru
        _
      // Predicated region
      $region65: #{vision_transformer_forward.1} parent=51 // pred_check
        %p727 = pneg %p234
      $region66: #{vision_transformer_forward.1} parent=51 // pred_check_branch
        %729 = sbr.rel (%p727) target = $region68
      $region67: #{vision_transformer_forward.1} parent=51 // pred_region
        %p730 = scmp.lt.s32.totalorder %s31, 1
        %s731 = scalar_select %p730, %s31, 1
        %s732 = scalar_lea.vmem %s8, %s731
      $region68: #{vision_transformer_forward.1} parent=51 // pred_fallthru
        _
      // Predicated region
      $region69: #{vision_transformer_forward.1} parent=51 // pred_check
        %p733 = pneg %p260
      $region70: #{vision_transformer_forward.1} parent=51 // pred_check_branch
        %735 = sbr.rel (%p733) target = $region72
      $region71: #{vision_transformer_forward.1} parent=51 // pred_region
        %p736 = scmp.lt.s32.totalorder %s31, 1
        %s737 = scalar_select %p736, %s31, 1
        %s738 = scalar_lea.vmem %s9, %s737
      $region72: #{vision_transformer_forward.1} parent=51 // pred_fallthru
        _
      // Predicated region
      $region73: #{vision_transformer_forward.1} parent=51 // pred_check
        %p739 = pneg %p286
      $region74: #{vision_transformer_forward.1} parent=51 // pred_check_branch
        %741 = sbr.rel (%p739) target = $region76
      $region75: #{vision_transformer_forward.1} parent=51 // pred_region
        %p742 = scmp.lt.s32.totalorder %s31, 1
        %s743 = scalar_select %p742, %s31, 1
        %s744 = scalar_lea.vmem %s10, %s743
      $region76: #{vision_transformer_forward.1} parent=51 // pred_fallthru
        _
      // Predicated region
      $region77: #{vision_transformer_forward.1} parent=51 // pred_check
        %p745 = pneg %p312
      $region78: #{vision_transformer_forward.1} parent=51 // pred_check_branch
        %747 = sbr.rel (%p745) target = $region80
      $region79: #{vision_transformer_forward.1} parent=51 // pred_region
        %p748 = scmp.lt.s32.totalorder %s31, 1
        %s749 = scalar_select %p748, %s31, 1
        %s750 = smul.addr %s749, 4
        %s751 = smul.addr %s750, 8
        %s752 = scalar_lea.vmem %s11, %s751
      $region80: #{vision_transformer_forward.1} parent=51 // pred_fallthru
        _
      // Predicated region
      $region81: #{vision_transformer_forward.1} parent=51 // pred_check
        %p753 = pneg %p338
      $region82: #{vision_transformer_forward.1} parent=51 // pred_check_branch
        %755 = sbr.rel (%p753) target = $region84
      $region83: #{vision_transformer_forward.1} parent=51 // pred_region
        %p756 = scmp.lt.s32.totalorder %s31, 1
        %s757 = scalar_select %p756, %s31, 1
        %s758 = scalar_lea.vmem %s12, %s757
      $region84: #{vision_transformer_forward.1} parent=51 // pred_fallthru
        _
      // Predicated region
      $region85: #{vision_transformer_forward.1} parent=51 // pred_check
        %p759 = pneg %p364
      $region86: #{vision_transformer_forward.1} parent=51 // pred_check_branch
        %761 = sbr.rel (%p759) target = $region88
      $region87: #{vision_transformer_forward.1} parent=51 // pred_region
        %p762 = scmp.lt.s32.totalorder %s31, 1
        %s763 = scalar_select %p762, %s31, 1
        %s764 = scalar_lea.vmem %s13, %s763
      $region88: #{vision_transformer_forward.1} parent=51 // pred_fallthru
        _
      // Predicated region
      $region89: #{vision_transformer_forward.1} parent=51 // pred_check
        %p765 = pneg %p390
      $region90: #{vision_transformer_forward.1} parent=51 // pred_check_branch
        %767 = sbr.rel (%p765) target = $region92
      $region91: #{vision_transformer_forward.1} parent=51 // pred_region
        %p768 = scmp.lt.s32.totalorder %s31, 1
        %s769 = scalar_select %p768, %s31, 1
        %s770 = scalar_lea.vmem %s14, %s769
      $region92: #{vision_transformer_forward.1} parent=51 // pred_fallthru
        _
      // Predicated region
      $region93: #{vision_transformer_forward.1} parent=51 // pred_check
        %p771 = pneg %p416
      $region94: #{vision_transformer_forward.1} parent=51 // pred_check_branch
        %773 = sbr.rel (%p771) target = $region96
      $region95: #{vision_transformer_forward.1} parent=51 // pred_region
        %p774 = scmp.lt.s32.totalorder %s31, 1
        %s775 = scalar_select %p774, %s31, 1
        %s776 = smul.addr %s775, 4
        %s777 = smul.addr %s776, 8
        %s778 = scalar_lea.vmem %s15, %s777
      $region96: #{vision_transformer_forward.1} parent=51 // pred_fallthru
        _
      // Predicated region
      $region97: #{vision_transformer_forward.1} parent=51 // pred_check
        %p779 = pneg %p442
      $region98: #{vision_transformer_forward.1} parent=51 // pred_check_branch
        %781 = sbr.rel (%p779) target = $region100
      $region99: #{vision_transformer_forward.1} parent=51 // pred_region
        %p782 = scmp.lt.s32.totalorder %s31, 1
        %s783 = scalar_select %p782, %s31, 1
        %s784 = scalar_lea.vmem %s16, %s783
      $region100: #{vision_transformer_forward.1} parent=51 // pred_fallthru
        _
      // Predicated region
      $region101: #{vision_transformer_forward.1} parent=51 // pred_check
        %p785 = pneg %p468
      $region102: #{vision_transformer_forward.1} parent=51 // pred_check_branch
        %787 = sbr.rel (%p785) target = $region104
      $region103: #{vision_transformer_forward.1} parent=51 // pred_region
        %p788 = scmp.lt.s32.totalorder %s31, 1
        %s789 = scalar_select %p788, %s31, 1
        %s790 = smul.addr %s789, 8
        %s791 = smul.addr %s790, 8
        %s792 = scalar_lea.vmem %s17, %s791
      $region104: #{vision_transformer_forward.1} parent=51 // pred_fallthru
        _
      // Predicated region
      $region105: #{vision_transformer_forward.1} parent=51 // pred_check
        %p793 = pneg %p494
      $region106: #{vision_transformer_forward.1} parent=51 // pred_check_branch
        %795 = sbr.rel (%p793) target = $region108
      $region107: #{vision_transformer_forward.1} parent=51 // pred_region
        %p796 = scmp.lt.s32.totalorder %s31, 1
        %s797 = scalar_select %p796, %s31, 1
        %s798 = scalar_lea.vmem %s18, %s797
      $region108: #{vision_transformer_forward.1} parent=51 // pred_fallthru
        _
      // Predicated region
      $region109: #{vision_transformer_forward.1} parent=51 // pred_check
        %p799 = pneg %p520
      $region110: #{vision_transformer_forward.1} parent=51 // pred_check_branch
        %801 = sbr.rel (%p799) target = $region112
      $region111: #{vision_transformer_forward.1} parent=51 // pred_region
        %p802 = scmp.lt.s32.totalorder %s31, 1
        %s803 = scalar_select %p802, %s31, 1
        %s804 = scalar_lea.vmem %s19, %s803
      $region112: #{vision_transformer_forward.1} parent=51 // pred_fallthru
        _
      // Predicated region
      $region113: #{vision_transformer_forward.1} parent=51 // pred_check
        %p805 = pneg %p546
      $region114: #{vision_transformer_forward.1} parent=51 // pred_check_branch
        %807 = sbr.rel (%p805) target = $region116
      $region115: #{vision_transformer_forward.1} parent=51 // pred_region
        %p808 = scmp.lt.s32.totalorder %s31, 1
        %s809 = scalar_select %p808, %s31, 1
        %s810 = scalar_lea.vmem %s20, %s809
      $region116: #{vision_transformer_forward.1} parent=51 // pred_fallthru
        _
    $region52: #{vision_transformer_forward.1} parent=5 // pred_fallthru
      _
    %p811 = scmp.le.s32.totalorder 1, %s31
    %p812 = scmp.lt.s32.totalorder %s31, 3
    %p813 = pnand %p811, %p812
    %p814 = pneg %p813
    // Predicated region
    $region117: #{vision_transformer_forward.1} parent=5 // pred_check
      _
    $region118: #{vision_transformer_forward.1} parent=5 // pred_check_branch
      %816 = sbr.rel (%p813) target = $region120
    $region119: #{vision_transformer_forward.1} parent=5 // pred_region
      %s817 = ssub.s32 %s31, 1
      %p818 = pneg %p52
      %p819 = pneg %p49
      %p820 = pneg %p73
      %p821 = pneg %p70
      %p822 = pneg %p94
      %p823 = pneg %p91
      %p824 = pneg %p115
      %p825 = pneg %p112
      %p826 = pneg %p136
      %p827 = pneg %p133
      %p828 = scmp.lt.s32.totalorder %s36, 1
      %s829 = scalar_select %p828, %s36, 1
      %s830 = smul.addr %s829, 4
      %s831 = smul.addr %s830, 8
      %s832 = scalar_lea.vmem %s5, %s831
      %p833 = pneg %p162
      %p834 = pneg %p159
      %p835 = scmp.lt.s32.totalorder %s36, 1
      %s836 = scalar_select %p835, %s36, 1
      %s837 = smul.addr %s836, 4
      %s838 = smul.addr %s837, 8
      %s839 = scalar_lea.vmem %s6, %s838
      %p840 = pneg %p188
      %p841 = pneg %p185
      %p842 = scmp.lt.s32.totalorder %s36, 1
      %s843 = scalar_select %p842, %s36, 1
      %s844 = smul.addr %s843, 4
      %s845 = smul.addr %s844, 8
      %s846 = scalar_lea.vmem %s7, %s845
      %p847 = pneg %p214
      %p848 = pneg %p211
      %p849 = scmp.lt.s32.totalorder %s36, 1
      %s850 = scalar_select %p849, %s36, 1
      %s851 = scalar_lea.vmem %s8, %s850
      %p852 = pneg %p240
      %p853 = pneg %p237
      %p854 = scmp.lt.s32.totalorder %s36, 1
      %s855 = scalar_select %p854, %s36, 1
      %s856 = scalar_lea.vmem %s9, %s855
      %p857 = pneg %p266
      %p858 = pneg %p263
      %p859 = scmp.lt.s32.totalorder %s36, 1
      %s860 = scalar_select %p859, %s36, 1
      %s861 = scalar_lea.vmem %s10, %s860
      %p862 = pneg %p292
      %p863 = pneg %p289
      %p864 = scmp.lt.s32.totalorder %s36, 1
      %s865 = scalar_select %p864, %s36, 1
      %s866 = smul.addr %s865, 4
      %s867 = smul.addr %s866, 8
      %s868 = scalar_lea.vmem %s11, %s867
      %p869 = pneg %p318
      %p870 = pneg %p315
      %p871 = scmp.lt.s32.totalorder %s36, 1
      %s872 = scalar_select %p871, %s36, 1
      %s873 = scalar_lea.vmem %s12, %s872
      %p874 = pneg %p344
      %p875 = pneg %p341
      %p876 = scmp.lt.s32.totalorder %s36, 1
      %s877 = scalar_select %p876, %s36, 1
      %s878 = scalar_lea.vmem %s13, %s877
      %p879 = pneg %p370
      %p880 = pneg %p367
      %p881 = scmp.lt.s32.totalorder %s36, 1
      %s882 = scalar_select %p881, %s36, 1
      %s883 = scalar_lea.vmem %s14, %s882
      %p884 = pneg %p396
      %p885 = pneg %p393
      %p886 = scmp.lt.s32.totalorder %s36, 1
      %s887 = scalar_select %p886, %s36, 1
      %s888 = smul.addr %s887, 4
      %s889 = smul.addr %s888, 8
      %s890 = scalar_lea.vmem %s15, %s889
      %p891 = pneg %p422
      %p892 = pneg %p419
      %p893 = scmp.lt.s32.totalorder %s36, 1
      %s894 = scalar_select %p893, %s36, 1
      %s895 = scalar_lea.vmem %s16, %s894
      %p896 = pneg %p448
      %p897 = pneg %p445
      %p898 = scmp.lt.s32.totalorder %s36, 1
      %s899 = scalar_select %p898, %s36, 1
      %s900 = smul.addr %s899, 8
      %s901 = smul.addr %s900, 8
      %s902 = scalar_lea.vmem %s17, %s901
      %p903 = pneg %p474
      %p904 = pneg %p471
      %p905 = scmp.lt.s32.totalorder %s36, 1
      %s906 = scalar_select %p905, %s36, 1
      %s907 = scalar_lea.vmem %s18, %s906
      %p908 = pneg %p500
      %p909 = pneg %p497
      %p910 = scmp.lt.s32.totalorder %s36, 1
      %s911 = scalar_select %p910, %s36, 1
      %s912 = scalar_lea.vmem %s19, %s911
      %p913 = pneg %p526
      %p914 = pneg %p523
      %p915 = scmp.lt.s32.totalorder %s36, 1
      %s916 = scalar_select %p915, %s36, 1
      %s917 = scalar_lea.vmem %s20, %s916
      %p918 = pneg %p552
      %p919 = pneg %p549
      %p920 = pneg %p573
      %p921 = pneg %p570
      %p922 = pneg %p594
      %p923 = pneg %p591
      %p924 = pneg %p615
      %p925 = pneg %p612
      %p926 = pneg %p636
      %p927 = pneg %p633
      %p928 = pneg %p657
      %p929 = pneg %p654
      %p930 = scmp.lt.s32.totalorder %s36, 1
      %s931 = scalar_select %p930, %s36, 1
      %s932 = smul.addr %s931, 4
      %s933 = smul.addr %s932, 8
      %s934 = scalar_lea.vmem %s5, %s933
      %p935 = scmp.lt.s32.totalorder %s36, 1
      %s936 = scalar_select %p935, %s36, 1
      %s937 = smul.addr %s936, 4
      %s938 = smul.addr %s937, 8
      %s939 = scalar_lea.vmem %s6, %s938
      %p940 = scmp.lt.s32.totalorder %s36, 1
      %s941 = scalar_select %p940, %s36, 1
      %s942 = smul.addr %s941, 4
      %s943 = smul.addr %s942, 8
      %s944 = scalar_lea.vmem %s7, %s943
      %p945 = scmp.lt.s32.totalorder %s36, 1
      %s946 = scalar_select %p945, %s36, 1
      %s947 = scalar_lea.vmem %s8, %s946
      %p948 = scmp.lt.s32.totalorder %s36, 1
      %s949 = scalar_select %p948, %s36, 1
      %s950 = scalar_lea.vmem %s9, %s949
      %p951 = scmp.lt.s32.totalorder %s36, 1
      %s952 = scalar_select %p951, %s36, 1
      %s953 = scalar_lea.vmem %s10, %s952
      %p954 = scmp.lt.s32.totalorder %s36, 1
      %s955 = scalar_select %p954, %s36, 1
      %s956 = smul.addr %s955, 4
      %s957 = smul.addr %s956, 8
      %s958 = scalar_lea.vmem %s11, %s957
      %p959 = scmp.lt.s32.totalorder %s36, 1
      %s960 = scalar_select %p959, %s36, 1
      %s961 = scalar_lea.vmem %s12, %s960
      %p962 = scmp.lt.s32.totalorder %s36, 1
      %s963 = scalar_select %p962, %s36, 1
      %s964 = scalar_lea.vmem %s13, %s963
      %p965 = scmp.lt.s32.totalorder %s36, 1
      %s966 = scalar_select %p965, %s36, 1
      %s967 = scalar_lea.vmem %s14, %s966
      %p968 = scmp.lt.s32.totalorder %s36, 1
      %s969 = scalar_select %p968, %s36, 1
      %s970 = smul.addr %s969, 4
      %s971 = smul.addr %s970, 8
      %s972 = scalar_lea.vmem %s15, %s971
      %p973 = scmp.lt.s32.totalorder %s36, 1
      %s974 = scalar_select %p973, %s36, 1
      %s975 = scalar_lea.vmem %s16, %s974
      %p976 = scmp.lt.s32.totalorder %s36, 1
      %s977 = scalar_select %p976, %s36, 1
      %s978 = smul.addr %s977, 8
      %s979 = smul.addr %s978, 8
      %s980 = scalar_lea.vmem %s17, %s979
      %p981 = scmp.lt.s32.totalorder %s36, 1
      %s982 = scalar_select %p981, %s36, 1
      %s983 = scalar_lea.vmem %s18, %s982
      %p984 = scmp.lt.s32.totalorder %s36, 1
      %s985 = scalar_select %p984, %s36, 1
      %s986 = scalar_lea.vmem %s19, %s985
      %p987 = scmp.lt.s32.totalorder %s36, 1
      %s988 = scalar_select %p987, %s36, 1
      %s989 = scalar_lea.vmem %s20, %s988
      %p990 = scmp.eq.s32.totalorder %s36, 0
      // Predicated region
      $region121: #{vision_transformer_forward.1} parent=119 // pred_check
        %p991 = pneg %p990
      $region122: #{vision_transformer_forward.1} parent=119 // pred_check_branch
        %993 = sbr.rel (%p991) target = $region124
      $region123: #{vision_transformer_forward.1} parent=119 // pred_region
        %v994 = vld [vmem:[%s0] sm:$0xff]
        %v995 = vld [vmem:[%s0 + $0x8] sm:$0xff]
        %v996 = vld [vmem:[%s0 + $0x10] sm:$0xff]
        %v997 = vld [vmem:[%s0 + $0x18] sm:$0xff]
        %v998 = vld [vmem:[%s2] sm:$0xff]
        %v999 = vld [vmem:[%s2 + $0x8] sm:$0xff]
        %v1000 = vld [vmem:[%s2 + $0x10] sm:$0xff]
        %v1001 = vld [vmem:[%s2 + $0x18] sm:$0xff]
        %v1002 = vld [vmem:[%s1] sm:$0xff]
        %v1003 = vld [vmem:[%s1 + $0x8] sm:$0xff]
        %v1004 = vld [vmem:[%s1 + $0x10] sm:$0xff]
        %v1005 = vld [vmem:[%s1 + $0x18] sm:$0xff]
        %vm1006 = vcmask 261120
        %v1008 = vsel %vm1006, %v994, 0
        %v1011 = vsel %vm1006, %v995, 0
        %v1014 = vsel %vm1006, %v996, 0
        %v1017 = vsel %vm1006, %v997, 0
        %1019 = vmatprep.subr.mxu0 0.0
        %1020 = vmatpush1.msra.mxu0 %v998
        %1021 = vmatprep.subr.mxu0 0.0
        %1022 = vmatpush1.msra.mxu0 %v999
        %1023 = vmatprep.subr.mxu0 0.0
        %1024 = vmatpush1.msra.mxu0 %v1000
        %1025 = vmatprep.subr.mxu0 0.0
        %1026 = vmatpush1.msra.mxu0 %v1001
        %1027 = vmatprep.subr.mxu0 0.0
        %1028 = vmatpush1.msra.mxu0 0.0
        %1029 = vmatprep.subr.mxu0 0.0
        %1030 = vmatpush1.msra.mxu0 0.0
        %1031 = vmatprep.subr.mxu0 0.0
        %1032 = vmatpush1.msra.mxu0 0.0
        %1033 = vmatprep.subr.mxu0 0.0
        %1034 = vmatpush1.msra.mxu0 0.0
        %1035 = vmatprep.subr.mxu0 0.0
        %1036 = vmatpush1.msra.mxu0 0.0
        %1037 = vmatprep.subr.mxu0 0.0
        %1038 = vmatpush1.msra.mxu0 0.0
        %1039 = vmatprep.subr.mxu0 0.0
        %1040 = vmatpush1.msra.mxu0 0.0
        %1041 = vmatprep.subr.mxu0 0.0
        %1042 = vmatpush1.msra.mxu0 0.0
        %1043 = vmatprep.subr.mxu0 0.0
        %1044 = vmatpush1.msra.mxu0 0.0
        %1045 = vmatprep.subr.mxu0 0.0
        %1046 = vmatpush1.msra.mxu0 0.0
        %1047 = vmatprep.subr.mxu0 0.0
        %1048 = vmatpush1.msra.mxu0 0.0
        %1049 = vmatprep.subr.mxu0 0.0
        %1050 = vmatpush1.msra.mxu0 0.0
        %1051 = vmatprep.subr.mxu0 0.0
        %1052 = vmatpush1.msra.mxu0 0.0
        %1053 = vmatprep.subr.mxu0 0.0
        %1054 = vmatpush1.msra.mxu0 0.0
        %1055 = vmatprep.subr.mxu0 0.0
        %1056 = vmatpush1.msra.mxu0 0.0
        %1057 = vmatprep.subr.mxu0 0.0
        %1058 = vmatpush1.msra.mxu0 0.0
        %1059 = vmatprep.subr.mxu0 0.0
        %1060 = vmatpush1.msra.mxu0 0.0
        %1061 = vmatprep.subr.mxu0 0.0
        %1062 = vmatpush1.msra.mxu0 0.0
        %1063 = vmatprep.subr.mxu0 0.0
        %1064 = vmatpush1.msra.mxu0 0.0
        %1065 = vmatprep.subr.mxu0 0.0
        %1066 = vmatpush1.msra.mxu0 0.0
        %1067 = vmatprep.subr.mxu0 0.0
        %1068 = vmatpush1.msra.mxu0 0.0
        %1069 = vmatprep.subr.mxu0 0.0
        %1070 = vmatpush1.msra.mxu0 0.0
        %1071 = vmatprep.subr.mxu0 0.0
        %1072 = vmatpush1.msra.mxu0 0.0
        %1073 = vmatprep.subr.mxu0 0.0
        %1074 = vmatpush1.msra.mxu0 0.0
        %1075 = vmatprep.subr.mxu0 0.0
        %1076 = vmatpush1.msra.mxu0 0.0
        %1077 = vmatprep.subr.mxu0 0.0
        %1078 = vmatpush1.msra.mxu0 0.0
        %1079 = vmatprep.subr.mxu0 0.0
        %1080 = vmatpush1.msra.mxu0 0.0
        %1081 = vmatprep.subr.mxu0 0.0
        %1082 = vmatpush1.msra.mxu0 0.0
        %1083 = vmatprep.mubr.f32.mxu0 0.0
        %1084 = vmatmul.mubr.f32.gmra.mrb[0].mxu0 %v1008
        %v1085 = vpop.f32.mrb[0].mxu0
        %v1086 = vadd.f32 %v1002, %v1085
        %v1087 = vpop.f32.mrb[0].mxu0
        %1088 = vmatprep.mubr.f32.mxu0 0.0
        %1089 = vmatmul.mubr.f32.gmra.mrb[0].mxu0 %v1011
        %v1090 = vpop.f32.mrb[0].mxu0
        %v1091 = vadd.f32 %v1003, %v1090
        %v1092 = vpop.f32.mrb[0].mxu0
        %1093 = vmatprep.mubr.f32.mxu0 0.0
        %1094 = vmatmul.mubr.f32.gmra.mrb[0].mxu0 %v1014
        %v1095 = vpop.f32.mrb[0].mxu0
        %v1096 = vadd.f32 %v1004, %v1095
        %v1097 = vpop.f32.mrb[0].mxu0
        %1098 = vmatprep.mubr.f32.mxu0 0.0
        %1099 = vmatmul.mubr.f32.gmra.mrb[0].mxu0 %v1017
        %v1100 = vpop.f32.mrb[0].mxu0
        %v1101 = vadd.f32 %v1005, %v1100
        %v1102 = vpop.f32.mrb[0].mxu0
        %1103 = vdwg.mxu0
        %1104 = vst.msk [vmem:[#allocation2] sm:$0xff] %vm1006, %v1086
        %1105 = vst.msk [vmem:[#allocation2 + $0x8] sm:$0xff] %vm1006, %v1091
        %1106 = vst.msk [vmem:[#allocation2 + $0x10] sm:$0xff] %vm1006, %v1096
        %1107 = vst.msk [vmem:[#allocation2 + $0x18] sm:$0xff] %vm1006, %v1101
      $region124: #{vision_transformer_forward.1} parent=119 // pred_fallthru
        _
      %v1108 = vld [vmem:[#allocation2] sm:$0xff]
      %v1109 = vld [vmem:[#allocation2 + $0x8] sm:$0xff]
      %v1110 = vld [vmem:[#allocation2 + $0x10] sm:$0xff]
      %v1111 = vld [vmem:[#allocation2 + $0x18] sm:$0xff]
      %v1112 = vld [vmem:[%s934] sm:$0xff]
      %v1113 = vld [vmem:[%s934 + $0x8] sm:$0xff]
      %v1114 = vld [vmem:[%s934 + $0x10] sm:$0xff]
      %v1115 = vld [vmem:[%s934 + $0x18] sm:$0xff]
      %v1116 = vld [vmem:[%s947] sm:$0x1]
      %v1118 = vlaneseq
      %v1119 = vshrl.u32 %v1118, 7
      %v1120 = vsub.s32 0, %v1119
      %v1121 = vrot.slane %v1116, %v1120
      %vm1123 = vcmask 261120
      %v1125 = vsel %vm1123, %v1108, 0
      %v1128 = vsel %vm1123, %v1109, 0
      %v1131 = vsel %vm1123, %v1110, 0
      %v1134 = vsel %vm1123, %v1111, 0
      %1136 = vmatprep.subr.mxu0 0.0
      %1137 = vmatpush1.msra.mxu0 %v1112
      %1138 = vmatprep.subr.mxu0 0.0
      %1139 = vmatpush1.msra.mxu0 %v1113
      %1140 = vmatprep.subr.mxu0 0.0
      %1141 = vmatpush1.msra.mxu0 %v1114
      %1142 = vmatprep.subr.mxu0 0.0
      %1143 = vmatpush1.msra.mxu0 %v1115
      %1144 = vmatprep.subr.mxu0 0.0
      %1145 = vmatpush1.msra.mxu0 0.0
      %1146 = vmatprep.subr.mxu0 0.0
      %1147 = vmatpush1.msra.mxu0 0.0
      %1148 = vmatprep.subr.mxu0 0.0
      %1149 = vmatpush1.msra.mxu0 0.0
      %1150 = vmatprep.subr.mxu0 0.0
      %1151 = vmatpush1.msra.mxu0 0.0
      %1152 = vmatprep.subr.mxu0 0.0
      %1153 = vmatpush1.msra.mxu0 0.0
      %1154 = vmatprep.subr.mxu0 0.0
      %1155 = vmatpush1.msra.mxu0 0.0
      %1156 = vmatprep.subr.mxu0 0.0
      %1157 = vmatpush1.msra.mxu0 0.0
      %1158 = vmatprep.subr.mxu0 0.0
      %1159 = vmatpush1.msra.mxu0 0.0
      %1160 = vmatprep.subr.mxu0 0.0
      %1161 = vmatpush1.msra.mxu0 0.0
      %1162 = vmatprep.subr.mxu0 0.0
      %1163 = vmatpush1.msra.mxu0 0.0
      %1164 = vmatprep.subr.mxu0 0.0
      %1165 = vmatpush1.msra.mxu0 0.0
      %1166 = vmatprep.subr.mxu0 0.0
      %1167 = vmatpush1.msra.mxu0 0.0
      %1168 = vmatprep.subr.mxu0 0.0
      %1169 = vmatpush1.msra.mxu0 0.0
      %1170 = vmatprep.subr.mxu0 0.0
      %1171 = vmatpush1.msra.mxu0 0.0
      %1172 = vmatprep.subr.mxu0 0.0
      %1173 = vmatpush1.msra.mxu0 0.0
      %1174 = vmatprep.subr.mxu0 0.0
      %1175 = vmatpush1.msra.mxu0 0.0
      %1176 = vmatprep.subr.mxu0 0.0
      %1177 = vmatpush1.msra.mxu0 0.0
      %1178 = vmatprep.subr.mxu0 0.0
      %1179 = vmatpush1.msra.mxu0 0.0
      %1180 = vmatprep.subr.mxu0 0.0
      %1181 = vmatpush1.msra.mxu0 0.0
      %1182 = vmatprep.subr.mxu0 0.0
      %1183 = vmatpush1.msra.mxu0 0.0
      %1184 = vmatprep.subr.mxu0 0.0
      %1185 = vmatpush1.msra.mxu0 0.0
      %1186 = vmatprep.subr.mxu0 0.0
      %1187 = vmatpush1.msra.mxu0 0.0
      %1188 = vmatprep.subr.mxu0 0.0
      %1189 = vmatpush1.msra.mxu0 0.0
      %1190 = vmatprep.subr.mxu0 0.0
      %1191 = vmatpush1.msra.mxu0 0.0
      %1192 = vmatprep.subr.mxu0 0.0
      %1193 = vmatpush1.msra.mxu0 0.0
      %1194 = vmatprep.subr.mxu0 0.0
      %1195 = vmatpush1.msra.mxu0 0.0
      %1196 = vmatprep.subr.mxu0 0.0
      %1197 = vmatpush1.msra.mxu0 0.0
      %1198 = vmatprep.subr.mxu0 0.0
      %1199 = vmatpush1.msra.mxu0 0.0
      %1200 = vmatprep.mubr.f32.mxu0 0.0
      %1201 = vmatmul.mubr.f32.gmra.mrb[0].mxu0 %v1125
      %v1202 = vpop.f32.mrb[0].mxu0
      %v1203 = vadd.f32 %v1121, %v1202
      %v1204 = vpop.f32.mrb[0].mxu0
      %1205 = vmatprep.mubr.f32.mxu0 0.0
      %1206 = vmatmul.mubr.f32.gmra.mrb[0].mxu0 %v1128
      %v1207 = vpop.f32.mrb[0].mxu0
      %v1208 = vadd.f32 %v1121, %v1207
      %v1209 = vpop.f32.mrb[0].mxu0
      %1210 = vmatprep.mubr.f32.mxu0 0.0
      %1211 = vmatmul.mubr.f32.gmra.mrb[0].mxu0 %v1131
      %v1212 = vpop.f32.mrb[0].mxu0
      %v1213 = vadd.f32 %v1121, %v1212
      %v1214 = vpop.f32.mrb[0].mxu0
      %1215 = vmatprep.mubr.f32.mxu0 0.0
      %1216 = vmatmul.mubr.f32.gmra.mrb[0].mxu0 %v1134
      %v1217 = vpop.f32.mrb[0].mxu0
      %v1218 = vadd.f32 %v1121, %v1217
      %v1219 = vpop.f32.mrb[0].mxu0
      %1220 = vdwg.mxu0
      %v1221 = vmul.f32 %v1203, 0.35355338
      %v1222 = vmul.f32 %v1208, 0.35355338
      %v1223 = vmul.f32 %v1213, 0.35355338
      %v1224 = vmul.f32 %v1218, 0.35355338
      %v1225 = vld [vmem:[%s939] sm:$0xff]
      %v1226 = vld [vmem:[%s939 + $0x8] sm:$0xff]
      %v1227 = vld [vmem:[%s939 + $0x10] sm:$0xff]
      %v1228 = vld [vmem:[%s939 + $0x18] sm:$0xff]
      %v1229 = vld [vmem:[%s950] sm:$0x1]
      %v1231 = vlaneseq
      %v1232 = vshrl.u32 %v1231, 7
      %v1233 = vsub.s32 0, %v1232
      %v1234 = vrot.slane %v1229, %v1233
      %1236 = vmatprep.subr.mxu0 0.0
      %1237 = vmatpush1.msra.mxu0 %v1225
      %1238 = vmatprep.subr.mxu0 0.0
      %1239 = vmatpush1.msra.mxu0 %v1226
      %1240 = vmatprep.subr.mxu0 0.0
      %1241 = vmatpush1.msra.mxu0 %v1227
      %1242 = vmatprep.subr.mxu0 0.0
      %1243 = vmatpush1.msra.mxu0 %v1228
      %1244 = vmatprep.subr.mxu0 0.0
      %1245 = vmatpush1.msra.mxu0 0.0
      %1246 = vmatprep.subr.mxu0 0.0
      %1247 = vmatpush1.msra.mxu0 0.0
      %1248 = vmatprep.subr.mxu0 0.0
      %1249 = vmatpush1.msra.mxu0 0.0
      %1250 = vmatprep.subr.mxu0 0.0
      %1251 = vmatpush1.msra.mxu0 0.0
      %1252 = vmatprep.subr.mxu0 0.0
      %1253 = vmatpush1.msra.mxu0 0.0
      %1254 = vmatprep.subr.mxu0 0.0
      %1255 = vmatpush1.msra.mxu0 0.0
      %1256 = vmatprep.subr.mxu0 0.0
      %1257 = vmatpush1.msra.mxu0 0.0
      %1258 = vmatprep.subr.mxu0 0.0
      %1259 = vmatpush1.msra.mxu0 0.0
      %1260 = vmatprep.subr.mxu0 0.0
      %1261 = vmatpush1.msra.mxu0 0.0
      %1262 = vmatprep.subr.mxu0 0.0
      %1263 = vmatpush1.msra.mxu0 0.0
      %1264 = vmatprep.subr.mxu0 0.0
      %1265 = vmatpush1.msra.mxu0 0.0
      %1266 = vmatprep.subr.mxu0 0.0
      %1267 = vmatpush1.msra.mxu0 0.0
      %1268 = vmatprep.subr.mxu0 0.0
      %1269 = vmatpush1.msra.mxu0 0.0
      %1270 = vmatprep.subr.mxu0 0.0
      %1271 = vmatpush1.msra.mxu0 0.0
      %1272 = vmatprep.subr.mxu0 0.0
      %1273 = vmatpush1.msra.mxu0 0.0
      %1274 = vmatprep.subr.mxu0 0.0
      %1275 = vmatpush1.msra.mxu0 0.0
      %1276 = vmatprep.subr.mxu0 0.0
      %1277 = vmatpush1.msra.mxu0 0.0
      %1278 = vmatprep.subr.mxu0 0.0
      %1279 = vmatpush1.msra.mxu0 0.0
      %1280 = vmatprep.subr.mxu0 0.0
      %1281 = vmatpush1.msra.mxu0 0.0
      %1282 = vmatprep.subr.mxu0 0.0
      %1283 = vmatpush1.msra.mxu0 0.0
      %1284 = vmatprep.subr.mxu0 0.0
      %1285 = vmatpush1.msra.mxu0 0.0
      %1286 = vmatprep.subr.mxu0 0.0
      %1287 = vmatpush1.msra.mxu0 0.0
      %1288 = vmatprep.subr.mxu0 0.0
      %1289 = vmatpush1.msra.mxu0 0.0
      %1290 = vmatprep.subr.mxu0 0.0
      %1291 = vmatpush1.msra.mxu0 0.0
      %1292 = vmatprep.subr.mxu0 0.0
      %1293 = vmatpush1.msra.mxu0 0.0
      %1294 = vmatprep.subr.mxu0 0.0
      %1295 = vmatpush1.msra.mxu0 0.0
      %1296 = vmatprep.subr.mxu0 0.0
      %1297 = vmatpush1.msra.mxu0 0.0
      %1298 = vmatprep.subr.mxu0 0.0
      %1299 = vmatpush1.msra.mxu0 0.0
      %1300 = vmatprep.mubr.f32.mxu0 0.0
      %1301 = vmatmul.mubr.f32.gmra.mrb[0].mxu0 %v1125
      %v1302 = vpop.f32.mrb[0].mxu0
      %v1303 = vadd.f32 %v1234, %v1302
      %v1304 = vpop.f32.mrb[0].mxu0
      %1305 = vmatprep.mubr.f32.mxu0 0.0
      %1306 = vmatmul.mubr.f32.gmra.mrb[0].mxu0 %v1128
      %v1307 = vpop.f32.mrb[0].mxu0
      %v1308 = vadd.f32 %v1234, %v1307
      %v1309 = vpop.f32.mrb[0].mxu0
      %1310 = vmatprep.mubr.f32.mxu0 0.0
      %1311 = vmatmul.mubr.f32.gmra.mrb[0].mxu0 %v1131
      %v1312 = vpop.f32.mrb[0].mxu0
      %v1313 = vadd.f32 %v1234, %v1312
      %v1314 = vpop.f32.mrb[0].mxu0
      %1315 = vmatprep.mubr.f32.mxu0 0.0
      %1316 = vmatmul.mubr.f32.gmra.mrb[0].mxu0 %v1134
      %v1317 = vpop.f32.mrb[0].mxu0
      %v1318 = vadd.f32 %v1234, %v1317
      %v1319 = vpop.f32.mrb[0].mxu0
      %1320 = vdwg.mxu0
      %v1321 = vld [vmem:[%s944] sm:$0xff]
      %v1322 = vld [vmem:[%s944 + $0x8] sm:$0xff]
      %v1323 = vld [vmem:[%s944 + $0x10] sm:$0xff]
      %v1324 = vld [vmem:[%s944 + $0x18] sm:$0xff]
      %v1325 = vld [vmem:[%s953] sm:$0x1]
      %v1327 = vlaneseq
      %v1328 = vshrl.u32 %v1327, 7
      %v1329 = vsub.s32 0, %v1328
      %v1330 = vrot.slane %v1325, %v1329
      %1332 = vmatprep.subr.mxu0 0.0
      %1333 = vmatpush1.msra.mxu0 %v1321
      %1334 = vmatprep.subr.mxu0 0.0
      %1335 = vmatpush1.msra.mxu0 %v1322
      %1336 = vmatprep.subr.mxu0 0.0
      %1337 = vmatpush1.msra.mxu0 %v1323
      %1338 = vmatprep.subr.mxu0 0.0
      %1339 = vmatpush1.msra.mxu0 %v1324
      %1340 = vmatprep.subr.mxu0 0.0
      %1341 = vmatpush1.msra.mxu0 0.0
      %1342 = vmatprep.subr.mxu0 0.0
      %1343 = vmatpush1.msra.mxu0 0.0
      %1344 = vmatprep.subr.mxu0 0.0
      %1345 = vmatpush1.msra.mxu0 0.0
      %1346 = vmatprep.subr.mxu0 0.0
      %1347 = vmatpush1.msra.mxu0 0.0
      %1348 = vmatprep.subr.mxu0 0.0
      %1349 = vmatpush1.msra.mxu0 0.0
      %1350 = vmatprep.subr.mxu0 0.0
      %1351 = vmatpush1.msra.mxu0 0.0
      %1352 = vmatprep.subr.mxu0 0.0
      %1353 = vmatpush1.msra.mxu0 0.0
      %1354 = vmatprep.subr.mxu0 0.0
      %1355 = vmatpush1.msra.mxu0 0.0
      %1356 = vmatprep.subr.mxu0 0.0
      %1357 = vmatpush1.msra.mxu0 0.0
      %1358 = vmatprep.subr.mxu0 0.0
      %1359 = vmatpush1.msra.mxu0 0.0
      %1360 = vmatprep.subr.mxu0 0.0
      %1361 = vmatpush1.msra.mxu0 0.0
      %1362 = vmatprep.subr.mxu0 0.0
      %1363 = vmatpush1.msra.mxu0 0.0
      %1364 = vmatprep.subr.mxu0 0.0
      %1365 = vmatpush1.msra.mxu0 0.0
      %1366 = vmatprep.subr.mxu0 0.0
      %1367 = vmatpush1.msra.mxu0 0.0
      %1368 = vmatprep.subr.mxu0 0.0
      %1369 = vmatpush1.msra.mxu0 0.0
      %1370 = vmatprep.subr.mxu0 0.0
      %1371 = vmatpush1.msra.mxu0 0.0
      %1372 = vmatprep.subr.mxu0 0.0
      %1373 = vmatpush1.msra.mxu0 0.0
      %1374 = vmatprep.subr.mxu0 0.0
      %1375 = vmatpush1.msra.mxu0 0.0
      %1376 = vmatprep.subr.mxu0 0.0
      %1377 = vmatpush1.msra.mxu0 0.0
      %1378 = vmatprep.subr.mxu0 0.0
      %1379 = vmatpush1.msra.mxu0 0.0
      %1380 = vmatprep.subr.mxu0 0.0
      %1381 = vmatpush1.msra.mxu0 0.0
      %1382 = vmatprep.subr.mxu0 0.0
      %1383 = vmatpush1.msra.mxu0 0.0
      %1384 = vmatprep.subr.mxu0 0.0
      %1385 = vmatpush1.msra.mxu0 0.0
      %1386 = vmatprep.subr.mxu0 0.0
      %1387 = vmatpush1.msra.mxu0 0.0
      %1388 = vmatprep.subr.mxu0 0.0
      %1389 = vmatpush1.msra.mxu0 0.0
      %1390 = vmatprep.subr.mxu0 0.0
      %1391 = vmatpush1.msra.mxu0 0.0
      %1392 = vmatprep.subr.mxu0 0.0
      %1393 = vmatpush1.msra.mxu0 0.0
      %1394 = vmatprep.subr.mxu0 0.0
      %1395 = vmatpush1.msra.mxu0 0.0
      %1396 = vmatprep.mubr.f32.mxu0 0.0
      %1397 = vmatmul.mubr.f32.gmra.mrb[0].mxu0 %v1125
      %v1398 = vpop.f32.mrb[0].mxu0
      %v1399 = vadd.f32 %v1330, %v1398
      %v1400 = vpop.f32.mrb[0].mxu0
      %1401 = vmatprep.mubr.f32.mxu0 0.0
      %1402 = vmatmul.mubr.f32.gmra.mrb[0].mxu0 %v1128
      %v1403 = vpop.f32.mrb[0].mxu0
      %v1404 = vadd.f32 %v1330, %v1403
      %v1405 = vpop.f32.mrb[0].mxu0
      %1406 = vmatprep.mubr.f32.mxu0 0.0
      %1407 = vmatmul.mubr.f32.gmra.mrb[0].mxu0 %v1131
      %v1408 = vpop.f32.mrb[0].mxu0
      %v1409 = vadd.f32 %v1330, %v1408
      %v1410 = vpop.f32.mrb[0].mxu0
      %1411 = vmatprep.mubr.f32.mxu0 0.0
      %1412 = vmatmul.mubr.f32.gmra.mrb[0].mxu0 %v1134
      %v1413 = vpop.f32.mrb[0].mxu0
      %v1414 = vadd.f32 %v1330, %v1413
      %v1415 = vpop.f32.mrb[0].mxu0
      %1416 = vdwg.mxu0
      %v1417 = vld [vmem:[%s3] sm:$0xff]
      %v1418 = vld [vmem:[%s3 + $0x8] sm:$0xff]
      %v1419 = vld [vmem:[%s3 + $0x10] sm:$0xff]
      %v1420 = vld [vmem:[%s3 + $0x18] sm:$0xff]
      %v1421 = vld [vmem:[%s4] sm:$0xf]
      %v1422 = vmul.f32 %v1221, %v1303
      %v1423 = vmul.f32 %v1222, %v1308
      %v1425 = vsel %vm1123, %v1422, 0
      %v1428 = vsel %vm1123, %v1423, 0
      %1430 = vmatprep.subr.mxu0 0.0
      %1431 = vmatpush1.msra.mxu0 %v1417
      %1432 = vmatprep.subr.mxu0 0.0
      %1433 = vmatpush1.msra.mxu0 %v1418
      %1434 = vmatprep.subr.mxu0 0.0
      %1435 = vmatpush1.msra.mxu0 %v1419
      %1436 = vmatprep.subr.mxu0 0.0
      %1437 = vmatpush1.msra.mxu0 %v1420
      %1438 = vmatprep.subr.mxu0 0.0
      %1439 = vmatpush1.msra.mxu0 0.0
      %1440 = vmatprep.subr.mxu0 0.0
      %1441 = vmatpush1.msra.mxu0 0.0
      %1442 = vmatprep.subr.mxu0 0.0
      %1443 = vmatpush1.msra.mxu0 0.0
      %1444 = vmatprep.subr.mxu0 0.0
      %1445 = vmatpush1.msra.mxu0 0.0
      %1446 = vmatprep.subr.mxu0 0.0
      %1447 = vmatpush1.msra.mxu0 0.0
      %1448 = vmatprep.subr.mxu0 0.0
      %1449 = vmatpush1.msra.mxu0 0.0
      %1450 = vmatprep.subr.mxu0 0.0
      %1451 = vmatpush1.msra.mxu0 0.0
      %1452 = vmatprep.subr.mxu0 0.0
      %1453 = vmatpush1.msra.mxu0 0.0
      %1454 = vmatprep.subr.mxu0 0.0
      %1455 = vmatpush1.msra.mxu0 0.0
      %1456 = vmatprep.subr.mxu0 0.0
      %1457 = vmatpush1.msra.mxu0 0.0
      %1458 = vmatprep.subr.mxu0 0.0
      %1459 = vmatpush1.msra.mxu0 0.0
      %1460 = vmatprep.subr.mxu0 0.0
      %1461 = vmatpush1.msra.mxu0 0.0
      %1462 = vmatprep.subr.mxu0 0.0
      %1463 = vmatpush1.msra.mxu0 0.0
      %1464 = vmatprep.subr.mxu0 0.0
      %1465 = vmatpush1.msra.mxu0 0.0
      %1466 = vmatprep.subr.mxu0 0.0
      %1467 = vmatpush1.msra.mxu0 0.0
      %1468 = vmatprep.subr.mxu0 0.0
      %1469 = vmatpush1.msra.mxu0 0.0
      %1470 = vmatprep.subr.mxu0 0.0
      %1471 = vmatpush1.msra.mxu0 0.0
      %1472 = vmatprep.subr.mxu0 0.0
      %1473 = vmatpush1.msra.mxu0 0.0
      %1474 = vmatprep.subr.mxu0 0.0
      %1475 = vmatpush1.msra.mxu0 0.0
      %1476 = vmatprep.subr.mxu0 0.0
      %1477 = vmatpush1.msra.mxu0 0.0
      %1478 = vmatprep.subr.mxu0 0.0
      %1479 = vmatpush1.msra.mxu0 0.0
      %1480 = vmatprep.subr.mxu0 0.0
      %1481 = vmatpush1.msra.mxu0 0.0
      %1482 = vmatprep.subr.mxu0 0.0
      %1483 = vmatpush1.msra.mxu0 0.0
      %1484 = vmatprep.subr.mxu0 0.0
      %1485 = vmatpush1.msra.mxu0 0.0
      %1486 = vmatprep.subr.mxu0 0.0
      %1487 = vmatpush1.msra.mxu0 0.0
      %1488 = vmatprep.subr.mxu0 0.0
      %1489 = vmatpush1.msra.mxu0 0.0
      %1490 = vmatprep.subr.mxu0 0.0
      %1491 = vmatpush1.msra.mxu0 0.0
      %1492 = vmatprep.subr.mxu0 0.0
      %1493 = vmatpush1.msra.mxu0 0.0
      %1494 = vmatprep.mubr.f32.mxu0 0.0
      %1495 = vmatmul.mubr.f32.gmra.mrb[0].mxu0 %v1425
      %v1496 = vpop.f32.mrb[0].mxu0
      %v1497 = vadd.f32 0.0, %v1496
      %v1498 = vpop.f32.mrb[0].mxu0
      %1499 = vmatprep.mubr.f32.mxu0 0.0
      %1500 = vmatmul.mubr.f32.gmra.mrb[0].mxu0 %v1428
      %v1501 = vpop.f32.mrb[0].mxu0
      %v1502 = vadd.f32 0.0, %v1501
      %v1503 = vpop.f32.mrb[0].mxu0
      %1504 = vdwg.mxu0
      %v1505 = vmul.f32 %v1221, %v1313
      %v1506 = vmul.f32 %v1222, %v1318
      %v1508 = vsel %vm1123, %v1505, 0
      %v1511 = vsel %vm1123, %v1506, 0
      %1513 = vmatprep.subr.mxu0 0.0
      %1514 = vmatpush1.msra.mxu0 %v1417
      %1515 = vmatprep.subr.mxu0 0.0
      %1516 = vmatpush1.msra.mxu0 %v1418
      %1517 = vmatprep.subr.mxu0 0.0
      %1518 = vmatpush1.msra.mxu0 %v1419
      %1519 = vmatprep.subr.mxu0 0.0
      %1520 = vmatpush1.msra.mxu0 %v1420
      %1521 = vmatprep.subr.mxu0 0.0
      %1522 = vmatpush1.msra.mxu0 0.0
      %1523 = vmatprep.subr.mxu0 0.0
      %1524 = vmatpush1.msra.mxu0 0.0
      %1525 = vmatprep.subr.mxu0 0.0
      %1526 = vmatpush1.msra.mxu0 0.0
      %1527 = vmatprep.subr.mxu0 0.0
      %1528 = vmatpush1.msra.mxu0 0.0
      %1529 = vmatprep.subr.mxu0 0.0
      %1530 = vmatpush1.msra.mxu0 0.0
      %1531 = vmatprep.subr.mxu0 0.0
      %1532 = vmatpush1.msra.mxu0 0.0
      %1533 = vmatprep.subr.mxu0 0.0
      %1534 = vmatpush1.msra.mxu0 0.0
      %1535 = vmatprep.subr.mxu0 0.0
      %1536 = vmatpush1.msra.mxu0 0.0
      %1537 = vmatprep.subr.mxu0 0.0
      %1538 = vmatpush1.msra.mxu0 0.0
      %1539 = vmatprep.subr.mxu0 0.0
      %1540 = vmatpush1.msra.mxu0 0.0
      %1541 = vmatprep.subr.mxu0 0.0
      %1542 = vmatpush1.msra.mxu0 0.0
      %1543 = vmatprep.subr.mxu0 0.0
      %1544 = vmatpush1.msra.mxu0 0.0
      %1545 = vmatprep.subr.mxu0 0.0
      %1546 = vmatpush1.msra.mxu0 0.0
      %1547 = vmatprep.subr.mxu0 0.0
      %1548 = vmatpush1.msra.mxu0 0.0
      %1549 = vmatprep.subr.mxu0 0.0
      %1550 = vmatpush1.msra.mxu0 0.0
      %1551 = vmatprep.subr.mxu0 0.0
      %1552 = vmatpush1.msra.mxu0 0.0
      %1553 = vmatprep.subr.mxu0 0.0
      %1554 = vmatpush1.msra.mxu0 0.0
      %1555 = vmatprep.subr.mxu0 0.0
      %1556 = vmatpush1.msra.mxu0 0.0
      %1557 = vmatprep.subr.mxu0 0.0
      %1558 = vmatpush1.msra.mxu0 0.0
      %1559 = vmatprep.subr.mxu0 0.0
      %1560 = vmatpush1.msra.mxu0 0.0
      %1561 = vmatprep.subr.mxu0 0.0
      %1562 = vmatpush1.msra.mxu0 0.0
      %1563 = vmatprep.subr.mxu0 0.0
      %1564 = vmatpush1.msra.mxu0 0.0
      %1565 = vmatprep.subr.mxu0 0.0
      %1566 = vmatpush1.msra.mxu0 0.0
      %1567 = vmatprep.subr.mxu0 0.0
      %1568 = vmatpush1.msra.mxu0 0.0
      %1569 = vmatprep.subr.mxu0 0.0
      %1570 = vmatpush1.msra.mxu0 0.0
      %1571 = vmatprep.subr.mxu0 0.0
      %1572 = vmatpush1.msra.mxu0 0.0
      %1573 = vmatprep.subr.mxu0 0.0
      %1574 = vmatpush1.msra.mxu0 0.0
      %1575 = vmatprep.subr.mxu0 0.0
      %1576 = vmatpush1.msra.mxu0 0.0
      %1577 = vmatprep.mubr.f32.mxu0 0.0
      %1578 = vmatmul.mubr.f32.gmra.mrb[0].mxu0 %v1508
      %v1579 = vpop.f32.mrb[0].mxu0
      %v1580 = vadd.f32 0.0, %v1579
      %v1581 = vpop.f32.mrb[0].mxu0
      %1582 = vmatprep.mubr.f32.mxu0 0.0
      %1583 = vmatmul.mubr.f32.gmra.mrb[0].mxu0 %v1511
      %v1584 = vpop.f32.mrb[0].mxu0
      %v1585 = vadd.f32 0.0, %v1584
      %v1586 = vpop.f32.mrb[0].mxu0
      %1587 = vdwg.mxu0
      %v1588 = vmax.f32 %v1497, %v1580
      %v1589 = vmax.f32 %v1502, %v1585
      %v1590 = vsub.f32 %v1497, %v1588
      %v1591 = vsub.f32 %v1502, %v1589
      %v1592 = vmul.f32 %v1590, 1.442695
      %v1593 = vpow.pop %v1592
      %v1594 = vmul.f32 %v1591, 1.442695
      %v1595 = vpow.pop %v1594
      %v1596 = vsub.f32 %v1580, %v1588
      %v1597 = vsub.f32 %v1585, %v1589
      %v1598 = vmul.f32 %v1596, 1.442695
      %v1599 = vpow.pop %v1598
      %v1600 = vmul.f32 %v1597, 1.442695
      %v1601 = vpow.pop %v1600
      %v1602 = vadd.f32 %v1593, %v1599
      %v1603 = vadd.f32 %v1595, %v1601
      %v1604 = vrcp.pop %v1602
      %v1605 = vrcp.pop %v1603
      %v1606 = vmul.f32 %v1593, %v1604
      %v1607 = vmul.f32 %v1595, %v1605
      %vm1608 = vcmask 31744
      %v1610 = vsel %vm1608, %v1606, 0
      %v1613 = vsel %vm1608, %v1607, 0
      %vm1615 = vcmask 1043456
      %v1617 = vsel %vm1615, %v1421, 0
      %1619 = vmatprep.subr.mxu0 0.0
      %1620 = vmatpush1.msra.mxu0 %v1617
      %1621 = vmatprep.subr.mxu0 0.0
      %1622 = vmatpush1.msra.mxu0 0.0
      %1623 = vmatprep.subr.mxu0 0.0
      %1624 = vmatpush1.msra.mxu0 0.0
      %1625 = vmatprep.subr.mxu0 0.0
      %1626 = vmatpush1.msra.mxu0 0.0
      %1627 = vmatprep.subr.mxu0 0.0
      %1628 = vmatpush1.msra.mxu0 0.0
      %1629 = vmatprep.subr.mxu0 0.0
      %1630 = vmatpush1.msra.mxu0 0.0
      %1631 = vmatprep.subr.mxu0 0.0
      %1632 = vmatpush1.msra.mxu0 0.0
      %1633 = vmatprep.subr.mxu0 0.0
      %1634 = vmatpush1.msra.mxu0 0.0
      %1635 = vmatprep.subr.mxu0 0.0
      %1636 = vmatpush1.msra.mxu0 0.0
      %1637 = vmatprep.subr.mxu0 0.0
      %1638 = vmatpush1.msra.mxu0 0.0
      %1639 = vmatprep.subr.mxu0 0.0
      %1640 = vmatpush1.msra.mxu0 0.0
      %1641 = vmatprep.subr.mxu0 0.0
      %1642 = vmatpush1.msra.mxu0 0.0
      %1643 = vmatprep.subr.mxu0 0.0
      %1644 = vmatpush1.msra.mxu0 0.0
      %1645 = vmatprep.subr.mxu0 0.0
      %1646 = vmatpush1.msra.mxu0 0.0
      %1647 = vmatprep.subr.mxu0 0.0
      %1648 = vmatpush1.msra.mxu0 0.0
      %1649 = vmatprep.subr.mxu0 0.0
      %1650 = vmatpush1.msra.mxu0 0.0
      %1651 = vmatprep.subr.mxu0 0.0
      %1652 = vmatpush1.msra.mxu0 0.0
      %1653 = vmatprep.subr.mxu0 0.0
      %1654 = vmatpush1.msra.mxu0 0.0
      %1655 = vmatprep.subr.mxu0 0.0
      %1656 = vmatpush1.msra.mxu0 0.0
      %1657 = vmatprep.subr.mxu0 0.0
      %1658 = vmatpush1.msra.mxu0 0.0
      %1659 = vmatprep.subr.mxu0 0.0
      %1660 = vmatpush1.msra.mxu0 0.0
      %1661 = vmatprep.subr.mxu0 0.0
      %1662 = vmatpush1.msra.mxu0 0.0
      %1663 = vmatprep.subr.mxu0 0.0
      %1664 = vmatpush1.msra.mxu0 0.0
      %1665 = vmatprep.subr.mxu0 0.0
      %1666 = vmatpush1.msra.mxu0 0.0
      %1667 = vmatprep.subr.mxu0 0.0
      %1668 = vmatpush1.msra.mxu0 0.0
      %1669 = vmatprep.subr.mxu0 0.0
      %1670 = vmatpush1.msra.mxu0 0.0
      %1671 = vmatprep.subr.mxu0 0.0
      %1672 = vmatpush1.msra.mxu0 0.0
      %1673 = vmatprep.subr.mxu0 0.0
      %1674 = vmatpush1.msra.mxu0 0.0
      %1675 = vmatprep.subr.mxu0 0.0
      %1676 = vmatpush1.msra.mxu0 0.0
      %1677 = vmatprep.subr.mxu0 0.0
      %1678 = vmatpush1.msra.mxu0 0.0
      %1679 = vmatprep.subr.mxu0 0.0
      %1680 = vmatpush1.msra.mxu0 0.0
      %1681 = vmatprep.subr.mxu0 0.0
      %1682 = vmatpush1.msra.mxu0 0.0
      %1683 = vmatprep.mubr.f32.mxu0 0.0
      %1684 = vmatmul.mubr.f32.gmra.mrb[0].mxu0 %v1610
      %v1685 = vpop.f32.mrb[0].mxu0
      %v1686 = vadd.f32 0.0, %v1685
      %v1687 = vpop.f32.mrb[0].mxu0
      %1688 = vmatprep.mubr.f32.mxu0 0.0
      %1689 = vmatmul.mubr.f32.gmra.mrb[0].mxu0 %v1613
      %v1690 = vpop.f32.mrb[0].mxu0
      %v1691 = vadd.f32 0.0, %v1690
      %v1692 = vpop.f32.mrb[0].mxu0
      %1693 = vdwg.mxu0
      %v1694 = vmul.f32 %v1686, %v1399
      %v1695 = vmul.f32 %v1691, %v1404
      %v1696 = vmul.f32 %v1599, %v1604
      %v1697 = vmul.f32 %v1601, %v1605
      %v1699 = vsel %vm1608, %v1696, 0
      %v1702 = vsel %vm1608, %v1697, 0
      %1704 = vmatprep.subr.mxu0 0.0
      %1705 = vmatpush1.msra.mxu0 %v1617
      %1706 = vmatprep.subr.mxu0 0.0
      %1707 = vmatpush1.msra.mxu0 0.0
      %1708 = vmatprep.subr.mxu0 0.0
      %1709 = vmatpush1.msra.mxu0 0.0
      %1710 = vmatprep.subr.mxu0 0.0
      %1711 = vmatpush1.msra.mxu0 0.0
      %1712 = vmatprep.subr.mxu0 0.0
      %1713 = vmatpush1.msra.mxu0 0.0
      %1714 = vmatprep.subr.mxu0 0.0
      %1715 = vmatpush1.msra.mxu0 0.0
      %1716 = vmatprep.subr.mxu0 0.0
      %1717 = vmatpush1.msra.mxu0 0.0
      %1718 = vmatprep.subr.mxu0 0.0
      %1719 = vmatpush1.msra.mxu0 0.0
      %1720 = vmatprep.subr.mxu0 0.0
      %1721 = vmatpush1.msra.mxu0 0.0
      %1722 = vmatprep.subr.mxu0 0.0
      %1723 = vmatpush1.msra.mxu0 0.0
      %1724 = vmatprep.subr.mxu0 0.0
      %1725 = vmatpush1.msra.mxu0 0.0
      %1726 = vmatprep.subr.mxu0 0.0
      %1727 = vmatpush1.msra.mxu0 0.0
      %1728 = vmatprep.subr.mxu0 0.0
      %1729 = vmatpush1.msra.mxu0 0.0
      %1730 = vmatprep.subr.mxu0 0.0
      %1731 = vmatpush1.msra.mxu0 0.0
      %1732 = vmatprep.subr.mxu0 0.0
      %1733 = vmatpush1.msra.mxu0 0.0
      %1734 = vmatprep.subr.mxu0 0.0
      %1735 = vmatpush1.msra.mxu0 0.0
      %1736 = vmatprep.subr.mxu0 0.0
      %1737 = vmatpush1.msra.mxu0 0.0
      %1738 = vmatprep.subr.mxu0 0.0
      %1739 = vmatpush1.msra.mxu0 0.0
      %1740 = vmatprep.subr.mxu0 0.0
      %1741 = vmatpush1.msra.mxu0 0.0
      %1742 = vmatprep.subr.mxu0 0.0
      %1743 = vmatpush1.msra.mxu0 0.0
      %1744 = vmatprep.subr.mxu0 0.0
      %1745 = vmatpush1.msra.mxu0 0.0
      %1746 = vmatprep.subr.mxu0 0.0
      %1747 = vmatpush1.msra.mxu0 0.0
      %1748 = vmatprep.subr.mxu0 0.0
      %1749 = vmatpush1.msra.mxu0 0.0
      %1750 = vmatprep.subr.mxu0 0.0
      %1751 = vmatpush1.msra.mxu0 0.0
      %1752 = vmatprep.subr.mxu0 0.0
      %1753 = vmatpush1.msra.mxu0 0.0
      %1754 = vmatprep.subr.mxu0 0.0
      %1755 = vmatpush1.msra.mxu0 0.0
      %1756 = vmatprep.subr.mxu0 0.0
      %1757 = vmatpush1.msra.mxu0 0.0
      %1758 = vmatprep.subr.mxu0 0.0
      %1759 = vmatpush1.msra.mxu0 0.0
      %1760 = vmatprep.subr.mxu0 0.0
      %1761 = vmatpush1.msra.mxu0 0.0
      %1762 = vmatprep.subr.mxu0 0.0
      %1763 = vmatpush1.msra.mxu0 0.0
      %1764 = vmatprep.subr.mxu0 0.0
      %1765 = vmatpush1.msra.mxu0 0.0
      %1766 = vmatprep.subr.mxu0 0.0
      %1767 = vmatpush1.msra.mxu0 0.0
      %1768 = vmatprep.mubr.f32.mxu0 0.0
      %1769 = vmatmul.mubr.f32.gmra.mrb[0].mxu0 %v1699
      %v1770 = vpop.f32.mrb[0].mxu0
      %v1771 = vadd.f32 0.0, %v1770
      %v1772 = vpop.f32.mrb[0].mxu0
      %1773 = vmatprep.mubr.f32.mxu0 0.0
      %1774 = vmatmul.mubr.f32.gmra.mrb[0].mxu0 %v1702
      %v1775 = vpop.f32.mrb[0].mxu0
      %v1776 = vadd.f32 0.0, %v1775
      %v1777 = vpop.f32.mrb[0].mxu0
      %1778 = vdwg.mxu0
      %v1779 = vmul.f32 %v1771, %v1409
      %v1780 = vmul.f32 %v1776, %v1414
      %v1781 = vadd.f32 %v1694, %v1779
      %v1782 = vadd.f32 %v1695, %v1780
      %v1783 = vmul.f32 %v1223, %v1303
      %v1784 = vmul.f32 %v1224, %v1308
      %v1786 = vsel %vm1123, %v1783, 0
      %v1789 = vsel %vm1123, %v1784, 0
      %1791 = vmatprep.subr.mxu0 0.0
      %1792 = vmatpush1.msra.mxu0 %v1417
      %1793 = vmatprep.subr.mxu0 0.0
      %1794 = vmatpush1.msra.mxu0 %v1418
      %1795 = vmatprep.subr.mxu0 0.0
      %1796 = vmatpush1.msra.mxu0 %v1419
      %1797 = vmatprep.subr.mxu0 0.0
      %1798 = vmatpush1.msra.mxu0 %v1420
      %1799 = vmatprep.subr.mxu0 0.0
      %1800 = vmatpush1.msra.mxu0 0.0
      %1801 = vmatprep.subr.mxu0 0.0
      %1802 = vmatpush1.msra.mxu0 0.0
      %1803 = vmatprep.subr.mxu0 0.0
      %1804 = vmatpush1.msra.mxu0 0.0
      %1805 = vmatprep.subr.mxu0 0.0
      %1806 = vmatpush1.msra.mxu0 0.0
      %1807 = vmatprep.subr.mxu0 0.0
      %1808 = vmatpush1.msra.mxu0 0.0
      %1809 = vmatprep.subr.mxu0 0.0
      %1810 = vmatpush1.msra.mxu0 0.0
      %1811 = vmatprep.subr.mxu0 0.0
      %1812 = vmatpush1.msra.mxu0 0.0
      %1813 = vmatprep.subr.mxu0 0.0
      %1814 = vmatpush1.msra.mxu0 0.0
      %1815 = vmatprep.subr.mxu0 0.0
      %1816 = vmatpush1.msra.mxu0 0.0
      %1817 = vmatprep.subr.mxu0 0.0
      %1818 = vmatpush1.msra.mxu0 0.0
      %1819 = vmatprep.subr.mxu0 0.0
      %1820 = vmatpush1.msra.mxu0 0.0
      %1821 = vmatprep.subr.mxu0 0.0
      %1822 = vmatpush1.msra.mxu0 0.0
      %1823 = vmatprep.subr.mxu0 0.0
      %1824 = vmatpush1.msra.mxu0 0.0
      %1825 = vmatprep.subr.mxu0 0.0
      %1826 = vmatpush1.msra.mxu0 0.0
      %1827 = vmatprep.subr.mxu0 0.0
      %1828 = vmatpush1.msra.mxu0 0.0
      %1829 = vmatprep.subr.mxu0 0.0
      %1830 = vmatpush1.msra.mxu0 0.0
      %1831 = vmatprep.subr.mxu0 0.0
      %1832 = vmatpush1.msra.mxu0 0.0
      %1833 = vmatprep.subr.mxu0 0.0
      %1834 = vmatpush1.msra.mxu0 0.0
      %1835 = vmatprep.subr.mxu0 0.0
      %1836 = vmatpush1.msra.mxu0 0.0
      %1837 = vmatprep.subr.mxu0 0.0
      %1838 = vmatpush1.msra.mxu0 0.0
      %1839 = vmatprep.subr.mxu0 0.0
      %1840 = vmatpush1.msra.mxu0 0.0
      %1841 = vmatprep.subr.mxu0 0.0
      %1842 = vmatpush1.msra.mxu0 0.0
      %1843 = vmatprep.subr.mxu0 0.0
      %1844 = vmatpush1.msra.mxu0 0.0
      %1845 = vmatprep.subr.mxu0 0.0
      %1846 = vmatpush1.msra.mxu0 0.0
      %1847 = vmatprep.subr.mxu0 0.0
      %1848 = vmatpush1.msra.mxu0 0.0
      %1849 = vmatprep.subr.mxu0 0.0
      %1850 = vmatpush1.msra.mxu0 0.0
      %1851 = vmatprep.subr.mxu0 0.0
      %1852 = vmatpush1.msra.mxu0 0.0
      %1853 = vmatprep.subr.mxu0 0.0
      %1854 = vmatpush1.msra.mxu0 0.0
      %1855 = vmatprep.mubr.f32.mxu0 0.0
      %1856 = vmatmul.mubr.f32.gmra.mrb[0].mxu0 %v1786
      %v1857 = vpop.f32.mrb[0].mxu0
      %v1858 = vadd.f32 0.0, %v1857
      %v1859 = vpop.f32.mrb[0].mxu0
      %1860 = vmatprep.mubr.f32.mxu0 0.0
      %1861 = vmatmul.mubr.f32.gmra.mrb[0].mxu0 %v1789
      %v1862 = vpop.f32.mrb[0].mxu0
      %v1863 = vadd.f32 0.0, %v1862
      %v1864 = vpop.f32.mrb[0].mxu0
      %1865 = vdwg.mxu0
      %v1866 = vmul.f32 %v1223, %v1313
      %v1867 = vmul.f32 %v1224, %v1318
      %v1869 = vsel %vm1123, %v1866, 0
      %v1872 = vsel %vm1123, %v1867, 0
      %1874 = vmatprep.subr.mxu0 0.0
      %1875 = vmatpush1.msra.mxu0 %v1417
      %1876 = vmatprep.subr.mxu0 0.0
      %1877 = vmatpush1.msra.mxu0 %v1418
      %1878 = vmatprep.subr.mxu0 0.0
      %1879 = vmatpush1.msra.mxu0 %v1419
      %1880 = vmatprep.subr.mxu0 0.0
      %1881 = vmatpush1.msra.mxu0 %v1420
      %1882 = vmatprep.subr.mxu0 0.0
      %1883 = vmatpush1.msra.mxu0 0.0
      %1884 = vmatprep.subr.mxu0 0.0
      %1885 = vmatpush1.msra.mxu0 0.0
      %1886 = vmatprep.subr.mxu0 0.0
      %1887 = vmatpush1.msra.mxu0 0.0
      %1888 = vmatprep.subr.mxu0 0.0
      %1889 = vmatpush1.msra.mxu0 0.0
      %1890 = vmatprep.subr.mxu0 0.0
      %1891 = vmatpush1.msra.mxu0 0.0
      %1892 = vmatprep.subr.mxu0 0.0
      %1893 = vmatpush1.msra.mxu0 0.0
      %1894 = vmatprep.subr.mxu0 0.0
      %1895 = vmatpush1.msra.mxu0 0.0
      %1896 = vmatprep.subr.mxu0 0.0
      %1897 = vmatpush1.msra.mxu0 0.0
      %1898 = vmatprep.subr.mxu0 0.0
      %1899 = vmatpush1.msra.mxu0 0.0
      %1900 = vmatprep.subr.mxu0 0.0
      %1901 = vmatpush1.msra.mxu0 0.0
      %1902 = vmatprep.subr.mxu0 0.0
      %1903 = vmatpush1.msra.mxu0 0.0
      %1904 = vmatprep.subr.mxu0 0.0
      %1905 = vmatpush1.msra.mxu0 0.0
      %1906 = vmatprep.subr.mxu0 0.0
      %1907 = vmatpush1.msra.mxu0 0.0
      %1908 = vmatprep.subr.mxu0 0.0
      %1909 = vmatpush1.msra.mxu0 0.0
      %1910 = vmatprep.subr.mxu0 0.0
      %1911 = vmatpush1.msra.mxu0 0.0
      %1912 = vmatprep.subr.mxu0 0.0
      %1913 = vmatpush1.msra.mxu0 0.0
      %1914 = vmatprep.subr.mxu0 0.0
      %1915 = vmatpush1.msra.mxu0 0.0
      %1916 = vmatprep.subr.mxu0 0.0
      %1917 = vmatpush1.msra.mxu0 0.0
      %1918 = vmatprep.subr.mxu0 0.0
      %1919 = vmatpush1.msra.mxu0 0.0
      %1920 = vmatprep.subr.mxu0 0.0
      %1921 = vmatpush1.msra.mxu0 0.0
      %1922 = vmatprep.subr.mxu0 0.0
      %1923 = vmatpush1.msra.mxu0 0.0
      %1924 = vmatprep.subr.mxu0 0.0
      %1925 = vmatpush1.msra.mxu0 0.0
      %1926 = vmatprep.subr.mxu0 0.0
      %1927 = vmatpush1.msra.mxu0 0.0
      %1928 = vmatprep.subr.mxu0 0.0
      %1929 = vmatpush1.msra.mxu0 0.0
      %1930 = vmatprep.subr.mxu0 0.0
      %1931 = vmatpush1.msra.mxu0 0.0
      %1932 = vmatprep.subr.mxu0 0.0
      %1933 = vmatpush1.msra.mxu0 0.0
      %1934 = vmatprep.subr.mxu0 0.0
      %1935 = vmatpush1.msra.mxu0 0.0
      %1936 = vmatprep.subr.mxu0 0.0
      %1937 = vmatpush1.msra.mxu0 0.0
      %1938 = vmatprep.mubr.f32.mxu0 0.0
      %1939 = vmatmul.mubr.f32.gmra.mrb[0].mxu0 %v1869
      %v1940 = vpop.f32.mrb[0].mxu0
      %v1941 = vadd.f32 0.0, %v1940
      %v1942 = vpop.f32.mrb[0].mxu0
      %1943 = vmatprep.mubr.f32.mxu0 0.0
      %1944 = vmatmul.mubr.f32.gmra.mrb[0].mxu0 %v1872
      %v1945 = vpop.f32.mrb[0].mxu0
      %v1946 = vadd.f32 0.0, %v1945
      %v1947 = vpop.f32.mrb[0].mxu0
      %1948 = vdwg.mxu0
      %v1949 = vmax.f32 %v1858, %v1941
      %v1950 = vmax.f32 %v1863, %v1946
      %v1951 = vsub.f32 %v1858, %v1949
      %v1952 = vsub.f32 %v1863, %v1950
      %v1953 = vmul.f32 %v1951, 1.442695
      %v1954 = vpow.pop %v1953
      %v1955 = vmul.f32 %v1952, 1.442695
      %v1956 = vpow.pop %v1955
      %v1957 = vsub.f32 %v1941, %v1949
      %v1958 = vsub.f32 %v1946, %v1950
      %v1959 = vmul.f32 %v1957, 1.442695
      %v1960 = vpow.pop %v1959
      %v1961 = vmul.f32 %v1958, 1.442695
      %v1962 = vpow.pop %v1961
      %v1963 = vadd.f32 %v1954, %v1960
      %v1964 = vadd.f32 %v1956, %v1962
      %v1965 = vrcp.pop %v1963
      %v1966 = vrcp.pop %v1964
      %v1967 = vmul.f32 %v1954, %v1965
      %v1968 = vmul.f32 %v1956, %v1966
      %v1970 = vsel %vm1608, %v1967, 0
      %v1973 = vsel %vm1608, %v1968, 0
      %1975 = vmatprep.subr.mxu0 0.0
      %1976 = vmatpush1.msra.mxu0 %v1617
      %1977 = vmatprep.subr.mxu0 0.0
      %1978 = vmatpush1.msra.mxu0 0.0
      %1979 = vmatprep.subr.mxu0 0.0
      %1980 = vmatpush1.msra.mxu0 0.0
      %1981 = vmatprep.subr.mxu0 0.0
      %1982 = vmatpush1.msra.mxu0 0.0
      %1983 = vmatprep.subr.mxu0 0.0
      %1984 = vmatpush1.msra.mxu0 0.0
      %1985 = vmatprep.subr.mxu0 0.0
      %1986 = vmatpush1.msra.mxu0 0.0
      %1987 = vmatprep.subr.mxu0 0.0
      %1988 = vmatpush1.msra.mxu0 0.0
      %1989 = vmatprep.subr.mxu0 0.0
      %1990 = vmatpush1.msra.mxu0 0.0
      %1991 = vmatprep.subr.mxu0 0.0
      %1992 = vmatpush1.msra.mxu0 0.0
      %1993 = vmatprep.subr.mxu0 0.0
      %1994 = vmatpush1.msra.mxu0 0.0
      %1995 = vmatprep.subr.mxu0 0.0
      %1996 = vmatpush1.msra.mxu0 0.0
      %1997 = vmatprep.subr.mxu0 0.0
      %1998 = vmatpush1.msra.mxu0 0.0
      %1999 = vmatprep.subr.mxu0 0.0
      %2000 = vmatpush1.msra.mxu0 0.0
      %2001 = vmatprep.subr.mxu0 0.0
      %2002 = vmatpush1.msra.mxu0 0.0
      %2003 = vmatprep.subr.mxu0 0.0
      %2004 = vmatpush1.msra.mxu0 0.0
      %2005 = vmatprep.subr.mxu0 0.0
      %2006 = vmatpush1.msra.mxu0 0.0
      %2007 = vmatprep.subr.mxu0 0.0
      %2008 = vmatpush1.msra.mxu0 0.0
      %2009 = vmatprep.subr.mxu0 0.0
      %2010 = vmatpush1.msra.mxu0 0.0
      %2011 = vmatprep.subr.mxu0 0.0
      %2012 = vmatpush1.msra.mxu0 0.0
      %2013 = vmatprep.subr.mxu0 0.0
      %2014 = vmatpush1.msra.mxu0 0.0
      %2015 = vmatprep.subr.mxu0 0.0
      %2016 = vmatpush1.msra.mxu0 0.0
      %2017 = vmatprep.subr.mxu0 0.0
      %2018 = vmatpush1.msra.mxu0 0.0
      %2019 = vmatprep.subr.mxu0 0.0
      %2020 = vmatpush1.msra.mxu0 0.0
      %2021 = vmatprep.subr.mxu0 0.0
      %2022 = vmatpush1.msra.mxu0 0.0
      %2023 = vmatprep.subr.mxu0 0.0
      %2024 = vmatpush1.msra.mxu0 0.0
      %2025 = vmatprep.subr.mxu0 0.0
      %2026 = vmatpush1.msra.mxu0 0.0
      %2027 = vmatprep.subr.mxu0 0.0
      %2028 = vmatpush1.msra.mxu0 0.0
      %2029 = vmatprep.subr.mxu0 0.0
      %2030 = vmatpush1.msra.mxu0 0.0
      %2031 = vmatprep.subr.mxu0 0.0
      %2032 = vmatpush1.msra.mxu0 0.0
      %2033 = vmatprep.subr.mxu0 0.0
      %2034 = vmatpush1.msra.mxu0 0.0
      %2035 = vmatprep.subr.mxu0 0.0
      %2036 = vmatpush1.msra.mxu0 0.0
      %2037 = vmatprep.subr.mxu0 0.0
      %2038 = vmatpush1.msra.mxu0 0.0
      %2039 = vmatprep.mubr.f32.mxu0 0.0
      %2040 = vmatmul.mubr.f32.gmra.mrb[0].mxu0 %v1970
      %v2041 = vpop.f32.mrb[0].mxu0
      %v2042 = vadd.f32 0.0, %v2041
      %v2043 = vpop.f32.mrb[0].mxu0
      %2044 = vmatprep.mubr.f32.mxu0 0.0
      %2045 = vmatmul.mubr.f32.gmra.mrb[0].mxu0 %v1973
      %v2046 = vpop.f32.mrb[0].mxu0
      %v2047 = vadd.f32 0.0, %v2046
      %v2048 = vpop.f32.mrb[0].mxu0
      %2049 = vdwg.mxu0
      %v2050 = vmul.f32 %v2042, %v1399
      %v2051 = vmul.f32 %v2047, %v1404
      %v2052 = vmul.f32 %v1960, %v1965
      %v2053 = vmul.f32 %v1962, %v1966
      %v2055 = vsel %vm1608, %v2052, 0
      %v2058 = vsel %vm1608, %v2053, 0
      %2060 = vmatprep.subr.mxu0 0.0
      %2061 = vmatpush1.msra.mxu0 %v1617
      %2062 = vmatprep.subr.mxu0 0.0
      %2063 = vmatpush1.msra.mxu0 0.0
      %2064 = vmatprep.subr.mxu0 0.0
      %2065 = vmatpush1.msra.mxu0 0.0
      %2066 = vmatprep.subr.mxu0 0.0
      %2067 = vmatpush1.msra.mxu0 0.0
      %2068 = vmatprep.subr.mxu0 0.0
      %2069 = vmatpush1.msra.mxu0 0.0
      %2070 = vmatprep.subr.mxu0 0.0
      %2071 = vmatpush1.msra.mxu0 0.0
      %2072 = vmatprep.subr.mxu0 0.0
      %2073 = vmatpush1.msra.mxu0 0.0
      %2074 = vmatprep.subr.mxu0 0.0
      %2075 = vmatpush1.msra.mxu0 0.0
      %2076 = vmatprep.subr.mxu0 0.0
      %2077 = vmatpush1.msra.mxu0 0.0
      %2078 = vmatprep.subr.mxu0 0.0
      %2079 = vmatpush1.msra.mxu0 0.0
      %2080 = vmatprep.subr.mxu0 0.0
      %2081 = vmatpush1.msra.mxu0 0.0
      %2082 = vmatprep.subr.mxu0 0.0
      %2083 = vmatpush1.msra.mxu0 0.0
      %2084 = vmatprep.subr.mxu0 0.0
      %2085 = vmatpush1.msra.mxu0 0.0
      %2086 = vmatprep.subr.mxu0 0.0
      %2087 = vmatpush1.msra.mxu0 0.0
      %2088 = vmatprep.subr.mxu0 0.0
      %2089 = vmatpush1.msra.mxu0 0.0
      %2090 = vmatprep.subr.mxu0 0.0
      %2091 = vmatpush1.msra.mxu0 0.0
      %2092 = vmatprep.subr.mxu0 0.0
      %2093 = vmatpush1.msra.mxu0 0.0
      %2094 = vmatprep.subr.mxu0 0.0
      %2095 = vmatpush1.msra.mxu0 0.0
      %2096 = vmatprep.subr.mxu0 0.0
      %2097 = vmatpush1.msra.mxu0 0.0
      %2098 = vmatprep.subr.mxu0 0.0
      %2099 = vmatpush1.msra.mxu0 0.0
      %2100 = vmatprep.subr.mxu0 0.0
      %2101 = vmatpush1.msra.mxu0 0.0
      %2102 = vmatprep.subr.mxu0 0.0
      %2103 = vmatpush1.msra.mxu0 0.0
      %2104 = vmatprep.subr.mxu0 0.0
      %2105 = vmatpush1.msra.mxu0 0.0
      %2106 = vmatprep.subr.mxu0 0.0
      %2107 = vmatpush1.msra.mxu0 0.0
      %2108 = vmatprep.subr.mxu0 0.0
      %2109 = vmatpush1.msra.mxu0 0.0
      %2110 = vmatprep.subr.mxu0 0.0
      %2111 = vmatpush1.msra.mxu0 0.0
      %2112 = vmatprep.subr.mxu0 0.0
      %2113 = vmatpush1.msra.mxu0 0.0
      %2114 = vmatprep.subr.mxu0 0.0
      %2115 = vmatpush1.msra.mxu0 0.0
      %2116 = vmatprep.subr.mxu0 0.0
      %2117 = vmatpush1.msra.mxu0 0.0
      %2118 = vmatprep.subr.mxu0 0.0
      %2119 = vmatpush1.msra.mxu0 0.0
      %2120 = vmatprep.subr.mxu0 0.0
      %2121 = vmatpush1.msra.mxu0 0.0
      %2122 = vmatprep.subr.mxu0 0.0
      %2123 = vmatpush1.msra.mxu0 0.0
      %2124 = vmatprep.mubr.f32.mxu0 0.0
      %2125 = vmatmul.mubr.f32.gmra.mrb[0].mxu0 %v2055
      %v2126 = vpop.f32.mrb[0].mxu0
      %v2127 = vadd.f32 0.0, %v2126
      %v2128 = vpop.f32.mrb[0].mxu0
      %2129 = vmatprep.mubr.f32.mxu0 0.0
      %2130 = vmatmul.mubr.f32.gmra.mrb[0].mxu0 %v2058
      %v2131 = vpop.f32.mrb[0].mxu0
      %v2132 = vadd.f32 0.0, %v2131
      %v2133 = vpop.f32.mrb[0].mxu0
      %2134 = vdwg.mxu0
      %v2135 = vmul.f32 %v2127, %v1409
      %v2136 = vmul.f32 %v2132, %v1414
      %v2137 = vadd.f32 %v2050, %v2135
      %v2138 = vadd.f32 %v2051, %v2136
      %v2139 = vld [vmem:[%s958] sm:$0xff]
      %v2140 = vld [vmem:[%s958 + $0x8] sm:$0xff]
      %v2141 = vld [vmem:[%s958 + $0x10] sm:$0xff]
      %v2142 = vld [vmem:[%s958 + $0x18] sm:$0xff]
      %v2143 = vld [vmem:[%s961] sm:$0x1]
      %v2145 = vlaneseq
      %v2146 = vshrl.u32 %v2145, 7
      %v2147 = vsub.s32 0, %v2146
      %v2148 = vrot.slane %v2143, %v2147
      %v2151 = vsel %vm1123, %v1781, 0
      %v2154 = vsel %vm1123, %v1782, 0
      %v2157 = vsel %vm1123, %v2137, 0
      %v2160 = vsel %vm1123, %v2138, 0
      %2162 = vmatprep.subr.mxu0 0.0
      %2163 = vmatpush1.msra.mxu0 %v2139
      %2164 = vmatprep.subr.mxu0 0.0
      %2165 = vmatpush1.msra.mxu0 %v2140
      %2166 = vmatprep.subr.mxu0 0.0
      %2167 = vmatpush1.msra.mxu0 %v2141
      %2168 = vmatprep.subr.mxu0 0.0
      %2169 = vmatpush1.msra.mxu0 %v2142
      %2170 = vmatprep.subr.mxu0 0.0
      %2171 = vmatpush1.msra.mxu0 0.0
      %2172 = vmatprep.subr.mxu0 0.0
      %2173 = vmatpush1.msra.mxu0 0.0
      %2174 = vmatprep.subr.mxu0 0.0
      %2175 = vmatpush1.msra.mxu0 0.0
      %2176 = vmatprep.subr.mxu0 0.0
      %2177 = vmatpush1.msra.mxu0 0.0
      %2178 = vmatprep.subr.mxu0 0.0
      %2179 = vmatpush1.msra.mxu0 0.0
      %2180 = vmatprep.subr.mxu0 0.0
      %2181 = vmatpush1.msra.mxu0 0.0
      %2182 = vmatprep.subr.mxu0 0.0
      %2183 = vmatpush1.msra.mxu0 0.0
      %2184 = vmatprep.subr.mxu0 0.0
      %2185 = vmatpush1.msra.mxu0 0.0
      %2186 = vmatprep.subr.mxu0 0.0
      %2187 = vmatpush1.msra.mxu0 0.0
      %2188 = vmatprep.subr.mxu0 0.0
      %2189 = vmatpush1.msra.mxu0 0.0
      %2190 = vmatprep.subr.mxu0 0.0
      %2191 = vmatpush1.msra.mxu0 0.0
      %2192 = vmatprep.subr.mxu0 0.0
      %2193 = vmatpush1.msra.mxu0 0.0
      %2194 = vmatprep.subr.mxu0 0.0
      %2195 = vmatpush1.msra.mxu0 0.0
      %2196 = vmatprep.subr.mxu0 0.0
      %2197 = vmatpush1.msra.mxu0 0.0
      %2198 = vmatprep.subr.mxu0 0.0
      %2199 = vmatpush1.msra.mxu0 0.0
      %2200 = vmatprep.subr.mxu0 0.0
      %2201 = vmatpush1.msra.mxu0 0.0
      %2202 = vmatprep.subr.mxu0 0.0
      %2203 = vmatpush1.msra.mxu0 0.0
      %2204 = vmatprep.subr.mxu0 0.0
      %2205 = vmatpush1.msra.mxu0 0.0
      %2206 = vmatprep.subr.mxu0 0.0
      %2207 = vmatpush1.msra.mxu0 0.0
      %2208 = vmatprep.subr.mxu0 0.0
      %2209 = vmatpush1.msra.mxu0 0.0
      %2210 = vmatprep.subr.mxu0 0.0
      %2211 = vmatpush1.msra.mxu0 0.0
      %2212 = vmatprep.subr.mxu0 0.0
      %2213 = vmatpush1.msra.mxu0 0.0
      %2214 = vmatprep.subr.mxu0 0.0
      %2215 = vmatpush1.msra.mxu0 0.0
      %2216 = vmatprep.subr.mxu0 0.0
      %2217 = vmatpush1.msra.mxu0 0.0
      %2218 = vmatprep.subr.mxu0 0.0
      %2219 = vmatpush1.msra.mxu0 0.0
      %2220 = vmatprep.subr.mxu0 0.0
      %2221 = vmatpush1.msra.mxu0 0.0
      %2222 = vmatprep.subr.mxu0 0.0
      %2223 = vmatpush1.msra.mxu0 0.0
      %2224 = vmatprep.subr.mxu0 0.0
      %2225 = vmatpush1.msra.mxu0 0.0
      %2226 = vmatprep.mubr.f32.mxu0 0.0
      %2227 = vmatmul.mubr.f32.gmra.mrb[0].mxu0 %v2151
      %v2228 = vpop.f32.mrb[0].mxu0
      %v2229 = vadd.f32 %v2148, %v2228
      %v2230 = vpop.f32.mrb[0].mxu0
      %2231 = vmatprep.mubr.f32.mxu0 0.0
      %2232 = vmatmul.mubr.f32.gmra.mrb[0].mxu0 %v2154
      %v2233 = vpop.f32.mrb[0].mxu0
      %v2234 = vadd.f32 %v2148, %v2233
      %v2235 = vpop.f32.mrb[0].mxu0
      %2236 = vmatprep.mubr.f32.mxu0 0.0
      %2237 = vmatmul.mubr.f32.gmra.mrb[0].mxu0 %v2157
      %v2238 = vpop.f32.mrb[0].mxu0
      %v2239 = vadd.f32 %v2148, %v2238
      %v2240 = vpop.f32.mrb[0].mxu0
      %2241 = vmatprep.mubr.f32.mxu0 0.0
      %2242 = vmatmul.mubr.f32.gmra.mrb[0].mxu0 %v2160
      %v2243 = vpop.f32.mrb[0].mxu0
      %v2244 = vadd.f32 %v2148, %v2243
      %v2245 = vpop.f32.mrb[0].mxu0
      %2246 = vdwg.mxu0
      %v2247 = vld [vmem:[%s964] sm:$0x1]
      %v2248 = vld [vmem:[%s967] sm:$0x1]
      %v2249 = vadd.f32 %v2229, %v1108
      %v2250 = vadd.f32 %v2234, %v1109
      %v2251 = vadd.f32 %v2239, %v1110
      %v2252 = vadd.f32 %v2244, %v1111
      %v2253 = vsel %vm1123, %v2249, 0.0
      %2254 = vadd.xlane.f32.xlu0 %v2253
      %v2255 = vpop.xlane.xlu0 %2254
      %v2256 = vsel %vm1123, %v2250, 0.0
      %2257 = vadd.xlane.f32.xlu0 %v2256
      %v2258 = vpop.xlane.xlu0 %2257
      %v2259 = vsel %vm1123, %v2251, 0.0
      %2260 = vadd.xlane.f32.xlu0 %v2259
      %v2261 = vpop.xlane.xlu0 %2260
      %v2262 = vsel %vm1123, %v2252, 0.0
      %2263 = vadd.xlane.f32.xlu0 %v2262
      %v2264 = vpop.xlane.xlu0 %2263
      %v2265 = vrcp.pop 32.0
      %v2266 = vmul.f32 %v2255, %v2265
      %v2267 = vmul.f32 %v2258, %v2265
      %v2268 = vmul.f32 %v2261, %v2265
      %v2269 = vmul.f32 %v2264, %v2265
      %v2270 = vsub.f32 %v2249, %v2266
      %v2271 = vsub.f32 %v2250, %v2267
      %v2272 = vsub.f32 %v2251, %v2268
      %v2273 = vsub.f32 %v2252, %v2269
      %v2274 = vmul.f32 %v2270, %v2270
      %v2275 = vmul.f32 %v2271, %v2271
      %v2276 = vmul.f32 %v2272, %v2272
      %v2277 = vmul.f32 %v2273, %v2273
      %v2278 = vsel %vm1123, %v2274, 0.0
      %2279 = vadd.xlane.f32.xlu0 %v2278
      %v2280 = vpop.xlane.xlu0 %2279
      %v2281 = vsel %vm1123, %v2275, 0.0
      %2282 = vadd.xlane.f32.xlu0 %v2281
      %v2283 = vpop.xlane.xlu0 %2282
      %v2284 = vsel %vm1123, %v2276, 0.0
      %2285 = vadd.xlane.f32.xlu0 %v2284
      %v2286 = vpop.xlane.xlu0 %2285
      %v2287 = vsel %vm1123, %v2277, 0.0
      %2288 = vadd.xlane.f32.xlu0 %v2287
      %v2289 = vpop.xlane.xlu0 %2288
      %v2290 = vmul.f32 %v2280, %v2265
      %v2291 = vmul.f32 %v2283, %v2265
      %v2292 = vmul.f32 %v2286, %v2265
      %v2293 = vmul.f32 %v2289, %v2265
      %v2294 = vadd.f32 %v2290, 1e-05
      %v2295 = vadd.f32 %v2291, 1e-05
      %v2296 = vadd.f32 %v2292, 1e-05
      %v2297 = vadd.f32 %v2293, 1e-05
      %v2298 = vrsqrt.pop %v2294
      %v2299 = vrsqrt.pop %v2295
      %v2300 = vrsqrt.pop %v2296
      %v2301 = vrsqrt.pop %v2297
      %v2302 = vmul.f32 %v2270, %v2298
      %v2303 = vmul.f32 %v2271, %v2299
      %v2304 = vmul.f32 %v2272, %v2300
      %v2305 = vmul.f32 %v2273, %v2301
      %v2307 = vlaneseq
      %v2308 = vshrl.u32 %v2307, 7
      %v2309 = vsub.s32 0, %v2308
      %v2310 = vrot.slane %v2247, %v2309
      %v2312 = vmul.f32 %v2302, %v2310
      %v2313 = vmul.f32 %v2303, %v2310
      %v2314 = vmul.f32 %v2304, %v2310
      %v2315 = vmul.f32 %v2305, %v2310
      %v2317 = vlaneseq
      %v2318 = vshrl.u32 %v2317, 7
      %v2319 = vsub.s32 0, %v2318
      %v2320 = vrot.slane %v2248, %v2319
      %v2322 = vadd.f32 %v2312, %v2320
      %v2323 = vadd.f32 %v2313, %v2320
      %v2324 = vadd.f32 %v2314, %v2320
      %v2325 = vadd.f32 %v2315, %v2320
      %v2326 = vld [vmem:[%s972] sm:$0xff]
      %v2327 = vld [vmem:[%s972 + $0x8] sm:$0xff]
      %v2328 = vld [vmem:[%s972 + $0x10] sm:$0xff]
      %v2329 = vld [vmem:[%s972 + $0x18] sm:$0xff]
      %v2330 = vld [vmem:[%s975] sm:$0x1]
      %v2332 = vlaneseq
      %v2333 = vshrl.u32 %v2332, 7
      %v2334 = vsub.s32 0, %v2333
      %v2335 = vrot.slane %v2330, %v2334
      %v2338 = vsel %vm1123, %v2322, 0
      %v2341 = vsel %vm1123, %v2323, 0
      %v2344 = vsel %vm1123, %v2324, 0
      %v2347 = vsel %vm1123, %v2325, 0
      %2349 = vmatprep.subr.mxu0 0.0
      %2350 = vmatpush1.msra.mxu0 %v2326
      %2351 = vmatprep.subr.mxu0 0.0
      %2352 = vmatpush1.msra.mxu0 %v2327
      %2353 = vmatprep.subr.mxu0 0.0
      %2354 = vmatpush1.msra.mxu0 %v2328
      %2355 = vmatprep.subr.mxu0 0.0
      %2356 = vmatpush1.msra.mxu0 %v2329
      %2357 = vmatprep.subr.mxu0 0.0
      %2358 = vmatpush1.msra.mxu0 0.0
      %2359 = vmatprep.subr.mxu0 0.0
      %2360 = vmatpush1.msra.mxu0 0.0
      %2361 = vmatprep.subr.mxu0 0.0
      %2362 = vmatpush1.msra.mxu0 0.0
      %2363 = vmatprep.subr.mxu0 0.0
      %2364 = vmatpush1.msra.mxu0 0.0
      %2365 = vmatprep.subr.mxu0 0.0
      %2366 = vmatpush1.msra.mxu0 0.0
      %2367 = vmatprep.subr.mxu0 0.0
      %2368 = vmatpush1.msra.mxu0 0.0
      %2369 = vmatprep.subr.mxu0 0.0
      %2370 = vmatpush1.msra.mxu0 0.0
      %2371 = vmatprep.subr.mxu0 0.0
      %2372 = vmatpush1.msra.mxu0 0.0
      %2373 = vmatprep.subr.mxu0 0.0
      %2374 = vmatpush1.msra.mxu0 0.0
      %2375 = vmatprep.subr.mxu0 0.0
      %2376 = vmatpush1.msra.mxu0 0.0
      %2377 = vmatprep.subr.mxu0 0.0
      %2378 = vmatpush1.msra.mxu0 0.0
      %2379 = vmatprep.subr.mxu0 0.0
      %2380 = vmatpush1.msra.mxu0 0.0
      %2381 = vmatprep.subr.mxu0 0.0
      %2382 = vmatpush1.msra.mxu0 0.0
      %2383 = vmatprep.subr.mxu0 0.0
      %2384 = vmatpush1.msra.mxu0 0.0
      %2385 = vmatprep.subr.mxu0 0.0
      %2386 = vmatpush1.msra.mxu0 0.0
      %2387 = vmatprep.subr.mxu0 0.0
      %2388 = vmatpush1.msra.mxu0 0.0
      %2389 = vmatprep.subr.mxu0 0.0
      %2390 = vmatpush1.msra.mxu0 0.0
      %2391 = vmatprep.subr.mxu0 0.0
      %2392 = vmatpush1.msra.mxu0 0.0
      %2393 = vmatprep.subr.mxu0 0.0
      %2394 = vmatpush1.msra.mxu0 0.0
      %2395 = vmatprep.subr.mxu0 0.0
      %2396 = vmatpush1.msra.mxu0 0.0
      %2397 = vmatprep.subr.mxu0 0.0
      %2398 = vmatpush1.msra.mxu0 0.0
      %2399 = vmatprep.subr.mxu0 0.0
      %2400 = vmatpush1.msra.mxu0 0.0
      %2401 = vmatprep.subr.mxu0 0.0
      %2402 = vmatpush1.msra.mxu0 0.0
      %2403 = vmatprep.subr.mxu0 0.0
      %2404 = vmatpush1.msra.mxu0 0.0
      %2405 = vmatprep.subr.mxu0 0.0
      %2406 = vmatpush1.msra.mxu0 0.0
      %2407 = vmatprep.subr.mxu0 0.0
      %2408 = vmatpush1.msra.mxu0 0.0
      %2409 = vmatprep.subr.mxu0 0.0
      %2410 = vmatpush1.msra.mxu0 0.0
      %2411 = vmatprep.subr.mxu0 0.0
      %2412 = vmatpush1.msra.mxu0 0.0
      %2413 = vmatprep.mubr.f32.mxu0 0.0
      %2414 = vmatmul.mubr.f32.gmra.mrb[0].mxu0 %v2338
      %v2415 = vpop.f32.mrb[0].mxu0
      %v2416 = vadd.f32 %v2335, %v2415
      %v2417 = vpop.f32.mrb[0].mxu0
      %2418 = vmatprep.mubr.f32.mxu0 0.0
      %2419 = vmatmul.mubr.f32.gmra.mrb[0].mxu0 %v2341
      %v2420 = vpop.f32.mrb[0].mxu0
      %v2421 = vadd.f32 %v2335, %v2420
      %v2422 = vpop.f32.mrb[0].mxu0
      %2423 = vmatprep.mubr.f32.mxu0 0.0
      %2424 = vmatmul.mubr.f32.gmra.mrb[0].mxu0 %v2344
      %v2425 = vpop.f32.mrb[0].mxu0
      %v2426 = vadd.f32 %v2335, %v2425
      %v2427 = vpop.f32.mrb[0].mxu0
      %2428 = vmatprep.mubr.f32.mxu0 0.0
      %2429 = vmatmul.mubr.f32.gmra.mrb[0].mxu0 %v2347
      %v2430 = vpop.f32.mrb[0].mxu0
      %v2431 = vadd.f32 %v2335, %v2430
      %v2432 = vpop.f32.mrb[0].mxu0
      %2433 = vdwg.mxu0
      %v2434 = vmax.f32 %v2416, 0.0
      %v2435 = vmax.f32 %v2421, 0.0
      %v2436 = vmax.f32 %v2426, 0.0
      %v2437 = vmax.f32 %v2431, 0.0
      %v2438 = vld [vmem:[%s980] sm:$0xff]
      %v2439 = vld [vmem:[%s980 + $0x8] sm:$0xff]
      %v2440 = vld [vmem:[%s980 + $0x10] sm:$0xff]
      %v2441 = vld [vmem:[%s980 + $0x18] sm:$0xff]
      %v2442 = vld [vmem:[%s980 + $0x20] sm:$0xff]
      %v2443 = vld [vmem:[%s980 + $0x28] sm:$0xff]
      %v2444 = vld [vmem:[%s980 + $0x30] sm:$0xff]
      %v2445 = vld [vmem:[%s980 + $0x38] sm:$0xff]
      %v2446 = vld [vmem:[%s983] sm:$0x1]
      %v2448 = vlaneseq
      %v2449 = vshrl.u32 %v2448, 7
      %v2450 = vsub.s32 0, %v2449
      %v2451 = vrot.slane %v2446, %v2450
      %vm2453 = vcmask 523264
      %v2455 = vsel %vm2453, %v2434, 0
      %v2458 = vsel %vm2453, %v2435, 0
      %v2461 = vsel %vm2453, %v2436, 0
      %v2464 = vsel %vm2453, %v2437, 0
      %2466 = vmatprep.subr.mxu0 0.0
      %2467 = vmatpush1.msra.mxu0 %v2438
      %2468 = vmatprep.subr.mxu0 0.0
      %2469 = vmatpush1.msra.mxu0 %v2439
      %2470 = vmatprep.subr.mxu0 0.0
      %2471 = vmatpush1.msra.mxu0 %v2440
      %2472 = vmatprep.subr.mxu0 0.0
      %2473 = vmatpush1.msra.mxu0 %v2441
      %2474 = vmatprep.subr.mxu0 0.0
      %2475 = vmatpush1.msra.mxu0 %v2442
      %2476 = vmatprep.subr.mxu0 0.0
      %2477 = vmatpush1.msra.mxu0 %v2443
      %2478 = vmatprep.subr.mxu0 0.0
      %2479 = vmatpush1.msra.mxu0 %v2444
      %2480 = vmatprep.subr.mxu0 0.0
      %2481 = vmatpush1.msra.mxu0 %v2445
      %2482 = vmatprep.subr.mxu0 0.0
      %2483 = vmatpush1.msra.mxu0 0.0
      %2484 = vmatprep.subr.mxu0 0.0
      %2485 = vmatpush1.msra.mxu0 0.0
      %2486 = vmatprep.subr.mxu0 0.0
      %2487 = vmatpush1.msra.mxu0 0.0
      %2488 = vmatprep.subr.mxu0 0.0
      %2489 = vmatpush1.msra.mxu0 0.0
      %2490 = vmatprep.subr.mxu0 0.0
      %2491 = vmatpush1.msra.mxu0 0.0
      %2492 = vmatprep.subr.mxu0 0.0
      %2493 = vmatpush1.msra.mxu0 0.0
      %2494 = vmatprep.subr.mxu0 0.0
      %2495 = vmatpush1.msra.mxu0 0.0
      %2496 = vmatprep.subr.mxu0 0.0
      %2497 = vmatpush1.msra.mxu0 0.0
      %2498 = vmatprep.subr.mxu0 0.0
      %2499 = vmatpush1.msra.mxu0 0.0
      %2500 = vmatprep.subr.mxu0 0.0
      %2501 = vmatpush1.msra.mxu0 0.0
      %2502 = vmatprep.subr.mxu0 0.0
      %2503 = vmatpush1.msra.mxu0 0.0
      %2504 = vmatprep.subr.mxu0 0.0
      %2505 = vmatpush1.msra.mxu0 0.0
      %2506 = vmatprep.subr.mxu0 0.0
      %2507 = vmatpush1.msra.mxu0 0.0
      %2508 = vmatprep.subr.mxu0 0.0
      %2509 = vmatpush1.msra.mxu0 0.0
      %2510 = vmatprep.subr.mxu0 0.0
      %2511 = vmatpush1.msra.mxu0 0.0
      %2512 = vmatprep.subr.mxu0 0.0
      %2513 = vmatpush1.msra.mxu0 0.0
      %2514 = vmatprep.subr.mxu0 0.0
      %2515 = vmatpush1.msra.mxu0 0.0
      %2516 = vmatprep.subr.mxu0 0.0
      %2517 = vmatpush1.msra.mxu0 0.0
      %2518 = vmatprep.subr.mxu0 0.0
      %2519 = vmatpush1.msra.mxu0 0.0
      %2520 = vmatprep.subr.mxu0 0.0
      %2521 = vmatpush1.msra.mxu0 0.0
      %2522 = vmatprep.subr.mxu0 0.0
      %2523 = vmatpush1.msra.mxu0 0.0
      %2524 = vmatprep.subr.mxu0 0.0
      %2525 = vmatpush1.msra.mxu0 0.0
      %2526 = vmatprep.subr.mxu0 0.0
      %2527 = vmatpush1.msra.mxu0 0.0
      %2528 = vmatprep.subr.mxu0 0.0
      %2529 = vmatpush1.msra.mxu0 0.0
      %2530 = vmatprep.mubr.f32.mxu0 0.0
      %2531 = vmatmul.mubr.f32.gmra.mrb[0].mxu0 %v2455
      %v2532 = vpop.f32.mrb[0].mxu0
      %v2533 = vadd.f32 %v2451, %v2532
      %v2534 = vpop.f32.mrb[0].mxu0
      %2535 = vmatprep.mubr.f32.mxu0 0.0
      %2536 = vmatmul.mubr.f32.gmra.mrb[0].mxu0 %v2458
      %v2537 = vpop.f32.mrb[0].mxu0
      %v2538 = vadd.f32 %v2451, %v2537
      %v2539 = vpop.f32.mrb[0].mxu0
      %2540 = vmatprep.mubr.f32.mxu0 0.0
      %2541 = vmatmul.mubr.f32.gmra.mrb[0].mxu0 %v2461
      %v2542 = vpop.f32.mrb[0].mxu0
      %v2543 = vadd.f32 %v2451, %v2542
      %v2544 = vpop.f32.mrb[0].mxu0
      %2545 = vmatprep.mubr.f32.mxu0 0.0
      %2546 = vmatmul.mubr.f32.gmra.mrb[0].mxu0 %v2464
      %v2547 = vpop.f32.mrb[0].mxu0
      %v2548 = vadd.f32 %v2451, %v2547
      %v2549 = vpop.f32.mrb[0].mxu0
      %2550 = vdwg.mxu0
      %v2551 = vld [vmem:[%s986] sm:$0x1]
      %v2552 = vld [vmem:[%s989] sm:$0x1]
      %v2553 = vadd.f32 %v2533, %v2322
      %v2554 = vadd.f32 %v2538, %v2323
      %v2555 = vadd.f32 %v2543, %v2324
      %v2556 = vadd.f32 %v2548, %v2325
      %v2557 = vsel %vm1123, %v2553, 0.0
      %2558 = vadd.xlane.f32.xlu0 %v2557
      %v2559 = vpop.xlane.xlu0 %2558
      %v2560 = vsel %vm1123, %v2554, 0.0
      %2561 = vadd.xlane.f32.xlu0 %v2560
      %v2562 = vpop.xlane.xlu0 %2561
      %v2563 = vsel %vm1123, %v2555, 0.0
      %2564 = vadd.xlane.f32.xlu0 %v2563
      %v2565 = vpop.xlane.xlu0 %2564
      %v2566 = vsel %vm1123, %v2556, 0.0
      %2567 = vadd.xlane.f32.xlu0 %v2566
      %v2568 = vpop.xlane.xlu0 %2567
      %v2569 = vmul.f32 %v2559, %v2265
      %v2570 = vmul.f32 %v2562, %v2265
      %v2571 = vmul.f32 %v2565, %v2265
      %v2572 = vmul.f32 %v2568, %v2265
      %v2573 = vsub.f32 %v2553, %v2569
      %v2574 = vsub.f32 %v2554, %v2570
      %v2575 = vsub.f32 %v2555, %v2571
      %v2576 = vsub.f32 %v2556, %v2572
      %v2577 = vmul.f32 %v2573, %v2573
      %v2578 = vmul.f32 %v2574, %v2574
      %v2579 = vmul.f32 %v2575, %v2575
      %v2580 = vmul.f32 %v2576, %v2576
      %v2581 = vsel %vm1123, %v2577, 0.0
      %2582 = vadd.xlane.f32.xlu0 %v2581
      %v2583 = vpop.xlane.xlu0 %2582
      %v2584 = vsel %vm1123, %v2578, 0.0
      %2585 = vadd.xlane.f32.xlu0 %v2584
      %v2586 = vpop.xlane.xlu0 %2585
      %v2587 = vsel %vm1123, %v2579, 0.0
      %2588 = vadd.xlane.f32.xlu0 %v2587
      %v2589 = vpop.xlane.xlu0 %2588
      %v2590 = vsel %vm1123, %v2580, 0.0
      %2591 = vadd.xlane.f32.xlu0 %v2590
      %v2592 = vpop.xlane.xlu0 %2591
      %v2593 = vmul.f32 %v2583, %v2265
      %v2594 = vmul.f32 %v2586, %v2265
      %v2595 = vmul.f32 %v2589, %v2265
      %v2596 = vmul.f32 %v2592, %v2265
      %v2597 = vadd.f32 %v2593, 1e-05
      %v2598 = vadd.f32 %v2594, 1e-05
      %v2599 = vadd.f32 %v2595, 1e-05
      %v2600 = vadd.f32 %v2596, 1e-05
      %v2601 = vrsqrt.pop %v2597
      %v2602 = vrsqrt.pop %v2598
      %v2603 = vrsqrt.pop %v2599
      %v2604 = vrsqrt.pop %v2600
      %v2605 = vmul.f32 %v2573, %v2601
      %v2606 = vmul.f32 %v2574, %v2602
      %v2607 = vmul.f32 %v2575, %v2603
      %v2608 = vmul.f32 %v2576, %v2604
      %v2610 = vlaneseq
      %v2611 = vshrl.u32 %v2610, 7
      %v2612 = vsub.s32 0, %v2611
      %v2613 = vrot.slane %v2551, %v2612
      %v2615 = vmul.f32 %v2605, %v2613
      %v2616 = vmul.f32 %v2606, %v2613
      %v2617 = vmul.f32 %v2607, %v2613
      %v2618 = vmul.f32 %v2608, %v2613
      %v2620 = vlaneseq
      %v2621 = vshrl.u32 %v2620, 7
      %v2622 = vsub.s32 0, %v2621
      %v2623 = vrot.slane %v2552, %v2622
      %v2625 = vadd.f32 %v2615, %v2623
      %v2626 = vadd.f32 %v2616, %v2623
      %v2627 = vadd.f32 %v2617, %v2623
      %v2628 = vadd.f32 %v2618, %v2623
      %2629 = vst.msk [vmem:[#allocation2] sm:$0xff] %vm1123, %v2625
      %2630 = vst.msk [vmem:[#allocation2 + $0x8] sm:$0xff] %vm1123, %v2626
      %2631 = vst.msk [vmem:[#allocation2 + $0x10] sm:$0xff] %vm1123, %v2627
      %2632 = vst.msk [vmem:[#allocation2 + $0x18] sm:$0xff] %vm1123, %v2628
      %p2633 = scmp.eq.s32.totalorder %s36, 1
      // Predicated region
      $region125: #{vision_transformer_forward.1} parent=119 // pred_check
        %p2634 = pneg %p2633
      $region126: #{vision_transformer_forward.1} parent=119 // pred_check_branch
        %2636 = sbr.rel (%p2634) target = $region128
      $region127: #{vision_transformer_forward.1} parent=119 // pred_region
        %v2637 = vld [vmem:[%s21] sm:$0xff]
        %v2638 = vld [vmem:[%s21 + $0x8] sm:$0xff]
        %v2639 = vld [vmem:[%s21 + $0x10] sm:$0xff]
        %v2640 = vld [vmem:[%s21 + $0x18] sm:$0xff]
        %v2641 = vld [vmem:[%s21 + $0x20] sm:$0xff]
        %v2642 = vld [vmem:[%s21 + $0x28] sm:$0xff]
        %v2643 = vld [vmem:[%s21 + $0x30] sm:$0xff]
        %v2644 = vld [vmem:[%s21 + $0x38] sm:$0xff]
        %v2645 = vld [vmem:[%s21 + $0x40] sm:$0xff]
        %v2646 = vld [vmem:[%s21 + $0x48] sm:$0xff]
        %v2647 = vld [vmem:[%s21 + $0x50] sm:$0xff]
        %v2648 = vld [vmem:[%s21 + $0x58] sm:$0xff]
        %v2649 = vld [vmem:[%s21 + $0x60] sm:$0xff]
        %v2650 = vld [vmem:[%s21 + $0x68] sm:$0xff]
        %v2651 = vld [vmem:[%s21 + $0x70] sm:$0xff]
        %v2652 = vld [vmem:[%s21 + $0x78] sm:$0xff]
        %v2653 = vld [vmem:[%s22] sm:$0xf]
        %v2655 = vlaneseq
        %v2656 = vshrl.u32 %v2655, 7
        %v2657 = vsub.s32 0, %v2656
        %v2658 = vrot.slane %v2653, %v2657
        %v2659 = vlaneseq
        %v2660 = vshrl.u32 %v2659, 7
        %v2661 = vsub.s32 1, %v2660
        %v2662 = vrot.slane %v2653, %v2661
        %v2663 = vlaneseq
        %v2664 = vshrl.u32 %v2663, 7
        %v2665 = vsub.s32 2, %v2664
        %v2666 = vrot.slane %v2653, %v2665
        %v2667 = vlaneseq
        %v2668 = vshrl.u32 %v2667, 7
        %v2669 = vsub.s32 3, %v2668
        %v2670 = vrot.slane %v2653, %v2669
        %v2676 = vsel %vm1123, %v2625, 0
        %v2679 = vsel %vm1123, %v2626, 0
        %v2682 = vsel %vm1123, %v2627, 0
        %v2685 = vsel %vm1123, %v2628, 0
        %2687 = vmatprep.subr.mxu0 %v2638
        %2688 = vmatpush1.msra.mxu0 %v2637
        %2689 = vmatprep.subr.mxu0 %v2642
        %2690 = vmatpush1.msra.mxu0 %v2641
        %2691 = vmatprep.subr.mxu0 %v2646
        %2692 = vmatpush1.msra.mxu0 %v2645
        %2693 = vmatprep.subr.mxu0 %v2650
        %2694 = vmatpush1.msra.mxu0 %v2649
        %2695 = vmatprep.subr.mxu0 0.0
        %2696 = vmatpush1.msra.mxu0 0.0
        %2697 = vmatprep.subr.mxu0 0.0
        %2698 = vmatpush1.msra.mxu0 0.0
        %2699 = vmatprep.subr.mxu0 0.0
        %2700 = vmatpush1.msra.mxu0 0.0
        %2701 = vmatprep.subr.mxu0 0.0
        %2702 = vmatpush1.msra.mxu0 0.0
        %2703 = vmatprep.subr.mxu0 0.0
        %2704 = vmatpush1.msra.mxu0 0.0
        %2705 = vmatprep.subr.mxu0 0.0
        %2706 = vmatpush1.msra.mxu0 0.0
        %2707 = vmatprep.subr.mxu0 0.0
        %2708 = vmatpush1.msra.mxu0 0.0
        %2709 = vmatprep.subr.mxu0 0.0
        %2710 = vmatpush1.msra.mxu0 0.0
        %2711 = vmatprep.subr.mxu0 0.0
        %2712 = vmatpush1.msra.mxu0 0.0
        %2713 = vmatprep.subr.mxu0 0.0
        %2714 = vmatpush1.msra.mxu0 0.0
        %2715 = vmatprep.subr.mxu0 0.0
        %2716 = vmatpush1.msra.mxu0 0.0
        %2717 = vmatprep.subr.mxu0 0.0
        %2718 = vmatpush1.msra.mxu0 0.0
        %2719 = vmatprep.subr.mxu0 0.0
        %2720 = vmatpush1.msra.mxu0 0.0
        %2721 = vmatprep.subr.mxu0 0.0
        %2722 = vmatpush1.msra.mxu0 0.0
        %2723 = vmatprep.subr.mxu0 0.0
        %2724 = vmatpush1.msra.mxu0 0.0
        %2725 = vmatprep.subr.mxu0 0.0
        %2726 = vmatpush1.msra.mxu0 0.0
        %2727 = vmatprep.subr.mxu0 0.0
        %2728 = vmatpush1.msra.mxu0 0.0
        %2729 = vmatprep.subr.mxu0 0.0
        %2730 = vmatpush1.msra.mxu0 0.0
        %2731 = vmatprep.subr.mxu0 0.0
        %2732 = vmatpush1.msra.mxu0 0.0
        %2733 = vmatprep.subr.mxu0 0.0
        %2734 = vmatpush1.msra.mxu0 0.0
        %2735 = vmatprep.subr.mxu0 0.0
        %2736 = vmatpush1.msra.mxu0 0.0
        %2737 = vmatprep.subr.mxu0 0.0
        %2738 = vmatpush1.msra.mxu0 0.0
        %2739 = vmatprep.subr.mxu0 0.0
        %2740 = vmatpush1.msra.mxu0 0.0
        %2741 = vmatprep.subr.mxu0 0.0
        %2742 = vmatpush1.msra.mxu0 0.0
        %2743 = vmatprep.subr.mxu0 0.0
        %2744 = vmatpush1.msra.mxu0 0.0
        %2745 = vmatprep.subr.mxu0 0.0
        %2746 = vmatpush1.msra.mxu0 0.0
        %2747 = vmatprep.subr.mxu0 0.0
        %2748 = vmatpush1.msra.mxu0 0.0
        %2749 = vmatprep.subr.mxu0 0.0
        %2750 = vmatpush1.msra.mxu0 0.0
        %2751 = vmatprep.mubr.f32.mxu0 0.0
        %2752 = vmatmul.mubr.f32.gmra.mrb[0].mxu0 %v2676
        %v2753 = vpop.f32.mrb[0].mxu0
        %v2754 = vadd.f32 %v2658, %v2753
        %v2755 = vpop.f32.mrb[0].mxu0
        %v2756 = vadd.f32 %v2662, %v2755
        %2757 = vmatprep.mubr.f32.mxu0 0.0
        %2758 = vmatmul.mubr.f32.gmra.mrb[0].mxu0 %v2679
        %v2759 = vpop.f32.mrb[0].mxu0
        %v2760 = vadd.f32 %v2658, %v2759
        %v2761 = vpop.f32.mrb[0].mxu0
        %v2762 = vadd.f32 %v2662, %v2761
        %2763 = vmatprep.mubr.f32.mxu0 0.0
        %2764 = vmatmul.mubr.f32.gmra.mrb[0].mxu0 %v2682
        %v2765 = vpop.f32.mrb[0].mxu0
        %v2766 = vadd.f32 %v2658, %v2765
        %v2767 = vpop.f32.mrb[0].mxu0
        %v2768 = vadd.f32 %v2662, %v2767
        %2769 = vmatprep.mubr.f32.mxu0 0.0
        %2770 = vmatmul.mubr.f32.gmra.mrb[0].mxu0 %v2685
        %v2771 = vpop.f32.mrb[0].mxu0
        %v2772 = vadd.f32 %v2658, %v2771
        %v2773 = vpop.f32.mrb[0].mxu0
        %v2774 = vadd.f32 %v2662, %v2773
        %2775 = vdwg.mxu0
        %2776 = vmatprep.subr.mxu0 %v2640
        %2777 = vmatpush1.msra.mxu0 %v2639
        %2778 = vmatprep.subr.mxu0 %v2644
        %2779 = vmatpush1.msra.mxu0 %v2643
        %2780 = vmatprep.subr.mxu0 %v2648
        %2781 = vmatpush1.msra.mxu0 %v2647
        %2782 = vmatprep.subr.mxu0 %v2652
        %2783 = vmatpush1.msra.mxu0 %v2651
        %2784 = vmatprep.subr.mxu0 0.0
        %2785 = vmatpush1.msra.mxu0 0.0
        %2786 = vmatprep.subr.mxu0 0.0
        %2787 = vmatpush1.msra.mxu0 0.0
        %2788 = vmatprep.subr.mxu0 0.0
        %2789 = vmatpush1.msra.mxu0 0.0
        %2790 = vmatprep.subr.mxu0 0.0
        %2791 = vmatpush1.msra.mxu0 0.0
        %2792 = vmatprep.subr.mxu0 0.0
        %2793 = vmatpush1.msra.mxu0 0.0
        %2794 = vmatprep.subr.mxu0 0.0
        %2795 = vmatpush1.msra.mxu0 0.0
        %2796 = vmatprep.subr.mxu0 0.0
        %2797 = vmatpush1.msra.mxu0 0.0
        %2798 = vmatprep.subr.mxu0 0.0
        %2799 = vmatpush1.msra.mxu0 0.0
        %2800 = vmatprep.subr.mxu0 0.0
        %2801 = vmatpush1.msra.mxu0 0.0
        %2802 = vmatprep.subr.mxu0 0.0
        %2803 = vmatpush1.msra.mxu0 0.0
        %2804 = vmatprep.subr.mxu0 0.0
        %2805 = vmatpush1.msra.mxu0 0.0
        %2806 = vmatprep.subr.mxu0 0.0
        %2807 = vmatpush1.msra.mxu0 0.0
        %2808 = vmatprep.subr.mxu0 0.0
        %2809 = vmatpush1.msra.mxu0 0.0
        %2810 = vmatprep.subr.mxu0 0.0
        %2811 = vmatpush1.msra.mxu0 0.0
        %2812 = vmatprep.subr.mxu0 0.0
        %2813 = vmatpush1.msra.mxu0 0.0
        %2814 = vmatprep.subr.mxu0 0.0
        %2815 = vmatpush1.msra.mxu0 0.0
        %2816 = vmatprep.subr.mxu0 0.0
        %2817 = vmatpush1.msra.mxu0 0.0
        %2818 = vmatprep.subr.mxu0 0.0
        %2819 = vmatpush1.msra.mxu0 0.0
        %2820 = vmatprep.subr.mxu0 0.0
        %2821 = vmatpush1.msra.mxu0 0.0
        %2822 = vmatprep.subr.mxu0 0.0
        %2823 = vmatpush1.msra.mxu0 0.0
        %2824 = vmatprep.subr.mxu0 0.0
        %2825 = vmatpush1.msra.mxu0 0.0
        %2826 = vmatprep.subr.mxu0 0.0
        %2827 = vmatpush1.msra.mxu0 0.0
        %2828 = vmatprep.subr.mxu0 0.0
        %2829 = vmatpush1.msra.mxu0 0.0
        %2830 = vmatprep.subr.mxu0 0.0
        %2831 = vmatpush1.msra.mxu0 0.0
        %2832 = vmatprep.subr.mxu0 0.0
        %2833 = vmatpush1.msra.mxu0 0.0
        %2834 = vmatprep.subr.mxu0 0.0
        %2835 = vmatpush1.msra.mxu0 0.0
        %2836 = vmatprep.subr.mxu0 0.0
        %2837 = vmatpush1.msra.mxu0 0.0
        %2838 = vmatprep.subr.mxu0 0.0
        %2839 = vmatpush1.msra.mxu0 0.0
        %2840 = vmatprep.mubr.f32.mxu0 0.0
        %2841 = vmatmul.mubr.f32.gmra.mrb[0].mxu0 %v2676
        %v2842 = vpop.f32.mrb[0].mxu0
        %v2843 = vadd.f32 %v2666, %v2842
        %v2844 = vpop.f32.mrb[0].mxu0
        %v2845 = vadd.f32 %v2670, %v2844
        %2846 = vmatprep.mubr.f32.mxu0 0.0
        %2847 = vmatmul.mubr.f32.gmra.mrb[0].mxu0 %v2679
        %v2848 = vpop.f32.mrb[0].mxu0
        %v2849 = vadd.f32 %v2666, %v2848
        %v2850 = vpop.f32.mrb[0].mxu0
        %v2851 = vadd.f32 %v2670, %v2850
        %2852 = vmatprep.mubr.f32.mxu0 0.0
        %2853 = vmatmul.mubr.f32.gmra.mrb[0].mxu0 %v2682
        %v2854 = vpop.f32.mrb[0].mxu0
        %v2855 = vadd.f32 %v2666, %v2854
        %v2856 = vpop.f32.mrb[0].mxu0
        %v2857 = vadd.f32 %v2670, %v2856
        %2858 = vmatprep.mubr.f32.mxu0 0.0
        %2859 = vmatmul.mubr.f32.gmra.mrb[0].mxu0 %v2685
        %v2860 = vpop.f32.mrb[0].mxu0
        %v2861 = vadd.f32 %v2666, %v2860
        %v2862 = vpop.f32.mrb[0].mxu0
        %v2863 = vadd.f32 %v2670, %v2862
        %2864 = vdwg.mxu0
        %v2865 = vmax.f32 %v2754, 0.0
        %v2866 = vmax.f32 %v2756, 0.0
        %v2867 = vmax.f32 %v2843, 0.0
        %v2868 = vmax.f32 %v2845, 0.0
        %v2869 = vmax.f32 %v2760, 0.0
        %v2870 = vmax.f32 %v2762, 0.0
        %v2871 = vmax.f32 %v2849, 0.0
        %v2872 = vmax.f32 %v2851, 0.0
        %v2873 = vmax.f32 %v2766, 0.0
        %v2874 = vmax.f32 %v2768, 0.0
        %v2875 = vmax.f32 %v2855, 0.0
        %v2876 = vmax.f32 %v2857, 0.0
        %v2877 = vmax.f32 %v2772, 0.0
        %v2878 = vmax.f32 %v2774, 0.0
        %v2879 = vmax.f32 %v2861, 0.0
        %v2880 = vmax.f32 %v2863, 0.0
        %v2881 = vld [vmem:[%s23] sm:$0xff]
        %v2882 = vld [vmem:[%s23 + $0x8] sm:$0xff]
        %v2883 = vld [vmem:[%s23 + $0x10] sm:$0xff]
        %v2884 = vld [vmem:[%s23 + $0x18] sm:$0xff]
        %v2885 = vld [vmem:[%s23 + $0x20] sm:$0xff]
        %v2886 = vld [vmem:[%s23 + $0x28] sm:$0xff]
        %v2887 = vld [vmem:[%s23 + $0x30] sm:$0xff]
        %v2888 = vld [vmem:[%s23 + $0x38] sm:$0xff]
        %v2889 = vld [vmem:[%s23 + $0x40] sm:$0xff]
        %v2890 = vld [vmem:[%s23 + $0x48] sm:$0xff]
        %v2891 = vld [vmem:[%s23 + $0x50] sm:$0xff]
        %v2892 = vld [vmem:[%s23 + $0x58] sm:$0xff]
        %v2893 = vld [vmem:[%s23 + $0x60] sm:$0xff]
        %v2894 = vld [vmem:[%s23 + $0x68] sm:$0xff]
        %v2895 = vld [vmem:[%s23 + $0x70] sm:$0xff]
        %v2896 = vld [vmem:[%s23 + $0x78] sm:$0xff]
        %v2897 = vld [vmem:[%s23 + $0x80] sm:$0xff]
        %v2898 = vld [vmem:[%s23 + $0x88] sm:$0xff]
        %v2899 = vld [vmem:[%s23 + $0x90] sm:$0xff]
        %v2900 = vld [vmem:[%s23 + $0x98] sm:$0xff]
        %v2901 = vld [vmem:[%s23 + $0xa0] sm:$0xff]
        %v2902 = vld [vmem:[%s23 + $0xa8] sm:$0xff]
        %v2903 = vld [vmem:[%s23 + $0xb0] sm:$0xff]
        %v2904 = vld [vmem:[%s23 + $0xb8] sm:$0xff]
        %v2905 = vld [vmem:[%s23 + $0xc0] sm:$0xff]
        %v2906 = vld [vmem:[%s23 + $0xc8] sm:$0xff]
        %v2907 = vld [vmem:[%s23 + $0xd0] sm:$0xff]
        %v2908 = vld [vmem:[%s23 + $0xd8] sm:$0xff]
        %v2909 = vld [vmem:[%s23 + $0xe0] sm:$0xff]
        %v2910 = vld [vmem:[%s23 + $0xe8] sm:$0xff]
        %v2911 = vld [vmem:[%s23 + $0xf0] sm:$0xff]
        %v2912 = vld [vmem:[%s23 + $0xf8] sm:$0xff]
        %v2913 = vld [vmem:[%s23 + $0x100] sm:$0xff]
        %v2914 = vld [vmem:[%s23 + $0x108] sm:$0xff]
        %v2915 = vld [vmem:[%s23 + $0x110] sm:$0xff]
        %v2916 = vld [vmem:[%s23 + $0x118] sm:$0xff]
        %v2917 = vld [vmem:[%s23 + $0x120] sm:$0xff]
        %v2918 = vld [vmem:[%s23 + $0x128] sm:$0xff]
        %v2919 = vld [vmem:[%s23 + $0x130] sm:$0xff]
        %v2920 = vld [vmem:[%s23 + $0x138] sm:$0xff]
        %v2921 = vld [vmem:[%s23 + $0x140] sm:$0xff]
        %v2922 = vld [vmem:[%s23 + $0x148] sm:$0xff]
        %v2923 = vld [vmem:[%s23 + $0x150] sm:$0xff]
        %v2924 = vld [vmem:[%s23 + $0x158] sm:$0xff]
        %v2925 = vld [vmem:[%s23 + $0x160] sm:$0xff]
        %v2926 = vld [vmem:[%s23 + $0x168] sm:$0xff]
        %v2927 = vld [vmem:[%s23 + $0x170] sm:$0xff]
        %v2928 = vld [vmem:[%s23 + $0x178] sm:$0xff]
        %v2929 = vld [vmem:[%s23 + $0x180] sm:$0xff]
        %v2930 = vld [vmem:[%s23 + $0x188] sm:$0xff]
        %v2931 = vld [vmem:[%s23 + $0x190] sm:$0xff]
        %v2932 = vld [vmem:[%s23 + $0x198] sm:$0xff]
        %v2933 = vld [vmem:[%s23 + $0x1a0] sm:$0xff]
        %v2934 = vld [vmem:[%s23 + $0x1a8] sm:$0xff]
        %v2935 = vld [vmem:[%s23 + $0x1b0] sm:$0xff]
        %v2936 = vld [vmem:[%s23 + $0x1b8] sm:$0xff]
        %v2937 = vld [vmem:[%s23 + $0x1c0] sm:$0xff]
        %v2938 = vld [vmem:[%s23 + $0x1c8] sm:$0xff]
        %v2939 = vld [vmem:[%s23 + $0x1d0] sm:$0xff]
        %v2940 = vld [vmem:[%s23 + $0x1d8] sm:$0xff]
        %v2941 = vld [vmem:[%s23 + $0x1e0] sm:$0xff]
        %v2942 = vld [vmem:[%s23 + $0x1e8] sm:$0xff]
        %v2943 = vld [vmem:[%s23 + $0x1f0] sm:$0xff]
        %v2944 = vld [vmem:[%s23 + $0x1f8] sm:$0xff]
        %v2945 = vld [vmem:[%s24] sm:$0x1]
        %v2947 = vlaneseq
        %v2948 = vshrl.u32 %v2947, 7
        %v2949 = vsub.s32 0, %v2948
        %v2950 = vrot.slane %v2945, %v2949
        %2952 = vmatprep.subr.mxu0 0.0
        %2953 = vmatpush1.msra.mxu0 %v2881
        %2954 = vmatprep.subr.mxu0 0.0
        %2955 = vmatpush1.msra.mxu0 %v2882
        %2956 = vmatprep.subr.mxu0 0.0
        %2957 = vmatpush1.msra.mxu0 %v2883
        %2958 = vmatprep.subr.mxu0 0.0
        %2959 = vmatpush1.msra.mxu0 %v2884
        %2960 = vmatprep.subr.mxu0 0.0
        %2961 = vmatpush1.msra.mxu0 %v2885
        %2962 = vmatprep.subr.mxu0 0.0
        %2963 = vmatpush1.msra.mxu0 %v2886
        %2964 = vmatprep.subr.mxu0 0.0
        %2965 = vmatpush1.msra.mxu0 %v2887
        %2966 = vmatprep.subr.mxu0 0.0
        %2967 = vmatpush1.msra.mxu0 %v2888
        %2968 = vmatprep.subr.mxu0 0.0
        %2969 = vmatpush1.msra.mxu0 %v2889
        %2970 = vmatprep.subr.mxu0 0.0
        %2971 = vmatpush1.msra.mxu0 %v2890
        %2972 = vmatprep.subr.mxu0 0.0
        %2973 = vmatpush1.msra.mxu0 %v2891
        %2974 = vmatprep.subr.mxu0 0.0
        %2975 = vmatpush1.msra.mxu0 %v2892
        %2976 = vmatprep.subr.mxu0 0.0
        %2977 = vmatpush1.msra.mxu0 %v2893
        %2978 = vmatprep.subr.mxu0 0.0
        %2979 = vmatpush1.msra.mxu0 %v2894
        %2980 = vmatprep.subr.mxu0 0.0
        %2981 = vmatpush1.msra.mxu0 %v2895
        %2982 = vmatprep.subr.mxu0 0.0
        %2983 = vmatpush1.msra.mxu0 %v2896
        %2984 = vmatprep.subr.mxu0 0.0
        %2985 = vmatpush1.msra.mxu0 %v2897
        %2986 = vmatprep.subr.mxu0 0.0
        %2987 = vmatpush1.msra.mxu0 %v2898
        %2988 = vmatprep.subr.mxu0 0.0
        %2989 = vmatpush1.msra.mxu0 %v2899
        %2990 = vmatprep.subr.mxu0 0.0
        %2991 = vmatpush1.msra.mxu0 %v2900
        %2992 = vmatprep.subr.mxu0 0.0
        %2993 = vmatpush1.msra.mxu0 %v2901
        %2994 = vmatprep.subr.mxu0 0.0
        %2995 = vmatpush1.msra.mxu0 %v2902
        %2996 = vmatprep.subr.mxu0 0.0
        %2997 = vmatpush1.msra.mxu0 %v2903
        %2998 = vmatprep.subr.mxu0 0.0
        %2999 = vmatpush1.msra.mxu0 %v2904
        %3000 = vmatprep.subr.mxu0 0.0
        %3001 = vmatpush1.msra.mxu0 %v2905
        %3002 = vmatprep.subr.mxu0 0.0
        %3003 = vmatpush1.msra.mxu0 %v2906
        %3004 = vmatprep.subr.mxu0 0.0
        %3005 = vmatpush1.msra.mxu0 %v2907
        %3006 = vmatprep.subr.mxu0 0.0
        %3007 = vmatpush1.msra.mxu0 %v2908
        %3008 = vmatprep.subr.mxu0 0.0
        %3009 = vmatpush1.msra.mxu0 %v2909
        %3010 = vmatprep.subr.mxu0 0.0
        %3011 = vmatpush1.msra.mxu0 %v2910
        %3012 = vmatprep.subr.mxu0 0.0
        %3013 = vmatpush1.msra.mxu0 %v2911
        %3014 = vmatprep.subr.mxu0 0.0
        %3015 = vmatpush1.msra.mxu0 %v2912
        %3016 = vmatprep.mubr.f32.mxu0 %v2866
        %3017 = vmatmul.mubr.f32.gmra.mrb[0].mxu0 %v2865
        %v3018 = vpop.f32.mrb[0].mxu0
        %v3019 = vadd.f32 %v2950, %v3018
        %v3020 = vpop.f32.mrb[0].mxu0
        %3021 = vmatprep.mubr.f32.mxu0 %v2870
        %3022 = vmatmul.mubr.f32.gmra.mrb[0].mxu0 %v2869
        %v3023 = vpop.f32.mrb[0].mxu0
        %v3024 = vadd.f32 %v2950, %v3023
        %v3025 = vpop.f32.mrb[0].mxu0
        %3026 = vmatprep.mubr.f32.mxu0 %v2874
        %3027 = vmatmul.mubr.f32.gmra.mrb[0].mxu0 %v2873
        %v3028 = vpop.f32.mrb[0].mxu0
        %v3029 = vadd.f32 %v2950, %v3028
        %v3030 = vpop.f32.mrb[0].mxu0
        %3031 = vmatprep.mubr.f32.mxu0 %v2878
        %3032 = vmatmul.mubr.f32.gmra.mrb[0].mxu0 %v2877
        %v3033 = vpop.f32.mrb[0].mxu0
        %v3034 = vadd.f32 %v2950, %v3033
        %v3035 = vpop.f32.mrb[0].mxu0
        %3036 = vdwg.mxu0
        %3037 = vmatprep.subr.mxu0 0.0
        %3038 = vmatpush1.msra.mxu0 %v2913
        %3039 = vmatprep.subr.mxu0 0.0
        %3040 = vmatpush1.msra.mxu0 %v2914
        %3041 = vmatprep.subr.mxu0 0.0
        %3042 = vmatpush1.msra.mxu0 %v2915
        %3043 = vmatprep.subr.mxu0 0.0
        %3044 = vmatpush1.msra.mxu0 %v2916
        %3045 = vmatprep.subr.mxu0 0.0
        %3046 = vmatpush1.msra.mxu0 %v2917
        %3047 = vmatprep.subr.mxu0 0.0
        %3048 = vmatpush1.msra.mxu0 %v2918
        %3049 = vmatprep.subr.mxu0 0.0
        %3050 = vmatpush1.msra.mxu0 %v2919
        %3051 = vmatprep.subr.mxu0 0.0
        %3052 = vmatpush1.msra.mxu0 %v2920
        %3053 = vmatprep.subr.mxu0 0.0
        %3054 = vmatpush1.msra.mxu0 %v2921
        %3055 = vmatprep.subr.mxu0 0.0
        %3056 = vmatpush1.msra.mxu0 %v2922
        %3057 = vmatprep.subr.mxu0 0.0
        %3058 = vmatpush1.msra.mxu0 %v2923
        %3059 = vmatprep.subr.mxu0 0.0
        %3060 = vmatpush1.msra.mxu0 %v2924
        %3061 = vmatprep.subr.mxu0 0.0
        %3062 = vmatpush1.msra.mxu0 %v2925
        %3063 = vmatprep.subr.mxu0 0.0
        %3064 = vmatpush1.msra.mxu0 %v2926
        %3065 = vmatprep.subr.mxu0 0.0
        %3066 = vmatpush1.msra.mxu0 %v2927
        %3067 = vmatprep.subr.mxu0 0.0
        %3068 = vmatpush1.msra.mxu0 %v2928
        %3069 = vmatprep.subr.mxu0 0.0
        %3070 = vmatpush1.msra.mxu0 %v2929
        %3071 = vmatprep.subr.mxu0 0.0
        %3072 = vmatpush1.msra.mxu0 %v2930
        %3073 = vmatprep.subr.mxu0 0.0
        %3074 = vmatpush1.msra.mxu0 %v2931
        %3075 = vmatprep.subr.mxu0 0.0
        %3076 = vmatpush1.msra.mxu0 %v2932
        %3077 = vmatprep.subr.mxu0 0.0
        %3078 = vmatpush1.msra.mxu0 %v2933
        %3079 = vmatprep.subr.mxu0 0.0
        %3080 = vmatpush1.msra.mxu0 %v2934
        %3081 = vmatprep.subr.mxu0 0.0
        %3082 = vmatpush1.msra.mxu0 %v2935
        %3083 = vmatprep.subr.mxu0 0.0
        %3084 = vmatpush1.msra.mxu0 %v2936
        %3085 = vmatprep.subr.mxu0 0.0
        %3086 = vmatpush1.msra.mxu0 %v2937
        %3087 = vmatprep.subr.mxu0 0.0
        %3088 = vmatpush1.msra.mxu0 %v2938
        %3089 = vmatprep.subr.mxu0 0.0
        %3090 = vmatpush1.msra.mxu0 %v2939
        %3091 = vmatprep.subr.mxu0 0.0
        %3092 = vmatpush1.msra.mxu0 %v2940
        %3093 = vmatprep.subr.mxu0 0.0
        %3094 = vmatpush1.msra.mxu0 %v2941
        %3095 = vmatprep.subr.mxu0 0.0
        %3096 = vmatpush1.msra.mxu0 %v2942
        %3097 = vmatprep.subr.mxu0 0.0
        %3098 = vmatpush1.msra.mxu0 %v2943
        %3099 = vmatprep.subr.mxu0 0.0
        %3100 = vmatpush1.msra.mxu0 %v2944
        %3101 = vmatprep.mubr.f32.mxu0 %v2868
        %3102 = vmatmul.mubr.f32.gmra.mrb[0].mxu0 %v2867
        %v3103 = vpop.f32.mrb[0].mxu0
        %v3104 = vadd.f32 %v3019, %v3103
        %v3105 = vpop.f32.mrb[0].mxu0
        %3106 = vmatprep.mubr.f32.mxu0 %v2872
        %3107 = vmatmul.mubr.f32.gmra.mrb[0].mxu0 %v2871
        %v3108 = vpop.f32.mrb[0].mxu0
        %v3109 = vadd.f32 %v3024, %v3108
        %v3110 = vpop.f32.mrb[0].mxu0
        %3111 = vmatprep.mubr.f32.mxu0 %v2876
        %3112 = vmatmul.mubr.f32.gmra.mrb[0].mxu0 %v2875
        %v3113 = vpop.f32.mrb[0].mxu0
        %v3114 = vadd.f32 %v3029, %v3113
        %v3115 = vpop.f32.mrb[0].mxu0
        %3116 = vmatprep.mubr.f32.mxu0 %v2880
        %3117 = vmatmul.mubr.f32.gmra.mrb[0].mxu0 %v2879
        %v3118 = vpop.f32.mrb[0].mxu0
        %v3119 = vadd.f32 %v3034, %v3118
        %v3120 = vpop.f32.mrb[0].mxu0
        %3121 = vdwg.mxu0
        %vm3122 = vcmask 130048
        %3123 = vst.msk [vmem:[%s25] sm:$0xff] %vm3122, %v3104
        %3124 = vst.msk [vmem:[%s25 + $0x8] sm:$0xff] %vm3122, %v3109
        %3125 = vst.msk [vmem:[%s25 + $0x10] sm:$0xff] %vm3122, %v3114
        %3126 = vst.msk [vmem:[%s25 + $0x18] sm:$0xff] %vm3122, %v3119
      $region128: #{vision_transformer_forward.1} parent=119 // pred_fallthru
        _
      // Predicated region
      $region129: #{vision_transformer_forward.1} parent=119 // pred_check
        %p3127 = pneg %p654
      $region130: #{vision_transformer_forward.1} parent=119 // pred_check_branch
        %3129 = sbr.rel (%p3127) target = $region132
      $region131: #{vision_transformer_forward.1} parent=119 // pred_region
        _
      $region132: #{vision_transformer_forward.1} parent=119 // pred_fallthru
        _
      // Predicated region
      $region133: #{vision_transformer_forward.1} parent=119 // pred_check
        %p3130 = pneg %p654
      $region134: #{vision_transformer_forward.1} parent=119 // pred_check_branch
        %3132 = sbr.rel (%p3130) target = $region136
      $region135: #{vision_transformer_forward.1} parent=119 // pred_region
        _
      $region136: #{vision_transformer_forward.1} parent=119 // pred_fallthru
        _
    $region120: #{vision_transformer_forward.1} parent=5 // pred_fallthru
      _
    %p3133 = scmp.le.s32.totalorder 2, %s31
    // Predicated region
    $region137: #{vision_transformer_forward.1} parent=5 // pred_check
      %p3134 = pneg %p3133
    $region138: #{vision_transformer_forward.1} parent=5 // pred_check_branch
      %3136 = sbr.rel (%p3134) target = $region140
    $region139: #{vision_transformer_forward.1} parent=5 // pred_region
      %s3137 = ssub.s32 %s31, 2
    $region140: #{vision_transformer_forward.1} parent=5 // pred_fallthru
      _
  $region6: #{vision_transformer_forward.1} parent=0 // loop_footer
    %s35 = sadd.s32 1, %s31
  $region7: #{vision_transformer_forward.1} parent=0 // loop_footer_branch
    %30 = sbr.rel target = $region3
  $region8: #{vision_transformer_forward.1} parent=0 // loop_exit
    _

</llo_original>
